<compile_context>
chip_gen: v7x
topology: tpu7x:2x2x1
jax: 0.10.0
libtpu: 0.0.40
codegen_flags: <defaults>
</compile_context>

<pallas_src>
import jax
import jax.numpy as jnp
import numpy as np
from jax.experimental import pallas as pl
from jax.experimental.pallas import tpu as pltpu

ENC = 256                 # encoding_size
HID = 512                 # hidden_dim
ACT = 4                   # action_dim
D1 = ENC // 4             # dist head hidden 1 (64)
D2 = ENC // 16            # dist head hidden 2 (16)
DPAD = 128                # lane-padded dist hidden width
VEC_W = 2 * HID + DPAD    # 1152: packed-vector width / heads-layer-1 width
VEC_ROWS = 24             # sublane-padded row count for the packed bias/LN array
ZDIM = HID + HID // 2 + DPAD   # 896: total K of the final packed linear (split-K)
OUT_W = ENC + 128         # 384: merged output slab width (features | packed heads)


# ------------------------------- Pallas kernel ------------------------------ #
def fused_forward_kernel(vision_ref, spatial_ref, fs_ref, cfs_ref,
                         ff_w1_ref, ff_w2_ref, hw1_ref, p_w2_ref, v_w2_ref,
                         d_w2_ref, w_out_ref, vec_ref,
                         out_ref):
    f32 = jnp.float32
    bf16 = jnp.bfloat16

    def vrow(r, n):                      # packed bias / LN-param row -> [1, n] f32
        return vec_ref[r:r + 1, 0:n]

    def mm(x, w):                        # bf16 operands, f32 accumulation on the MXU
        return jnp.dot(x.astype(bf16), w, preferred_element_type=f32)

    def mm32(x, w):                      # f32 MXU matmul (precision-critical tail)
        return jnp.dot(x, w, preferred_element_type=f32)

    def layernorm(x, r_g, r_b, n):       # f32 LN (eps = 1e-5, matches nn.LayerNorm)
        mu = jnp.mean(x, axis=-1, keepdims=True)
        xc = x - mu
        var = jnp.mean(xc * xc, axis=-1, keepdims=True)
        return xc * jax.lax.rsqrt(var + 1e-5) * vrow(r_g, n) + vrow(r_b, n)

    v = vision_ref[...]                  # [TB, ENC] bf16
    s = spatial_ref[...]                 # [TB, ENC] bf16

    # ---- _aggregate_counterfactuals (softmax-weighted reduction over the action axis) ----
    cfs = cfs_ref[...]                   # [TB, 3*ACT] f32  (coll | info | reach)
    coll = cfs[:, 0:ACT]
    info = cfs[:, ACT:2 * ACT]
    reach = cfs[:, 2 * ACT:3 * ACT]
    safety = 1.0 - coll
    expl = info / (jnp.sum(info, axis=1, keepdims=True) + 1e-8)
    wts = safety + expl + reach
    wts = jnp.exp(wts - jnp.max(wts, axis=1, keepdims=True))
    wts = wts / jnp.sum(wts, axis=1, keepdims=True)          # exact softmax (f32)

    fs = fs_ref[...].astype(f32)         # [TB, ACT*ENC] lane-dense
    cf = (fs[:, 0 * ENC:1 * ENC] * wts[:, 0:1]
          + fs[:, 1 * ENC:2 * ENC] * wts[:, 1:2]
          + fs[:, 2 * ENC:3 * ENC] * wts[:, 2:3]
          + fs[:, 3 * ENC:4 * ENC] * wts[:, 3:4])            # [TB, ENC]

    # ---- feature_fusion: Linear(768->512) (split-K, no concat) -> LN -> ReLU -> Linear -> LN
    h = (mm(v, ff_w1_ref[0:ENC, :])
         + mm(s, ff_w1_ref[ENC:2 * ENC, :])
         + mm(cf, ff_w1_ref[2 * ENC:3 * ENC, :])
         + vrow(0, HID))
    h = jnp.maximum(layernorm(h, 1, 2, HID), 0.0)            # Dropout == identity (eval)
    f = layernorm(mm(h, ff_w2_ref[...]) + vrow(3, ENC), 4, 5, ENC)
    out_ref[:, 0:ENC] = f                                    # features -> lanes 0:256

    # ---- fused first layer of the three heads: [TB,256] @ [256,1152]
    h1 = mm(f, hw1_ref[...]) + vrow(6, VEC_W)
    p = h1[:, 0:HID]                     # policy hidden
    vv = h1[:, HID:2 * HID]              # value hidden
    d = h1[:, 2 * HID:VEC_W]             # dist hidden (64 real + 64 zero-padded lanes)

    # policy_net tail
    p = jnp.maximum(layernorm(p, 7, 8, HID), 0.0)
    p = mm(p, p_w2_ref[...]) + vrow(9, HID)
    p = jnp.maximum(layernorm(p, 10, 11, HID), 0.0)

    # value_net tail
    vv = jnp.maximum(layernorm(vv, 12, 13, HID), 0.0)
    vv = mm(vv, v_w2_ref[...]) + vrow(14, HID // 2)
    vv = jnp.maximum(layernorm(vv, 15, 16, HID // 2), 0.0)

    # dist_pred_net tail (no LN)
    d = jnp.maximum(d, 0.0)
    d = jnp.maximum(mm(d, d_w2_ref[...]) + vrow(17, DPAD), 0.0)

    # lane-packed final linears: split-K accumulation against f32 w_out row slices
    # (no [TB,896] concat). Lanes 0:4 = policy logits, lane 4 = value*100 (scale folded
    # into w_out at pack time), lane 5 = distance, rest zero.
    packed = (mm32(p, w_out_ref[0:HID, :])
              + mm32(vv, w_out_ref[HID:HID + HID // 2, :])
              + mm32(d, w_out_ref[HID + HID // 2:ZDIM, :])
              + vrow(18, 128))
    out_ref[:, ENC:OUT_W] = packed


# -------------------------------- host wrapper ------------------------------ #
def _round_up(x, m):
    return ((x + m - 1) // m) * m


def unified_forward(vision, spatial, future_states, collision_probs,
                    info_gains, reachabilities, kparams, *, batch_tile=None):
    """Fused heads forward of UnifiedAdvancedNoMaDRL (mode='all' hot path)."""
    B = vision.shape[0]
    Bp = _round_up(max(B, 8), 8)                 # sublane-aligned batch
    if batch_tile is not None:
        TB = _round_up(batch_tile, 16)
    elif Bp <= 16:
        TB = Bp                                  # tiny batch: single full-extent block
    else:
        # >=2 grid steps so both v7x TensorCores get work; tiles up to 512 rows (v6e).
        TB = min(512, _round_up((Bp + 1) // 2, 16))
    Bp = _round_up(Bp, TB)

    def pad_b(x, dtype):
        x = x.astype(dtype)
        return jnp.pad(x, [(0, Bp - B)] + [(0, 0)] * (x.ndim - 1))

    # bf16 activation streams (kernel math/accumulation stays f32 where it matters).
    v = pad_b(vision, jnp.bfloat16)                                       # [Bp, 256]
    s = pad_b(spatial, jnp.bfloat16)                                      # [Bp, 256]
    fs = pad_b(future_states.reshape(B, ACT * ENC), jnp.bfloat16)         # [Bp, 1024]
    cfs = pad_b(jnp.concatenate([collision_probs, info_gains, reachabilities],
                                axis=-1), jnp.float32)                    # [Bp, 12]

    weights = (kparams['ff_w1'], kparams['ff_w2'], kparams['hw1'],
               kparams['p_w2'], kparams['v_w2'], kparams['d_w2'],
               kparams['w_out'], kparams['vec'])

    def full(a):   # weight stays VMEM-resident across batch blocks (constant index_map)
        return pl.BlockSpec(a.shape, lambda i, _nd=a.ndim: (0,) * _nd)

    out = pl.pallas_call(
        fused_forward_kernel,
        out_shape=jax.ShapeDtypeStruct((Bp, OUT_W), jnp.float32),
        grid=(Bp // TB,),
        in_specs=[
            pl.BlockSpec((TB, ENC), lambda i: (i, 0)),
            pl.BlockSpec((TB, ENC), lambda i: (i, 0)),
            pl.BlockSpec((TB, ACT * ENC), lambda i: (i, 0)),
            pl.BlockSpec((TB, 3 * ACT), lambda i: (i, 0)),
        ] + [full(w) for w in weights],
        out_specs=pl.BlockSpec((TB, OUT_W), lambda i: (i, 0)),
        compiler_params=pltpu.CompilerParams(
            dimension_semantics=("parallel",),
            vmem_limit_bytes=48 * 1024 * 1024),   # explicit: covers TB>256 on v5e
    )(v, s, fs, cfs, *weights)

    return {
        "features": out[:B, 0:ENC],                         # [B, ENC]
        "policy_logits": out[:B, ENC:ENC + ACT],            # [B, ACT]
        "values": out[:B, ENC + ACT],                       # [B]  (*100 folded in-kernel)
        "distances": out[:B, ENC + ACT + 1:ENC + ACT + 2],  # [B, 1]
    }


# ------------------------- deterministic parameters ------------------------- #
def _orthogonal(key, shape, gain=0.01):
    # Mirrors nn.init.orthogonal_ (QR of a gaussian, sign-corrected).
    n, m = shape
    a = jax.random.normal(key, (max(n, m), min(n, m)), dtype=jnp.float32)
    q, r = jnp.linalg.qr(a)
    q = q * jnp.sign(jnp.diag(r))
    if n < m:
        q = q.T
    return (gain * q[:n, :m]).astype(jnp.float32)


def init_raw_params(key):
    """Per-layer f32 params, weights stored [in, out] so y = x @ W + b."""
    lin = [('ff_w1', 3 * ENC, HID), ('ff_w2', HID, ENC),
           ('p_w1', ENC, HID), ('p_w2', HID, HID), ('p_w3', HID, ACT),
           ('v_w1', ENC, HID), ('v_w2', HID, HID // 2), ('v_w3', HID // 2, 1),
           ('d_w1', ENC, D1), ('d_w2', D1, D2), ('d_w3', D2, 1)]
    keys = jax.random.split(key, len(lin))
    raw = {}
    for k, (nm, i, o) in zip(keys, lin):
        raw[nm] = _orthogonal(k, (i, o), gain=0.01)
        raw[nm + '_b'] = jnp.zeros((o,), jnp.float32)
    for nm, d in [('ff_ln1', HID), ('ff_ln2', ENC), ('p_ln1', HID), ('p_ln2', HID),
                  ('v_ln1', HID), ('v_ln2', HID // 2)]:
        raw[nm + '_g'] = jnp.ones((d,), jnp.float32)
        raw[nm + '_b'] = jnp.zeros((d,), jnp.float32)
    return raw


def pack_params(raw):
    """Pack per-layer params into the kernel layout (bf16 weights, f32 w_out/vec)."""
    bf16, f32 = jnp.bfloat16, jnp.float32

    ff_w1 = raw['ff_w1'].astype(bf16)                                    # [768, 512]
    ff_w2 = raw['ff_w2'].astype(bf16)                                    # [512, 256]

    d_w1p = jnp.zeros((ENC, DPAD), f32).at[:, :D1].set(raw['d_w1'])
    hw1 = jnp.concatenate([raw['p_w1'], raw['v_w1'], d_w1p], axis=1).astype(bf16)  # [256, 1152]

    p_w2 = raw['p_w2'].astype(bf16)                                      # [512, 512]
    v_w2 = raw['v_w2'].astype(bf16)                                      # [512, 256]
    d_w2 = jnp.zeros((DPAD, DPAD), f32).at[:D1, :D2].set(raw['d_w2']).astype(bf16)  # [128, 128]

    # f32 packed final linear; value column pre-scaled by 100 (no bf16 amplification,
    # no host-side post-multiply).
    w_out = jnp.zeros((ZDIM, 128), f32)
    w_out = w_out.at[0:HID, 0:ACT].set(raw['p_w3'])
    w_out = w_out.at[HID:HID + HID // 2, ACT:ACT + 1].set(raw['v_w3'] * 100.0)
    w_out = w_out.at[HID + HID // 2:HID + HID // 2 + D2, ACT + 1:ACT + 2].set(raw['d_w3'])

    vec = jnp.zeros((VEC_ROWS, VEC_W), f32)

    def srow(v_, r, x):
        return v_.at[r, :x.shape[0]].set(x)

    vec = srow(vec, 0, raw['ff_w1_b'])
    vec = srow(vec, 1, raw['ff_ln1_g'])
    vec = srow(vec, 2, raw['ff_ln1_b'])
    vec = srow(vec, 3, raw['ff_w2_b'])
    vec = srow(vec, 4, raw['ff_ln2_g'])
    vec = srow(vec, 5, raw['ff_ln2_b'])
    heads_b1 = jnp.zeros((VEC_W,), f32)
    heads_b1 = heads_b1.at[0:HID].set(raw['p_w1_b'])
    heads_b1 = heads_b1.at[HID:2 * HID].set(raw['v_w1_b'])
    heads_b1 = heads_b1.at[2 * HID:2 * HID + D1].set(raw['d_w1_b'])
    vec = srow(vec, 6, heads_b1)
    vec = srow(vec, 7, raw['p_ln1_g'])
    vec = srow(vec, 8, raw['p_ln1_b'])
    vec = srow(vec, 9, raw['p_w2_b'])
    vec = srow(vec, 10, raw['p_ln2_g'])
    vec = srow(vec, 11, raw['p_ln2_b'])
    vec = srow(vec, 12, raw['v_ln1_g'])
    vec = srow(vec, 13, raw['v_ln1_b'])
    vec = srow(vec, 14, raw['v_w2_b'])
    vec = srow(vec, 15, raw['v_ln2_g'])
    vec = srow(vec, 16, raw['v_ln2_b'])
    vec = srow(vec, 17, jnp.zeros((DPAD,), f32).at[:D2].set(raw['d_w2_b']))
    out_b = jnp.zeros((128,), f32)
    out_b = out_b.at[0:ACT].set(raw['p_w3_b'])
    out_b = out_b.at[ACT].set(raw['v_w3_b'][0] * 100.0)
    out_b = out_b.at[ACT + 1].set(raw['d_w3_b'][0])
    vec = srow(vec, 18, out_b)

    return dict(ff_w1=ff_w1, ff_w2=ff_w2, hw1=hw1, p_w2=p_w2, v_w2=v_w2,
                d_w2=d_w2, w_out=w_out, vec=vec)


# -------------------------- pure-JAX f32 reference --------------------------- #
def reference_forward(vision, spatial, fs, coll, info, reach, raw):
    def ln(x, g, b):
        mu = x.mean(-1, keepdims=True)
        xc = x - mu
        var = (xc * xc).mean(-1, keepdims=True)
        return xc / jnp.sqrt(var + 1e-5) * g + b

    safety = 1.0 - coll
    expl = info / (info.sum(1, keepdims=True) + 1e-8)
    w = jax.nn.softmax(safety + expl + reach, axis=1)
    cf = (fs * w[:, :, None]).sum(1)
    x = jnp.concatenate([vision, spatial, cf], -1)
    h = jnp.maximum(ln(x @ raw['ff_w1'] + raw['ff_w1_b'], raw['ff_ln1_g'], raw['ff_ln1_b']), 0.0)
    f = ln(h @ raw['ff_w2'] + raw['ff_w2_b'], raw['ff_ln2_g'], raw['ff_ln2_b'])
    p = jnp.maximum(ln(f @ raw['p_w1'] + raw['p_w1_b'], raw['p_ln1_g'], raw['p_ln1_b']), 0.0)
    p = jnp.maximum(ln(p @ raw['p_w2'] + raw['p_w2_b'], raw['p_ln2_g'], raw['p_ln2_b']), 0.0)
    logits = p @ raw['p_w3'] + raw['p_w3_b']
    v = jnp.maximum(ln(f @ raw['v_w1'] + raw['v_w1_b'], raw['v_ln1_g'], raw['v_ln1_b']), 0.0)
    v = jnp.maximum(ln(v @ raw['v_w2'] + raw['v_w2_b'], raw['v_ln2_g'], raw['v_ln2_b']), 0.0)
    values = (v @ raw['v_w3'] + raw['v_w3_b'])[:, 0] * 100.0
    d = jnp.maximum(f @ raw['d_w1'] + raw['d_w1_b'], 0.0)
    d = jnp.maximum(d @ raw['d_w2'] + raw['d_w2_b'], 0.0)
    dist = d @ raw['d_w3'] + raw['d_w3_b']
    return f, logits, values, dist


# ------------------------------------ main ----------------------------------- #
if __name__ == "__main__":
    key = jax.random.PRNGKey(0)
    kp, kv, ks, kfs, kc, ki, kr = jax.random.split(key, 7)
    B = 2

    raw = init_raw_params(kp)
    kparams = pack_params(raw)

    # Synthetic 256-d features standing in for the external vision / spatial / world-model nets.
    vision_features = jax.random.normal(kv, (B, ENC), jnp.float32)
    spatial_features = jax.random.normal(ks, (B, ENC), jnp.float32)
    future_states = jax.random.normal(kfs, (B, ACT, ENC), jnp.float32)
    collision_probs = jax.nn.sigmoid(jax.random.normal(kc, (B, ACT), jnp.float32))
    info_gains = jax.nn.softplus(jax.random.normal(ki, (B, ACT), jnp.float32))
    reachabilities = jax.nn.sigmoid(jax.random.normal(kr, (B, ACT), jnp.float32))

    out = unified_forward(vision_features, spatial_features, future_states,
                          collision_probs, info_gains, reachabilities, kparams)
    jax.block_until_ready(out)

    assert out["features"].shape == (B, ENC)
    assert out["policy_logits"].shape == (B, ACT)
    assert out["values"].shape == (B,)
    assert out["distances"].shape == (B, 1)

    # Correctness vs pure-JAX f32 reference (loose tolerance: bf16 weights + bf16 inputs).
    rf, rl, rv, rd = reference_forward(vision_features, spatial_features, future_states,
                                       collision_probs, info_gains, reachabilities, raw)
    np.testing.assert_allclose(np.asarray(out["features"]), np.asarray(rf), atol=0.1, rtol=0.1)
    np.testing.assert_allclose(np.asarray(out["policy_logits"]), np.asarray(rl), atol=0.1, rtol=0.1)
    np.testing.assert_allclose(np.asarray(out["values"]), np.asarray(rv), atol=0.1, rtol=0.1)
    np.testing.assert_allclose(np.asarray(out["distances"]), np.asarray(rd), atol=0.1, rtol=0.1)

    print("KERNEL_OK")
</pallas_src>

<mosaic_0001>
module attributes {stable_mosaic.version = 11 : i64} {
  func.func @fused_forward_kernel(%arg0: i32, %arg1: memref<8x256xbf16, #tpu.memory_space<vmem>>, %arg2: memref<8x256xbf16, #tpu.memory_space<vmem>>, %arg3: memref<8x1024xbf16, #tpu.memory_space<vmem>>, %arg4: memref<8x12xf32, #tpu.memory_space<vmem>>, %arg5: memref<768x512xbf16, #tpu.memory_space<vmem>>, %arg6: memref<512x256xbf16, #tpu.memory_space<vmem>>, %arg7: memref<256x1152xbf16, #tpu.memory_space<vmem>>, %arg8: memref<512x512xbf16, #tpu.memory_space<vmem>>, %arg9: memref<512x256xbf16, #tpu.memory_space<vmem>>, %arg10: memref<128x128xbf16, #tpu.memory_space<vmem>>, %arg11: memref<896x128xf32, #tpu.memory_space<vmem>>, %arg12: memref<24x1152xf32, #tpu.memory_space<vmem>>, %arg13: memref<8x384xf32, #tpu.memory_space<vmem>>) attributes {dimension_semantics = [#tpu.dimension_semantics<parallel>], iteration_bounds = array<i64: 1>, scalar_prefetch = 0 : i64, scratch_operands = 0 : i64, tpu.core_type = #tpu.core_type<tc>, window_params = [{transform_indices = @transform_0, window_bounds = array<i64: 8, 256>}, {transform_indices = @transform_1, window_bounds = array<i64: 8, 256>}, {transform_indices = @transform_2, window_bounds = array<i64: 8, 1024>}, {transform_indices = @transform_3, window_bounds = array<i64: 8, 12>}, {pipeline_mode = #tpu.pipeline_mode<synchronous>, transform_indices = @transform_4, window_bounds = array<i64: 768, 512>}, {pipeline_mode = #tpu.pipeline_mode<synchronous>, transform_indices = @transform_5, window_bounds = array<i64: 512, 256>}, {pipeline_mode = #tpu.pipeline_mode<synchronous>, transform_indices = @transform_6, window_bounds = array<i64: 256, 1152>}, {pipeline_mode = #tpu.pipeline_mode<synchronous>, transform_indices = @transform_7, window_bounds = array<i64: 512, 512>}, {pipeline_mode = #tpu.pipeline_mode<synchronous>, transform_indices = @transform_8, window_bounds = array<i64: 512, 256>}, {pipeline_mode = #tpu.pipeline_mode<synchronous>, transform_indices = @transform_9, window_bounds = array<i64: 128, 128>}, {pipeline_mode = #tpu.pipeline_mode<synchronous>, transform_indices = @transform_10, window_bounds = array<i64: 896, 128>}, {pipeline_mode = #tpu.pipeline_mode<synchronous>, transform_indices = @transform_11, window_bounds = array<i64: 24, 1152>}, {transform_indices = @transform_12, window_bounds = array<i64: 8, 384>}]} {
    %c0 = arith.constant 0 : index
    %c0_0 = arith.constant 0 : index
    %0 = vector.load %arg1[%c0, %c0_0] : memref<8x256xbf16, #tpu.memory_space<vmem>>, vector<8x256xbf16>
    %c0_1 = arith.constant 0 : index
    %c0_2 = arith.constant 0 : index
    %1 = vector.load %arg2[%c0_1, %c0_2] : memref<8x256xbf16, #tpu.memory_space<vmem>>, vector<8x256xbf16>
    %c0_3 = arith.constant 0 : index
    %c0_4 = arith.constant 0 : index
    %2 = vector.load %arg4[%c0_3, %c0_4] : memref<8x12xf32, #tpu.memory_space<vmem>>, vector<8x12xf32>
    %3 = vector.extract_strided_slice %2 {offsets = [0, 0], sizes = [8, 4], strides = [1, 1]} : vector<8x12xf32> to vector<8x4xf32>
    %4 = vector.extract_strided_slice %2 {offsets = [0, 4], sizes = [8, 4], strides = [1, 1]} : vector<8x12xf32> to vector<8x4xf32>
    %5 = vector.extract_strided_slice %2 {offsets = [0, 8], sizes = [8, 4], strides = [1, 1]} : vector<8x12xf32> to vector<8x4xf32>
    %cst = arith.constant 1.000000e+00 : f32
    %6 = vector.broadcast %cst : f32 to vector<8x4xf32>
    %7 = arith.subf %6, %3 : vector<8x4xf32>
    %cst_5 = arith.constant dense<0.000000e+00> : vector<8xf32>
    %8 = vector.multi_reduction <add>, %4, %cst_5 [1] : vector<8x4xf32> to vector<8xf32>
    %9 = vector.shape_cast %8 : vector<8xf32> to vector<8x1xf32>
    %cst_6 = arith.constant 9.99999993E-9 : f32
    %10 = vector.broadcast %cst_6 : f32 to vector<8x1xf32>
    %11 = arith.addf %9, %10 : vector<8x1xf32>
    %12 = vector.broadcast %11 : vector<8x1xf32> to vector<8x4xf32>
    %13 = arith.divf %4, %12 : vector<8x4xf32>
    %14 = arith.addf %7, %13 : vector<8x4xf32>
    %15 = arith.addf %14, %5 : vector<8x4xf32>
    %cst_7 = arith.constant dense<0xFF800000> : vector<8xf32>
    %16 = vector.multi_reduction <maximumf>, %15, %cst_7 [1] : vector<8x4xf32> to vector<8xf32>
    %17 = vector.shape_cast %16 : vector<8xf32> to vector<8x1xf32>
    %18 = vector.broadcast %17 : vector<8x1xf32> to vector<8x4xf32>
    %19 = arith.subf %15, %18 : vector<8x4xf32>
    %20 = math.exp %19 : vector<8x4xf32>
    %cst_8 = arith.constant dense<0.000000e+00> : vector<8xf32>
    %21 = vector.multi_reduction <add>, %20, %cst_8 [1] : vector<8x4xf32> to vector<8xf32>
    %22 = vector.shape_cast %21 : vector<8xf32> to vector<8x1xf32>
    %23 = vector.broadcast %22 : vector<8x1xf32> to vector<8x4xf32>
    %24 = arith.divf %20, %23 : vector<8x4xf32>
    %c0_9 = arith.constant 0 : index
    %c0_10 = arith.constant 0 : index
    %25 = vector.load %arg3[%c0_9, %c0_10] : memref<8x1024xbf16, #tpu.memory_space<vmem>>, vector<8x1024xbf16>
    %26 = arith.extf %25 : vector<8x1024xbf16> to vector<8x1024xf32>
    %27 = vector.extract_strided_slice %26 {offsets = [0, 0], sizes = [8, 256], strides = [1, 1]} : vector<8x1024xf32> to vector<8x256xf32>
    %28 = vector.extract_strided_slice %24 {offsets = [0, 0], sizes = [8, 1], strides = [1, 1]} : vector<8x4xf32> to vector<8x1xf32>
    %29 = vector.broadcast %28 : vector<8x1xf32> to vector<8x256xf32>
    %30 = arith.mulf %27, %29 : vector<8x256xf32>
    %31 = vector.extract_strided_slice %26 {offsets = [0, 256], sizes = [8, 256], strides = [1, 1]} : vector<8x1024xf32> to vector<8x256xf32>
    %32 = vector.extract_strided_slice %24 {offsets = [0, 1], sizes = [8, 1], strides = [1, 1]} : vector<8x4xf32> to vector<8x1xf32>
    %33 = vector.broadcast %32 : vector<8x1xf32> to vector<8x256xf32>
    %34 = arith.mulf %31, %33 : vector<8x256xf32>
    %35 = arith.addf %30, %34 : vector<8x256xf32>
    %36 = vector.extract_strided_slice %26 {offsets = [0, 512], sizes = [8, 256], strides = [1, 1]} : vector<8x1024xf32> to vector<8x256xf32>
    %37 = vector.extract_strided_slice %24 {offsets = [0, 2], sizes = [8, 1], strides = [1, 1]} : vector<8x4xf32> to vector<8x1xf32>
    %38 = vector.broadcast %37 : vector<8x1xf32> to vector<8x256xf32>
    %39 = arith.mulf %36, %38 : vector<8x256xf32>
    %40 = arith.addf %35, %39 : vector<8x256xf32>
    %41 = vector.extract_strided_slice %26 {offsets = [0, 768], sizes = [8, 256], strides = [1, 1]} : vector<8x1024xf32> to vector<8x256xf32>
    %42 = vector.extract_strided_slice %24 {offsets = [0, 3], sizes = [8, 1], strides = [1, 1]} : vector<8x4xf32> to vector<8x1xf32>
    %43 = vector.broadcast %42 : vector<8x1xf32> to vector<8x256xf32>
    %44 = arith.mulf %41, %43 : vector<8x256xf32>
    %45 = arith.addf %40, %44 : vector<8x256xf32>
    %c0_11 = arith.constant 0 : index
    %c0_12 = arith.constant 0 : index
    %46 = vector.load %arg5[%c0_11, %c0_12] : memref<768x512xbf16, #tpu.memory_space<vmem>>, vector<256x512xbf16>
    %cst_13 = arith.constant dense<0.000000e+00> : vector<8x512xf32>
    %47 = tpu.matmul %0, %46, %cst_13 {dimension_numbers = #tpu.dot_dimension_numbers<[1], [0], [0], [1], [0, 0, 1, 1], [], []>} : vector<8x256xbf16>, vector<256x512xbf16>, vector<8x512xf32> -> vector<8x512xf32>
    %c256 = arith.constant 256 : index
    %c0_14 = arith.constant 0 : index
    %48 = vector.load %arg5[%c256, %c0_14] : memref<768x512xbf16, #tpu.memory_space<vmem>>, vector<256x512xbf16>
    %cst_15 = arith.constant dense<0.000000e+00> : vector<8x512xf32>
    %49 = tpu.matmul %1, %48, %cst_15 {dimension_numbers = #tpu.dot_dimension_numbers<[1], [0], [0], [1], [0, 0, 1, 1], [], []>} : vector<8x256xbf16>, vector<256x512xbf16>, vector<8x512xf32> -> vector<8x512xf32>
    %50 = arith.addf %47, %49 : vector<8x512xf32>
    %c512 = arith.constant 512 : index
    %c0_16 = arith.constant 0 : index
    %51 = vector.load %arg5[%c512, %c0_16] : memref<768x512xbf16, #tpu.memory_space<vmem>>, vector<256x512xbf16>
    %52 = arith.truncf %45 : vector<8x256xf32> to vector<8x256xbf16>
    %cst_17 = arith.constant dense<0.000000e+00> : vector<8x512xf32>
    %53 = tpu.matmul %52, %51, %cst_17 {dimension_numbers = #tpu.dot_dimension_numbers<[1], [0], [0], [1], [0, 0, 1, 1], [], []>} : vector<8x256xbf16>, vector<256x512xbf16>, vector<8x512xf32> -> vector<8x512xf32>
    %54 = arith.addf %50, %53 : vector<8x512xf32>
    %c0_18 = arith.constant 0 : index
    %c0_19 = arith.constant 0 : index
    %55 = vector.load %arg12[%c0_18, %c0_19] : memref<24x1152xf32, #tpu.memory_space<vmem>>, vector<1x512xf32>
    %56 = vector.broadcast %55 : vector<1x512xf32> to vector<8x512xf32>
    %57 = arith.addf %54, %56 : vector<8x512xf32>
    %cst_20 = arith.constant dense<0.000000e+00> : vector<8xf32>
    %58 = vector.multi_reduction <add>, %57, %cst_20 [1] : vector<8x512xf32> to vector<8xf32>
    %59 = vector.shape_cast %58 : vector<8xf32> to vector<8x1xf32>
    %cst_21 = arith.constant 5.120000e+02 : f32
    %60 = vector.broadcast %cst_21 : f32 to vector<8x1xf32>
    %61 = arith.divf %59, %60 : vector<8x1xf32>
    %62 = vector.broadcast %61 : vector<8x1xf32> to vector<8x512xf32>
    %63 = arith.subf %57, %62 : vector<8x512xf32>
    %64 = arith.mulf %63, %63 : vector<8x512xf32>
    %cst_22 = arith.constant dense<0.000000e+00> : vector<8xf32>
    %65 = vector.multi_reduction <add>, %64, %cst_22 [1] : vector<8x512xf32> to vector<8xf32>
    %66 = vector.shape_cast %65 : vector<8xf32> to vector<8x1xf32>
    %cst_23 = arith.constant 5.120000e+02 : f32
    %67 = vector.broadcast %cst_23 : f32 to vector<8x1xf32>
    %68 = arith.divf %66, %67 : vector<8x1xf32>
    %cst_24 = arith.constant 9.99999974E-6 : f32
    %69 = vector.broadcast %cst_24 : f32 to vector<8x1xf32>
    %70 = arith.addf %68, %69 : vector<8x1xf32>
    %71 = math.rsqrt %70 : vector<8x1xf32>
    %72 = vector.broadcast %71 : vector<8x1xf32> to vector<8x512xf32>
    %73 = arith.mulf %63, %72 : vector<8x512xf32>
    %c1 = arith.constant 1 : index
    %c0_25 = arith.constant 0 : index
    %74 = vector.load %arg12[%c1, %c0_25] : memref<24x1152xf32, #tpu.memory_space<vmem>>, vector<1x512xf32>
    %75 = vector.broadcast %74 : vector<1x512xf32> to vector<8x512xf32>
    %76 = arith.mulf %73, %75 : vector<8x512xf32>
    %c2 = arith.constant 2 : index
    %c0_26 = arith.constant 0 : index
    %77 = vector.load %arg12[%c2, %c0_26] : memref<24x1152xf32, #tpu.memory_space<vmem>>, vector<1x512xf32>
    %78 = vector.broadcast %77 : vector<1x512xf32> to vector<8x512xf32>
    %79 = arith.addf %76, %78 : vector<8x512xf32>
    %cst_27 = arith.constant 0.000000e+00 : f32
    %80 = vector.broadcast %cst_27 : f32 to vector<8x512xf32>
    %81 = arith.maximumf %79, %80 : vector<8x512xf32>
    %c0_28 = arith.constant 0 : index
    %c0_29 = arith.constant 0 : index
    %82 = vector.load %arg6[%c0_28, %c0_29] : memref<512x256xbf16, #tpu.memory_space<vmem>>, vector<512x256xbf16>
    %83 = arith.truncf %81 : vector<8x512xf32> to vector<8x512xbf16>
    %cst_30 = arith.constant dense<0.000000e+00> : vector<8x256xf32>
    %84 = tpu.matmul %83, %82, %cst_30 {dimension_numbers = #tpu.dot_dimension_numbers<[1], [0], [0], [1], [0, 0, 1, 1], [], []>} : vector<8x512xbf16>, vector<512x256xbf16>, vector<8x256xf32> -> vector<8x256xf32>
    %c3 = arith.constant 3 : index
    %c0_31 = arith.constant 0 : index
    %85 = vector.load %arg12[%c3, %c0_31] : memref<24x1152xf32, #tpu.memory_space<vmem>>, vector<1x256xf32>
    %86 = vector.broadcast %85 : vector<1x256xf32> to vector<8x256xf32>
    %87 = arith.addf %84, %86 : vector<8x256xf32>
    %cst_32 = arith.constant dense<0.000000e+00> : vector<8xf32>
    %88 = vector.multi_reduction <add>, %87, %cst_32 [1] : vector<8x256xf32> to vector<8xf32>
    %89 = vector.shape_cast %88 : vector<8xf32> to vector<8x1xf32>
    %cst_33 = arith.constant 2.560000e+02 : f32
    %90 = vector.broadcast %cst_33 : f32 to vector<8x1xf32>
    %91 = arith.divf %89, %90 : vector<8x1xf32>
    %92 = vector.broadcast %91 : vector<8x1xf32> to vector<8x256xf32>
    %93 = arith.subf %87, %92 : vector<8x256xf32>
    %94 = arith.mulf %93, %93 : vector<8x256xf32>
    %cst_34 = arith.constant dense<0.000000e+00> : vector<8xf32>
    %95 = vector.multi_reduction <add>, %94, %cst_34 [1] : vector<8x256xf32> to vector<8xf32>
    %96 = vector.shape_cast %95 : vector<8xf32> to vector<8x1xf32>
    %cst_35 = arith.constant 2.560000e+02 : f32
    %97 = vector.broadcast %cst_35 : f32 to vector<8x1xf32>
    %98 = arith.divf %96, %97 : vector<8x1xf32>
    %cst_36 = arith.constant 9.99999974E-6 : f32
    %99 = vector.broadcast %cst_36 : f32 to vector<8x1xf32>
    %100 = arith.addf %98, %99 : vector<8x1xf32>
    %101 = math.rsqrt %100 : vector<8x1xf32>
    %102 = vector.broadcast %101 : vector<8x1xf32> to vector<8x256xf32>
    %103 = arith.mulf %93, %102 : vector<8x256xf32>
    %c4 = arith.constant 4 : index
    %c0_37 = arith.constant 0 : index
    %104 = vector.load %arg12[%c4, %c0_37] : memref<24x1152xf32, #tpu.memory_space<vmem>>, vector<1x256xf32>
    %105 = vector.broadcast %104 : vector<1x256xf32> to vector<8x256xf32>
    %106 = arith.mulf %103, %105 : vector<8x256xf32>
    %c5 = arith.constant 5 : index
    %c0_38 = arith.constant 0 : index
    %107 = vector.load %arg12[%c5, %c0_38] : memref<24x1152xf32, #tpu.memory_space<vmem>>, vector<1x256xf32>
    %108 = vector.broadcast %107 : vector<1x256xf32> to vector<8x256xf32>
    %109 = arith.addf %106, %108 : vector<8x256xf32>
    %c0_39 = arith.constant 0 : index
    %c0_40 = arith.constant 0 : index
    %110 = vector.load %arg13[%c0_39, %c0_40] : memref<8x384xf32, #tpu.memory_space<vmem>>, vector<8x256xf32>
    tpu.vector_store %arg13[%c0_39, %c0_40], %109 {strides = array<i32>} : memref<8x384xf32, #tpu.memory_space<vmem>>, vector<8x256xf32>,
    %c0_41 = arith.constant 0 : index
    %c0_42 = arith.constant 0 : index
    %111 = vector.load %arg7[%c0_41, %c0_42] : memref<256x1152xbf16, #tpu.memory_space<vmem>>, vector<256x1152xbf16>
    %112 = arith.truncf %109 : vector<8x256xf32> to vector<8x256xbf16>
    %cst_43 = arith.constant dense<0.000000e+00> : vector<8x1152xf32>
    %113 = tpu.matmul %112, %111, %cst_43 {dimension_numbers = #tpu.dot_dimension_numbers<[1], [0], [0], [1], [0, 0, 1, 1], [], []>} : vector<8x256xbf16>, vector<256x1152xbf16>, vector<8x1152xf32> -> vector<8x1152xf32>
    %c6 = arith.constant 6 : index
    %c0_44 = arith.constant 0 : index
    %114 = vector.load %arg12[%c6, %c0_44] : memref<24x1152xf32, #tpu.memory_space<vmem>>, vector<1x1152xf32>
    %115 = vector.broadcast %114 : vector<1x1152xf32> to vector<8x1152xf32>
    %116 = arith.addf %113, %115 : vector<8x1152xf32>
    %117 = vector.extract_strided_slice %116 {offsets = [0, 0], sizes = [8, 512], strides = [1, 1]} : vector<8x1152xf32> to vector<8x512xf32>
    %118 = vector.extract_strided_slice %116 {offsets = [0, 512], sizes = [8, 512], strides = [1, 1]} : vector<8x1152xf32> to vector<8x512xf32>
    %119 = vector.extract_strided_slice %116 {offsets = [0, 1024], sizes = [8, 128], strides = [1, 1]} : vector<8x1152xf32> to vector<8x128xf32>
    %cst_45 = arith.constant dense<0.000000e+00> : vector<8xf32>
    %120 = vector.multi_reduction <add>, %117, %cst_45 [1] : vector<8x512xf32> to vector<8xf32>
    %121 = vector.shape_cast %120 : vector<8xf32> to vector<8x1xf32>
    %cst_46 = arith.constant 5.120000e+02 : f32
    %122 = vector.broadcast %cst_46 : f32 to vector<8x1xf32>
    %123 = arith.divf %121, %122 : vector<8x1xf32>
    %124 = vector.broadcast %123 : vector<8x1xf32> to vector<8x512xf32>
    %125 = arith.subf %117, %124 : vector<8x512xf32>
    %126 = arith.mulf %125, %125 : vector<8x512xf32>
    %cst_47 = arith.constant dense<0.000000e+00> : vector<8xf32>
    %127 = vector.multi_reduction <add>, %126, %cst_47 [1] : vector<8x512xf32> to vector<8xf32>
    %128 = vector.shape_cast %127 : vector<8xf32> to vector<8x1xf32>
    %cst_48 = arith.constant 5.120000e+02 : f32
    %129 = vector.broadcast %cst_48 : f32 to vector<8x1xf32>
    %130 = arith.divf %128, %129 : vector<8x1xf32>
    %cst_49 = arith.constant 9.99999974E-6 : f32
    %131 = vector.broadcast %cst_49 : f32 to vector<8x1xf32>
    %132 = arith.addf %130, %131 : vector<8x1xf32>
    %133 = math.rsqrt %132 : vector<8x1xf32>
    %134 = vector.broadcast %133 : vector<8x1xf32> to vector<8x512xf32>
    %135 = arith.mulf %125, %134 : vector<8x512xf32>
    %c7 = arith.constant 7 : index
    %c0_50 = arith.constant 0 : index
    %136 = vector.load %arg12[%c7, %c0_50] : memref<24x1152xf32, #tpu.memory_space<vmem>>, vector<1x512xf32>
    %137 = vector.broadcast %136 : vector<1x512xf32> to vector<8x512xf32>
    %138 = arith.mulf %135, %137 : vector<8x512xf32>
    %c8 = arith.constant 8 : index
    %c0_51 = arith.constant 0 : index
    %139 = vector.load %arg12[%c8, %c0_51] : memref<24x1152xf32, #tpu.memory_space<vmem>>, vector<1x512xf32>
    %140 = vector.broadcast %139 : vector<1x512xf32> to vector<8x512xf32>
    %141 = arith.addf %138, %140 : vector<8x512xf32>
    %cst_52 = arith.constant 0.000000e+00 : f32
    %142 = vector.broadcast %cst_52 : f32 to vector<8x512xf32>
    %143 = arith.maximumf %141, %142 : vector<8x512xf32>
    %c0_53 = arith.constant 0 : index
    %c0_54 = arith.constant 0 : index
    %144 = vector.load %arg8[%c0_53, %c0_54] : memref<512x512xbf16, #tpu.memory_space<vmem>>, vector<512x512xbf16>
    %145 = arith.truncf %143 : vector<8x512xf32> to vector<8x512xbf16>
    %cst_55 = arith.constant dense<0.000000e+00> : vector<8x512xf32>
    %146 = tpu.matmul %145, %144, %cst_55 {dimension_numbers = #tpu.dot_dimension_numbers<[1], [0], [0], [1], [0, 0, 1, 1], [], []>} : vector<8x512xbf16>, vector<512x512xbf16>, vector<8x512xf32> -> vector<8x512xf32>
    %c9 = arith.constant 9 : index
    %c0_56 = arith.constant 0 : index
    %147 = vector.load %arg12[%c9, %c0_56] : memref<24x1152xf32, #tpu.memory_space<vmem>>, vector<1x512xf32>
    %148 = vector.broadcast %147 : vector<1x512xf32> to vector<8x512xf32>
    %149 = arith.addf %146, %148 : vector<8x512xf32>
    %cst_57 = arith.constant dense<0.000000e+00> : vector<8xf32>
    %150 = vector.multi_reduction <add>, %149, %cst_57 [1] : vector<8x512xf32> to vector<8xf32>
    %151 = vector.shape_cast %150 : vector<8xf32> to vector<8x1xf32>
    %cst_58 = arith.constant 5.120000e+02 : f32
    %152 = vector.broadcast %cst_58 : f32 to vector<8x1xf32>
    %153 = arith.divf %151, %152 : vector<8x1xf32>
    %154 = vector.broadcast %153 : vector<8x1xf32> to vector<8x512xf32>
    %155 = arith.subf %149, %154 : vector<8x512xf32>
    %156 = arith.mulf %155, %155 : vector<8x512xf32>
    %cst_59 = arith.constant dense<0.000000e+00> : vector<8xf32>
    %157 = vector.multi_reduction <add>, %156, %cst_59 [1] : vector<8x512xf32> to vector<8xf32>
    %158 = vector.shape_cast %157 : vector<8xf32> to vector<8x1xf32>
    %cst_60 = arith.constant 5.120000e+02 : f32
    %159 = vector.broadcast %cst_60 : f32 to vector<8x1xf32>
    %160 = arith.divf %158, %159 : vector<8x1xf32>
    %cst_61 = arith.constant 9.99999974E-6 : f32
    %161 = vector.broadcast %cst_61 : f32 to vector<8x1xf32>
    %162 = arith.addf %160, %161 : vector<8x1xf32>
    %163 = math.rsqrt %162 : vector<8x1xf32>
    %164 = vector.broadcast %163 : vector<8x1xf32> to vector<8x512xf32>
    %165 = arith.mulf %155, %164 : vector<8x512xf32>
    %c10 = arith.constant 10 : index
    %c0_62 = arith.constant 0 : index
    %166 = vector.load %arg12[%c10, %c0_62] : memref<24x1152xf32, #tpu.memory_space<vmem>>, vector<1x512xf32>
    %167 = vector.broadcast %166 : vector<1x512xf32> to vector<8x512xf32>
    %168 = arith.mulf %165, %167 : vector<8x512xf32>
    %c11 = arith.constant 11 : index
    %c0_63 = arith.constant 0 : index
    %169 = vector.load %arg12[%c11, %c0_63] : memref<24x1152xf32, #tpu.memory_space<vmem>>, vector<1x512xf32>
    %170 = vector.broadcast %169 : vector<1x512xf32> to vector<8x512xf32>
    %171 = arith.addf %168, %170 : vector<8x512xf32>
    %cst_64 = arith.constant 0.000000e+00 : f32
    %172 = vector.broadcast %cst_64 : f32 to vector<8x512xf32>
    %173 = arith.maximumf %171, %172 : vector<8x512xf32>
    %cst_65 = arith.constant dense<0.000000e+00> : vector<8xf32>
    %174 = vector.multi_reduction <add>, %118, %cst_65 [1] : vector<8x512xf32> to vector<8xf32>
    %175 = vector.shape_cast %174 : vector<8xf32> to vector<8x1xf32>
    %cst_66 = arith.constant 5.120000e+02 : f32
    %176 = vector.broadcast %cst_66 : f32 to vector<8x1xf32>
    %177 = arith.divf %175, %176 : vector<8x1xf32>
    %178 = vector.broadcast %177 : vector<8x1xf32> to vector<8x512xf32>
    %179 = arith.subf %118, %178 : vector<8x512xf32>
    %180 = arith.mulf %179, %179 : vector<8x512xf32>
    %cst_67 = arith.constant dense<0.000000e+00> : vector<8xf32>
    %181 = vector.multi_reduction <add>, %180, %cst_67 [1] : vector<8x512xf32> to vector<8xf32>
    %182 = vector.shape_cast %181 : vector<8xf32> to vector<8x1xf32>
    %cst_68 = arith.constant 5.120000e+02 : f32
    %183 = vector.broadcast %cst_68 : f32 to vector<8x1xf32>
    %184 = arith.divf %182, %183 : vector<8x1xf32>
    %cst_69 = arith.constant 9.99999974E-6 : f32
    %185 = vector.broadcast %cst_69 : f32 to vector<8x1xf32>
    %186 = arith.addf %184, %185 : vector<8x1xf32>
    %187 = math.rsqrt %186 : vector<8x1xf32>
    %188 = vector.broadcast %187 : vector<8x1xf32> to vector<8x512xf32>
    %189 = arith.mulf %179, %188 : vector<8x512xf32>
    %c12 = arith.constant 12 : index
    %c0_70 = arith.constant 0 : index
    %190 = vector.load %arg12[%c12, %c0_70] : memref<24x1152xf32, #tpu.memory_space<vmem>>, vector<1x512xf32>
    %191 = vector.broadcast %190 : vector<1x512xf32> to vector<8x512xf32>
    %192 = arith.mulf %189, %191 : vector<8x512xf32>
    %c13 = arith.constant 13 : index
    %c0_71 = arith.constant 0 : index
    %193 = vector.load %arg12[%c13, %c0_71] : memref<24x1152xf32, #tpu.memory_space<vmem>>, vector<1x512xf32>
    %194 = vector.broadcast %193 : vector<1x512xf32> to vector<8x512xf32>
    %195 = arith.addf %192, %194 : vector<8x512xf32>
    %cst_72 = arith.constant 0.000000e+00 : f32
    %196 = vector.broadcast %cst_72 : f32 to vector<8x512xf32>
    %197 = arith.maximumf %195, %196 : vector<8x512xf32>
    %c0_73 = arith.constant 0 : index
    %c0_74 = arith.constant 0 : index
    %198 = vector.load %arg9[%c0_73, %c0_74] : memref<512x256xbf16, #tpu.memory_space<vmem>>, vector<512x256xbf16>
    %199 = arith.truncf %197 : vector<8x512xf32> to vector<8x512xbf16>
    %cst_75 = arith.constant dense<0.000000e+00> : vector<8x256xf32>
    %200 = tpu.matmul %199, %198, %cst_75 {dimension_numbers = #tpu.dot_dimension_numbers<[1], [0], [0], [1], [0, 0, 1, 1], [], []>} : vector<8x512xbf16>, vector<512x256xbf16>, vector<8x256xf32> -> vector<8x256xf32>
    %c14 = arith.constant 14 : index
    %c0_76 = arith.constant 0 : index
    %201 = vector.load %arg12[%c14, %c0_76] : memref<24x1152xf32, #tpu.memory_space<vmem>>, vector<1x256xf32>
    %202 = vector.broadcast %201 : vector<1x256xf32> to vector<8x256xf32>
    %203 = arith.addf %200, %202 : vector<8x256xf32>
    %cst_77 = arith.constant dense<0.000000e+00> : vector<8xf32>
    %204 = vector.multi_reduction <add>, %203, %cst_77 [1] : vector<8x256xf32> to vector<8xf32>
    %205 = vector.shape_cast %204 : vector<8xf32> to vector<8x1xf32>
    %cst_78 = arith.constant 2.560000e+02 : f32
    %206 = vector.broadcast %cst_78 : f32 to vector<8x1xf32>
    %207 = arith.divf %205, %206 : vector<8x1xf32>
    %208 = vector.broadcast %207 : vector<8x1xf32> to vector<8x256xf32>
    %209 = arith.subf %203, %208 : vector<8x256xf32>
    %210 = arith.mulf %209, %209 : vector<8x256xf32>
    %cst_79 = arith.constant dense<0.000000e+00> : vector<8xf32>
    %211 = vector.multi_reduction <add>, %210, %cst_79 [1] : vector<8x256xf32> to vector<8xf32>
    %212 = vector.shape_cast %211 : vector<8xf32> to vector<8x1xf32>
    %cst_80 = arith.constant 2.560000e+02 : f32
    %213 = vector.broadcast %cst_80 : f32 to vector<8x1xf32>
    %214 = arith.divf %212, %213 : vector<8x1xf32>
    %cst_81 = arith.constant 9.99999974E-6 : f32
    %215 = vector.broadcast %cst_81 : f32 to vector<8x1xf32>
    %216 = arith.addf %214, %215 : vector<8x1xf32>
    %217 = math.rsqrt %216 : vector<8x1xf32>
    %218 = vector.broadcast %217 : vector<8x1xf32> to vector<8x256xf32>
    %219 = arith.mulf %209, %218 : vector<8x256xf32>
    %c15 = arith.constant 15 : index
    %c0_82 = arith.constant 0 : index
    %220 = vector.load %arg12[%c15, %c0_82] : memref<24x1152xf32, #tpu.memory_space<vmem>>, vector<1x256xf32>
    %221 = vector.broadcast %220 : vector<1x256xf32> to vector<8x256xf32>
    %222 = arith.mulf %219, %221 : vector<8x256xf32>
    %c16 = arith.constant 16 : index
    %c0_83 = arith.constant 0 : index
    %223 = vector.load %arg12[%c16, %c0_83] : memref<24x1152xf32, #tpu.memory_space<vmem>>, vector<1x256xf32>
    %224 = vector.broadcast %223 : vector<1x256xf32> to vector<8x256xf32>
    %225 = arith.addf %222, %224 : vector<8x256xf32>
    %cst_84 = arith.constant 0.000000e+00 : f32
    %226 = vector.broadcast %cst_84 : f32 to vector<8x256xf32>
    %227 = arith.maximumf %225, %226 : vector<8x256xf32>
    %cst_85 = arith.constant 0.000000e+00 : f32
    %228 = vector.broadcast %cst_85 : f32 to vector<8x128xf32>
    %229 = arith.maximumf %119, %228 : vector<8x128xf32>
    %c0_86 = arith.constant 0 : index
    %c0_87 = arith.constant 0 : index
    %230 = vector.load %arg10[%c0_86, %c0_87] : memref<128x128xbf16, #tpu.memory_space<vmem>>, vector<128x128xbf16>
    %231 = arith.truncf %229 : vector<8x128xf32> to vector<8x128xbf16>
    %cst_88 = arith.constant dense<0.000000e+00> : vector<8x128xf32>
    %232 = tpu.matmul %231, %230, %cst_88 {dimension_numbers = #tpu.dot_dimension_numbers<[1], [0], [0], [1], [0, 0, 1, 1], [], []>} : vector<8x128xbf16>, vector<128x128xbf16>, vector<8x128xf32> -> vector<8x128xf32>
    %c17 = arith.constant 17 : index
    %c0_89 = arith.constant 0 : index
    %233 = vector.load %arg12[%c17, %c0_89] : memref<24x1152xf32, #tpu.memory_space<vmem>>, vector<1x128xf32>
    %234 = vector.broadcast %233 : vector<1x128xf32> to vector<8x128xf32>
    %235 = arith.addf %232, %234 : vector<8x128xf32>
    %cst_90 = arith.constant 0.000000e+00 : f32
    %236 = vector.broadcast %cst_90 : f32 to vector<8x128xf32>
    %237 = arith.maximumf %235, %236 : vector<8x128xf32>
    %c0_91 = arith.constant 0 : index
    %c0_92 = arith.constant 0 : index
    %238 = vector.load %arg11[%c0_91, %c0_92] : memref<896x128xf32, #tpu.memory_space<vmem>>, vector<512x128xf32>
    %cst_93 = arith.constant dense<0.000000e+00> : vector<8x128xf32>
    %239 = tpu.matmul %173, %238, %cst_93 {dimension_numbers = #tpu.dot_dimension_numbers<[1], [0], [0], [1], [0, 0, 1, 1], [], []>} : vector<8x512xf32>, vector<512x128xf32>, vector<8x128xf32> -> vector<8x128xf32>
    %c512_94 = arith.constant 512 : index
    %c0_95 = arith.constant 0 : index
    %240 = vector.load %arg11[%c512_94, %c0_95] : memref<896x128xf32, #tpu.memory_space<vmem>>, vector<256x128xf32>
    %cst_96 = arith.constant dense<0.000000e+00> : vector<8x128xf32>
    %241 = tpu.matmul %227, %240, %cst_96 {dimension_numbers = #tpu.dot_dimension_numbers<[1], [0], [0], [1], [0, 0, 1, 1], [], []>} : vector<8x256xf32>, vector<256x128xf32>, vector<8x128xf32> -> vector<8x128xf32>
    %242 = arith.addf %239, %241 : vector<8x128xf32>
    %c768 = arith.constant 768 : index
    %c0_97 = arith.constant 0 : index
    %243 = vector.load %arg11[%c768, %c0_97] : memref<896x128xf32, #tpu.memory_space<vmem>>, vector<128x128xf32>
    %cst_98 = arith.constant dense<0.000000e+00> : vector<8x128xf32>
    %244 = tpu.matmul %237, %243, %cst_98 {dimension_numbers = #tpu.dot_dimension_numbers<[1], [0], [0], [1], [0, 0, 1, 1], [], []>} : vector<8x128xf32>, vector<128x128xf32>, vector<8x128xf32> -> vector<8x128xf32>
    %245 = arith.addf %242, %244 : vector<8x128xf32>
    %c18 = arith.constant 18 : index
    %c0_99 = arith.constant 0 : index
    %246 = vector.load %arg12[%c18, %c0_99] : memref<24x1152xf32, #tpu.memory_space<vmem>>, vector<1x128xf32>
    %247 = vector.broadcast %246 : vector<1x128xf32> to vector<8x128xf32>
    %248 = arith.addf %245, %247 : vector<8x128xf32>
    %c0_100 = arith.constant 0 : index
    %c256_101 = arith.constant 256 : index
    %249 = vector.load %arg13[%c0_100, %c256_101] : memref<8x384xf32, #tpu.memory_space<vmem>>, vector<8x128xf32>
    tpu.vector_store %arg13[%c0_100, %c256_101], %248 {strides = array<i32>} : memref<8x384xf32, #tpu.memory_space<vmem>>, vector<8x128xf32>,
    return
  }
  func.func @transform_0(%arg0: i32) -> (i32, i32) {
    %c0_i32 = arith.constant 0 : i32
    %c0_i32_0 = arith.constant 0 : i32
    return %arg0, %c0_i32 : i32, i32
  }
  func.func @transform_1(%arg0: i32) -> (i32, i32) {
    %c0_i32 = arith.constant 0 : i32
    %c0_i32_0 = arith.constant 0 : i32
    return %arg0, %c0_i32 : i32, i32
  }
  func.func @transform_2(%arg0: i32) -> (i32, i32) {
    %c0_i32 = arith.constant 0 : i32
    %c0_i32_0 = arith.constant 0 : i32
    return %arg0, %c0_i32 : i32, i32
  }
  func.func @transform_3(%arg0: i32) -> (i32, i32) {
    %c0_i32 = arith.constant 0 : i32
    %c0_i32_0 = arith.constant 0 : i32
    return %arg0, %c0_i32 : i32, i32
  }
  func.func @transform_4(%arg0: i32) -> (i32, i32) {
    %c0_i32 = arith.constant 0 : i32
    %c0_i32_0 = arith.constant 0 : i32
    %c0_i32_1 = arith.constant 0 : i32
    return %c0_i32, %c0_i32_0 : i32, i32
  }
  func.func @transform_5(%arg0: i32) -> (i32, i32) {
    %c0_i32 = arith.constant 0 : i32
    %c0_i32_0 = arith.constant 0 : i32
    %c0_i32_1 = arith.constant 0 : i32
    return %c0_i32, %c0_i32_0 : i32, i32
  }
  func.func @transform_6(%arg0: i32) -> (i32, i32) {
    %c0_i32 = arith.constant 0 : i32
    %c0_i32_0 = arith.constant 0 : i32
    %c0_i32_1 = arith.constant 0 : i32
    return %c0_i32, %c0_i32_0 : i32, i32
  }
  func.func @transform_7(%arg0: i32) -> (i32, i32) {
    %c0_i32 = arith.constant 0 : i32
    %c0_i32_0 = arith.constant 0 : i32
    %c0_i32_1 = arith.constant 0 : i32
    return %c0_i32, %c0_i32_0 : i32, i32
  }
  func.func @transform_8(%arg0: i32) -> (i32, i32) {
    %c0_i32 = arith.constant 0 : i32
    %c0_i32_0 = arith.constant 0 : i32
    %c0_i32_1 = arith.constant 0 : i32
    return %c0_i32, %c0_i32_0 : i32, i32
  }
  func.func @transform_9(%arg0: i32) -> (i32, i32) {
    %c0_i32 = arith.constant 0 : i32
    %c0_i32_0 = arith.constant 0 : i32
    %c0_i32_1 = arith.constant 0 : i32
    return %c0_i32, %c0_i32_0 : i32, i32
  }
  func.func @transform_10(%arg0: i32) -> (i32, i32) {
    %c0_i32 = arith.constant 0 : i32
    %c0_i32_0 = arith.constant 0 : i32
    %c0_i32_1 = arith.constant 0 : i32
    return %c0_i32, %c0_i32_0 : i32, i32
  }
  func.func @transform_11(%arg0: i32) -> (i32, i32) {
    %c0_i32 = arith.constant 0 : i32
    %c0_i32_0 = arith.constant 0 : i32
    %c0_i32_1 = arith.constant 0 : i32
    return %c0_i32, %c0_i32_0 : i32, i32
  }
  func.func @transform_12(%arg0: i32) -> (i32, i32) {
    %c0_i32 = arith.constant 0 : i32
    %c0_i32_0 = arith.constant 0 : i32
    return %arg0, %c0_i32 : i32, i32
  }
}

</mosaic_0001>

<llo_original>
// kernel: tpu_custom_call.1
$region0: #{tpu_custom_call.1}
  #allocation0 [shape = 'u32[]', space=smem, size = 0x4, offset = 0x4, fixed_abs, tag = 'smem constant byte address 0x4 - core index']
  #allocation1 [shape = 'u32[144,128]{1,0:T(1,128)}', space=vmem, size = 0x12000, scoped, tag = 'internal scratch']
  %s0 = inlined_call_operand.hbm [shape: bf16[8,256], index: 0, kind: input, shape index: {}]
  %s1 = inlined_call_operand.hbm [shape: bf16[8,256], index: 1, kind: input, shape index: {}]
  %s2 = inlined_call_operand.hbm [shape: bf16[8,1024], index: 2, kind: input, shape index: {}]
  %s3 = inlined_call_operand.vmem [shape: f32[8,12], index: 3, kind: input, shape index: {}]
  %s4 = inlined_call_operand.hbm [shape: bf16[768,512], index: 4, kind: input, shape index: {}]
  %s5 = inlined_call_operand.hbm [shape: bf16[512,256], index: 5, kind: input, shape index: {}]
  %s6 = inlined_call_operand.hbm [shape: bf16[256,1152], index: 6, kind: input, shape index: {}]
  %s7 = inlined_call_operand.hbm [shape: bf16[512,512], index: 7, kind: input, shape index: {}]
  %s8 = inlined_call_operand.hbm [shape: bf16[512,256], index: 8, kind: input, shape index: {}]
  %s9 = inlined_call_operand.hbm [shape: bf16[128,128], index: 9, kind: input, shape index: {}]
  %s10 = inlined_call_operand.hbm [shape: f32[896,128], index: 10, kind: input, shape index: {}]
  %s11 = inlined_call_operand.hbm [shape: f32[24,1152], index: 11, kind: input, shape index: {}]
  %s12 = inlined_call_operand.hbm [shape: f32[8,384], index: 12, kind: output, shape index: {}]
  %s13 = sld [smem:[#allocation0]]
  $region102: #{tpu_custom_call.1} parent=0
    _
  %s15 = ssub.s32 1, %s13
  %s16 = scalar_select 0, %s15, %s13
  $region1: #{tpu_custom_call.1} parent=0
    #allocation2 [shape = 'u8[4096]{0}', space=vmem, size = 0x1000, scoped, tag = 'input window, operand 0, single buffered']
    #allocation3 [shape = 's32[1]{0}', space=sflag, size = 0x4, scoped, tag = 'scoped memory for tpu_custom_call.1']
    #allocation4 [shape = 's32[1]{0}', space=sflag, size = 0x4, scoped, tag = 'scoped memory for tpu_custom_call.1']
    #allocation5 [shape = 'u8[4096]{0}', space=vmem, size = 0x1000, scoped, tag = 'input window, operand 1, single buffered']
    #allocation6 [shape = 's32[1]{0}', space=sflag, size = 0x4, scoped, tag = 'scoped memory for tpu_custom_call.1']
    #allocation7 [shape = 'u8[16384]{0}', space=vmem, size = 0x4000, scoped, tag = 'input window, operand 2, single buffered']
    #allocation8 [shape = 'u8[786432]{0}', space=vmem, size = 0xc0000, scoped, tag = 'input window, operand 4, single buffered']
    #allocation9 [shape = 's32[1]{0}', space=sflag, size = 0x4, scoped, tag = 'scoped memory for tpu_custom_call.1']
    #allocation10 [shape = 'u8[262144]{0}', space=vmem, size = 0x40000, scoped, tag = 'input window, operand 5, single buffered']
    #allocation11 [shape = 'u8[589824]{0}', space=vmem, size = 0x90000, scoped, tag = 'input window, operand 6, single buffered']
    #allocation12 [shape = 's32[1]{0}', space=sflag, size = 0x4, scoped, tag = 'scoped memory for tpu_custom_call.1']
    #allocation13 [shape = 'u8[524288]{0}', space=vmem, size = 0x80000, scoped, tag = 'input window, operand 7, single buffered']
    #allocation14 [shape = 'u8[262144]{0}', space=vmem, size = 0x40000, scoped, tag = 'input window, operand 8, single buffered']
    #allocation15 [shape = 's32[1]{0}', space=sflag, size = 0x4, scoped, tag = 'scoped memory for tpu_custom_call.1']
    #allocation16 [shape = 'u8[32768]{0}', space=vmem, size = 0x8000, scoped, tag = 'input window, operand 9, single buffered']
    #allocation17 [shape = 'u8[458752]{0}', space=vmem, size = 0x70000, scoped, tag = 'input window, operand 10, single buffered']
    #allocation18 [shape = 's32[1]{0}', space=sflag, size = 0x4, scoped, tag = 'scoped memory for tpu_custom_call.1']
    #allocation19 [shape = 'u8[110592]{0}', space=vmem, size = 0x1b000, scoped, tag = 'input window, operand 11, single buffered']
    #allocation20 [shape = 'u8[12288]{0}', space=vmem, size = 0x3000, scoped, tag = 'output window, operand 0, single buffered']
    %17 = vsyncpa [#allocation3], 0
    %18 = vsyncpa [#allocation6], 0
    %19 = vsyncpa [#allocation9], 0
    %20 = vsyncpa [#allocation12], 0
    %21 = vsyncpa [#allocation15], 0
    %22 = vsyncpa [#allocation18], 0
    %23 = vsyncpa [#allocation4], 0
    // Predicated region
    $region2: #{tpu_custom_call.1} parent=1 // pred_check
      _
    $region3: #{tpu_custom_call.1} parent=1 // pred_check_branch
      %25 = sbr.rel (0) target = $region5
    $region4: #{tpu_custom_call.1} parent=1 // pred_region
      %s27 = ssub.s32 128, 128
      %28 = vsyncadd [#allocation3], %s27
      %s30 = sshll.u32 [#allocation2], 4
      %s31 = int_to_ptr.vmem [resolvable:$true] %s30
      %33 = dma.hbm_to_vmem [thread:$0]  %s0, 128, %s31, [#allocation3]
    $region5: #{tpu_custom_call.1} parent=1 // pred_fallthru
      _
    // Predicated region
    $region6: #{tpu_custom_call.1} parent=1 // pred_check
      _
    $region7: #{tpu_custom_call.1} parent=1 // pred_check_branch
      %35 = sbr.rel (0) target = $region9
    $region8: #{tpu_custom_call.1} parent=1 // pred_region
      %s37 = ssub.s32 128, 128
      %38 = vsyncadd [#allocation6], %s37
      %s40 = sshll.u32 [#allocation5], 4
      %s41 = int_to_ptr.vmem [resolvable:$true] %s40
      %43 = dma.hbm_to_vmem [thread:$0]  %s1, 128, %s41, [#allocation6]
    $region9: #{tpu_custom_call.1} parent=1 // pred_fallthru
      _
    // Predicated region
    $region10: #{tpu_custom_call.1} parent=1 // pred_check
      _
    $region11: #{tpu_custom_call.1} parent=1 // pred_check_branch
      %45 = sbr.rel (0) target = $region13
    $region12: #{tpu_custom_call.1} parent=1 // pred_region
      %s47 = ssub.s32 512, 512
      %48 = vsyncadd [#allocation6], %s47
      %s50 = sshll.u32 [#allocation7], 4
      %s51 = int_to_ptr.vmem [resolvable:$true] %s50
      %53 = dma.hbm_to_vmem [thread:$0]  %s2, 512, %s51, [#allocation6]
    $region13: #{tpu_custom_call.1} parent=1 // pred_fallthru
      _
    // Predicated region
    $region14: #{tpu_custom_call.1} parent=1 // pred_check
      _
    $region15: #{tpu_custom_call.1} parent=1 // pred_check_branch
      %55 = sbr.rel (0) target = $region17
    $region16: #{tpu_custom_call.1} parent=1 // pred_region
      _
    $region17: #{tpu_custom_call.1} parent=1 // pred_fallthru
      _
    // Predicated region
    $region18: #{tpu_custom_call.1} parent=1 // pred_check
      _
    $region19: #{tpu_custom_call.1} parent=1 // pred_check_branch
      %57 = sbr.rel (0) target = $region21
    $region20: #{tpu_custom_call.1} parent=1 // pred_region
      %s59 = ssub.s32 24576, 24576
      %60 = vsyncadd [#allocation9], %s59
      %s61 = sshll.u32 [#allocation8], 4
      %s62 = int_to_ptr.vmem [resolvable:$true] %s61
      %67 = dma.hbm_to_vmem [thread:$0]  %s4, 24576, %s62, [#allocation9], 256, 256, 16
    $region21: #{tpu_custom_call.1} parent=1 // pred_fallthru
      _
    // Predicated region
    $region22: #{tpu_custom_call.1} parent=1 // pred_check
      _
    $region23: #{tpu_custom_call.1} parent=1 // pred_check_branch
      %69 = sbr.rel (0) target = $region25
    $region24: #{tpu_custom_call.1} parent=1 // pred_region
      %s71 = ssub.s32 8192, 8192
      %72 = vsyncadd [#allocation9], %s71
      %s73 = sshll.u32 [#allocation10], 4
      %s74 = int_to_ptr.vmem [resolvable:$true] %s73
      %79 = dma.hbm_to_vmem [thread:$0]  %s5, 8192, %s74, [#allocation9], 128, 128, 8
    $region25: #{tpu_custom_call.1} parent=1 // pred_fallthru
      _
    // Predicated region
    $region26: #{tpu_custom_call.1} parent=1 // pred_check
      _
    $region27: #{tpu_custom_call.1} parent=1 // pred_check_branch
      %81 = sbr.rel (0) target = $region29
    $region28: #{tpu_custom_call.1} parent=1 // pred_region
      %s83 = ssub.s32 18432, 18432
      %84 = vsyncadd [#allocation12], %s83
      %s85 = sshll.u32 [#allocation11], 4
      %s86 = int_to_ptr.vmem [resolvable:$true] %s85
      %91 = dma.hbm_to_vmem [thread:$0]  %s6, 18432, %s86, [#allocation12], 576, 576, 36
    $region29: #{tpu_custom_call.1} parent=1 // pred_fallthru
      _
    // Predicated region
    $region30: #{tpu_custom_call.1} parent=1 // pred_check
      _
    $region31: #{tpu_custom_call.1} parent=1 // pred_check_branch
      %93 = sbr.rel (0) target = $region33
    $region32: #{tpu_custom_call.1} parent=1 // pred_region
      %s95 = ssub.s32 16384, 16384
      %96 = vsyncadd [#allocation12], %s95
      %s97 = sshll.u32 [#allocation13], 4
      %s98 = int_to_ptr.vmem [resolvable:$true] %s97
      %103 = dma.hbm_to_vmem [thread:$0]  %s7, 16384, %s98, [#allocation12], 256, 256, 16
    $region33: #{tpu_custom_call.1} parent=1 // pred_fallthru
      _
    // Predicated region
    $region34: #{tpu_custom_call.1} parent=1 // pred_check
      _
    $region35: #{tpu_custom_call.1} parent=1 // pred_check_branch
      %105 = sbr.rel (0) target = $region37
    $region36: #{tpu_custom_call.1} parent=1 // pred_region
      %s107 = ssub.s32 8192, 8192
      %108 = vsyncadd [#allocation15], %s107
      %s109 = sshll.u32 [#allocation14], 4
      %s110 = int_to_ptr.vmem [resolvable:$true] %s109
      %115 = dma.hbm_to_vmem [thread:$0]  %s8, 8192, %s110, [#allocation15], 128, 128, 8
    $region37: #{tpu_custom_call.1} parent=1 // pred_fallthru
      _
    // Predicated region
    $region38: #{tpu_custom_call.1} parent=1 // pred_check
      _
    $region39: #{tpu_custom_call.1} parent=1 // pred_check_branch
      %117 = sbr.rel (0) target = $region41
    $region40: #{tpu_custom_call.1} parent=1 // pred_region
      %s119 = ssub.s32 1024, 1024
      %120 = vsyncadd [#allocation15], %s119
      %s121 = sshll.u32 [#allocation16], 4
      %s122 = int_to_ptr.vmem [resolvable:$true] %s121
      %127 = dma.hbm_to_vmem [thread:$0]  %s9, 1024, %s122, [#allocation15], 64, 64, 4
    $region41: #{tpu_custom_call.1} parent=1 // pred_fallthru
      _
    // Predicated region
    $region42: #{tpu_custom_call.1} parent=1 // pred_check
      _
    $region43: #{tpu_custom_call.1} parent=1 // pred_check_branch
      %129 = sbr.rel (0) target = $region45
    $region44: #{tpu_custom_call.1} parent=1 // pred_region
      %s131 = ssub.s32 14336, 14336
      %132 = vsyncadd [#allocation18], %s131
      %s133 = sshll.u32 [#allocation17], 4
      %s134 = int_to_ptr.vmem [resolvable:$true] %s133
      %139 = dma.hbm_to_vmem [thread:$0]  %s10, 14336, %s134, [#allocation18], 128, 128, 8
    $region45: #{tpu_custom_call.1} parent=1 // pred_fallthru
      _
    // Predicated region
    $region46: #{tpu_custom_call.1} parent=1 // pred_check
      _
    $region47: #{tpu_custom_call.1} parent=1 // pred_check_branch
      %141 = sbr.rel (0) target = $region49
    $region48: #{tpu_custom_call.1} parent=1 // pred_region
      %s143 = ssub.s32 3456, 3456
      %144 = vsyncadd [#allocation18], %s143
      %s145 = sshll.u32 [#allocation19], 4
      %s146 = int_to_ptr.vmem [resolvable:$true] %s145
      %151 = dma.hbm_to_vmem [thread:$0]  %s11, 3456, %s146, [#allocation18], 1152, 1152, 72
    $region49: #{tpu_custom_call.1} parent=1 // pred_fallthru
      _
    // Predicated region
    $region50: #{tpu_custom_call.1} parent=1 // pred_check
      _
    $region51: #{tpu_custom_call.1} parent=1 // pred_check_branch
      %153 = sbr.rel (0) target = $region53
    $region52: #{tpu_custom_call.1} parent=1 // pred_region
      %154 = dma.done [#allocation3], 128
    $region53: #{tpu_custom_call.1} parent=1 // pred_fallthru
      _
    // Predicated region
    $region54: #{tpu_custom_call.1} parent=1 // pred_check
      _
    $region55: #{tpu_custom_call.1} parent=1 // pred_check_branch
      %156 = sbr.rel (0) target = $region57
    $region56: #{tpu_custom_call.1} parent=1 // pred_region
      %157 = dma.done [#allocation6], 128
    $region57: #{tpu_custom_call.1} parent=1 // pred_fallthru
      _
    // Predicated region
    $region58: #{tpu_custom_call.1} parent=1 // pred_check
      _
    $region59: #{tpu_custom_call.1} parent=1 // pred_check_branch
      %159 = sbr.rel (0) target = $region61
    $region60: #{tpu_custom_call.1} parent=1 // pred_region
      %160 = dma.done [#allocation6], 512
    $region61: #{tpu_custom_call.1} parent=1 // pred_fallthru
      _
    // Predicated region
    $region62: #{tpu_custom_call.1} parent=1 // pred_check
      _
    $region63: #{tpu_custom_call.1} parent=1 // pred_check_branch
      %162 = sbr.rel (0) target = $region65
    $region64: #{tpu_custom_call.1} parent=1 // pred_region
      %163 = dma.done [#allocation9], 24576
    $region65: #{tpu_custom_call.1} parent=1 // pred_fallthru
      _
    // Predicated region
    $region66: #{tpu_custom_call.1} parent=1 // pred_check
      _
    $region67: #{tpu_custom_call.1} parent=1 // pred_check_branch
      %165 = sbr.rel (0) target = $region69
    $region68: #{tpu_custom_call.1} parent=1 // pred_region
      %166 = dma.done [#allocation9], 8192
    $region69: #{tpu_custom_call.1} parent=1 // pred_fallthru
      _
    // Predicated region
    $region70: #{tpu_custom_call.1} parent=1 // pred_check
      _
    $region71: #{tpu_custom_call.1} parent=1 // pred_check_branch
      %168 = sbr.rel (0) target = $region73
    $region72: #{tpu_custom_call.1} parent=1 // pred_region
      %169 = dma.done [#allocation12], 18432
    $region73: #{tpu_custom_call.1} parent=1 // pred_fallthru
      _
    // Predicated region
    $region74: #{tpu_custom_call.1} parent=1 // pred_check
      _
    $region75: #{tpu_custom_call.1} parent=1 // pred_check_branch
      %171 = sbr.rel (0) target = $region77
    $region76: #{tpu_custom_call.1} parent=1 // pred_region
      %172 = dma.done [#allocation12], 16384
    $region77: #{tpu_custom_call.1} parent=1 // pred_fallthru
      _
    // Predicated region
    $region78: #{tpu_custom_call.1} parent=1 // pred_check
      _
    $region79: #{tpu_custom_call.1} parent=1 // pred_check_branch
      %174 = sbr.rel (0) target = $region81
    $region80: #{tpu_custom_call.1} parent=1 // pred_region
      %175 = dma.done [#allocation15], 8192
    $region81: #{tpu_custom_call.1} parent=1 // pred_fallthru
      _
    // Predicated region
    $region82: #{tpu_custom_call.1} parent=1 // pred_check
      _
    $region83: #{tpu_custom_call.1} parent=1 // pred_check_branch
      %177 = sbr.rel (0) target = $region85
    $region84: #{tpu_custom_call.1} parent=1 // pred_region
      %178 = dma.done [#allocation15], 1024
    $region85: #{tpu_custom_call.1} parent=1 // pred_fallthru
      _
    // Predicated region
    $region86: #{tpu_custom_call.1} parent=1 // pred_check
      _
    $region87: #{tpu_custom_call.1} parent=1 // pred_check_branch
      %180 = sbr.rel (0) target = $region89
    $region88: #{tpu_custom_call.1} parent=1 // pred_region
      %181 = dma.done [#allocation18], 14336
    $region89: #{tpu_custom_call.1} parent=1 // pred_fallthru
      _
    // Predicated region
    $region90: #{tpu_custom_call.1} parent=1 // pred_check
      _
    $region91: #{tpu_custom_call.1} parent=1 // pred_check_branch
      %183 = sbr.rel (0) target = $region93
    $region92: #{tpu_custom_call.1} parent=1 // pred_region
      %184 = dma.done [#allocation18], 3456
    $region93: #{tpu_custom_call.1} parent=1 // pred_fallthru
      _
    %v186 = vld [vmem:[#allocation2] sm:$0xff]
    %v187 = vld [vmem:[#allocation5] sm:$0xff]
    %v188 = vld [vmem:[%s3] sm:$0xff]
    %v189 = vsub.f32 1.0, %v188
    %191 = vrot.lane.b32.xlu0 %v188, 124
    %v192 = vpop.permute.xlu0 %191
    %vm194 = vcmask 31744
    %v195 = vsel %vm194, %v192, 0.0
    %196 = vadd.xlane.f32.xlu0 %v195
    %v197 = vpop.xlane.xlu0 %196
    %v198 = vadd.f32 %v197, 1e-08
    %v199 = vrcp.pop %v198
    %v200 = vmul.f32 %v188, %v199
    %202 = vrot.lane.b32.xlu0 %v200, 124
    %v203 = vpop.permute.xlu0 %202
    %v205 = vadd.f32 %v189, %v203
    %206 = vrot.lane.b32.xlu0 %v188, 120
    %v207 = vpop.permute.xlu0 %206
    %v209 = vadd.f32 %v205, %v207
    %v210 = vsel %vm194, %v209, -inf
    %211 = vmax.xlane.f32.xlu0 %v210
    %v212 = vpop.xlane.xlu0 %211
    %v213 = vsub.f32 %v209, %v212
    %v214 = vmul.f32 %v213, 1.442695
    %v215 = vpow.pop %v214
    %v216 = vsel %vm194, %v215, 0.0
    %217 = vadd.xlane.f32.xlu0 %v216
    %v218 = vpop.xlane.xlu0 %217
    %v219 = vrcp.pop %v218
    %v220 = vmul.f32 %v215, %v219
    %v221 = vld [vmem:[#allocation7] sm:$0xff]
    %v222 = vld [vmem:[#allocation7 + $0x8] sm:$0xff]
    %v223 = vld [vmem:[#allocation7 + $0x10] sm:$0xff]
    %v224 = vld [vmem:[#allocation7 + $0x18] sm:$0xff]
    %v225 = vunpack.c.l.bf16 %v221
    %v226 = vunpack.c.h.bf16 %v221
    %v227 = vunpack.c.l.bf16 %v222
    %v228 = vunpack.c.h.bf16 %v222
    %v229 = vunpack.c.l.bf16 %v223
    %v230 = vunpack.c.h.bf16 %v223
    %v231 = vunpack.c.l.bf16 %v224
    %v232 = vunpack.c.h.bf16 %v224
    %234 = vset.pattern.permute.xlu0 0
    %235 = vperm.xlu0 %234, %v220
    %v236 = vpop.permute.xlu0 %235
    %v238 = vmul.f32 %v225, %v236
    %v239 = vmul.f32 %v226, %v236
    %240 = vset.pattern.permute.xlu0 1
    %241 = vperm.xlu0 %240, %v220
    %v242 = vpop.permute.xlu0 %241
    %v244 = vmul.f32 %v227, %v242
    %v245 = vmul.f32 %v228, %v242
    %v246 = vadd.f32 %v238, %v244
    %v247 = vadd.f32 %v239, %v245
    %248 = vset.pattern.permute.xlu0 2
    %249 = vperm.xlu0 %248, %v220
    %v250 = vpop.permute.xlu0 %249
    %v252 = vmul.f32 %v229, %v250
    %v253 = vmul.f32 %v230, %v250
    %v254 = vadd.f32 %v246, %v252
    %v255 = vadd.f32 %v247, %v253
    %256 = vset.pattern.permute.xlu0 3
    %257 = vperm.xlu0 %256, %v220
    %v258 = vpop.permute.xlu0 %257
    %v260 = vmul.f32 %v231, %v258
    %v261 = vmul.f32 %v232, %v258
    %v262 = vadd.f32 %v254, %v260
    %v263 = vadd.f32 %v255, %v261
    %v264 = vld [vmem:[#allocation8] sm:$0xff]
    %v265 = vld [vmem:[#allocation8 + $0x8] sm:$0xff]
    %v266 = vld [vmem:[#allocation8 + $0x10] sm:$0xff]
    %v267 = vld [vmem:[#allocation8 + $0x18] sm:$0xff]
    %v268 = vld [vmem:[#allocation8 + $0x20] sm:$0xff]
    %v269 = vld [vmem:[#allocation8 + $0x28] sm:$0xff]
    %v270 = vld [vmem:[#allocation8 + $0x30] sm:$0xff]
    %v271 = vld [vmem:[#allocation8 + $0x38] sm:$0xff]
    %v272 = vld [vmem:[#allocation8 + $0x40] sm:$0xff]
    %v273 = vld [vmem:[#allocation8 + $0x48] sm:$0xff]
    %v274 = vld [vmem:[#allocation8 + $0x50] sm:$0xff]
    %v275 = vld [vmem:[#allocation8 + $0x58] sm:$0xff]
    %v276 = vld [vmem:[#allocation8 + $0x60] sm:$0xff]
    %v277 = vld [vmem:[#allocation8 + $0x68] sm:$0xff]
    %v278 = vld [vmem:[#allocation8 + $0x70] sm:$0xff]
    %v279 = vld [vmem:[#allocation8 + $0x78] sm:$0xff]
    %v280 = vld [vmem:[#allocation8 + $0x80] sm:$0xff]
    %v281 = vld [vmem:[#allocation8 + $0x88] sm:$0xff]
    %v282 = vld [vmem:[#allocation8 + $0x90] sm:$0xff]
    %v283 = vld [vmem:[#allocation8 + $0x98] sm:$0xff]
    %v284 = vld [vmem:[#allocation8 + $0xa0] sm:$0xff]
    %v285 = vld [vmem:[#allocation8 + $0xa8] sm:$0xff]
    %v286 = vld [vmem:[#allocation8 + $0xb0] sm:$0xff]
    %v287 = vld [vmem:[#allocation8 + $0xb8] sm:$0xff]
    %v288 = vld [vmem:[#allocation8 + $0xc0] sm:$0xff]
    %v289 = vld [vmem:[#allocation8 + $0xc8] sm:$0xff]
    %v290 = vld [vmem:[#allocation8 + $0xd0] sm:$0xff]
    %v291 = vld [vmem:[#allocation8 + $0xd8] sm:$0xff]
    %v292 = vld [vmem:[#allocation8 + $0xe0] sm:$0xff]
    %v293 = vld [vmem:[#allocation8 + $0xe8] sm:$0xff]
    %v294 = vld [vmem:[#allocation8 + $0xf0] sm:$0xff]
    %v295 = vld [vmem:[#allocation8 + $0xf8] sm:$0xff]
    %v296 = vld [vmem:[#allocation8 + $0x100] sm:$0xff]
    %v297 = vld [vmem:[#allocation8 + $0x108] sm:$0xff]
    %v298 = vld [vmem:[#allocation8 + $0x110] sm:$0xff]
    %v299 = vld [vmem:[#allocation8 + $0x118] sm:$0xff]
    %v300 = vld [vmem:[#allocation8 + $0x120] sm:$0xff]
    %v301 = vld [vmem:[#allocation8 + $0x128] sm:$0xff]
    %v302 = vld [vmem:[#allocation8 + $0x130] sm:$0xff]
    %v303 = vld [vmem:[#allocation8 + $0x138] sm:$0xff]
    %v304 = vld [vmem:[#allocation8 + $0x140] sm:$0xff]
    %v305 = vld [vmem:[#allocation8 + $0x148] sm:$0xff]
    %v306 = vld [vmem:[#allocation8 + $0x150] sm:$0xff]
    %v307 = vld [vmem:[#allocation8 + $0x158] sm:$0xff]
    %v308 = vld [vmem:[#allocation8 + $0x160] sm:$0xff]
    %v309 = vld [vmem:[#allocation8 + $0x168] sm:$0xff]
    %v310 = vld [vmem:[#allocation8 + $0x170] sm:$0xff]
    %v311 = vld [vmem:[#allocation8 + $0x178] sm:$0xff]
    %v312 = vld [vmem:[#allocation8 + $0x180] sm:$0xff]
    %v313 = vld [vmem:[#allocation8 + $0x188] sm:$0xff]
    %v314 = vld [vmem:[#allocation8 + $0x190] sm:$0xff]
    %v315 = vld [vmem:[#allocation8 + $0x198] sm:$0xff]
    %v316 = vld [vmem:[#allocation8 + $0x1a0] sm:$0xff]
    %v317 = vld [vmem:[#allocation8 + $0x1a8] sm:$0xff]
    %v318 = vld [vmem:[#allocation8 + $0x1b0] sm:$0xff]
    %v319 = vld [vmem:[#allocation8 + $0x1b8] sm:$0xff]
    %v320 = vld [vmem:[#allocation8 + $0x1c0] sm:$0xff]
    %v321 = vld [vmem:[#allocation8 + $0x1c8] sm:$0xff]
    %v322 = vld [vmem:[#allocation8 + $0x1d0] sm:$0xff]
    %v323 = vld [vmem:[#allocation8 + $0x1d8] sm:$0xff]
    %v324 = vld [vmem:[#allocation8 + $0x1e0] sm:$0xff]
    %v325 = vld [vmem:[#allocation8 + $0x1e8] sm:$0xff]
    %v326 = vld [vmem:[#allocation8 + $0x1f0] sm:$0xff]
    %v327 = vld [vmem:[#allocation8 + $0x1f8] sm:$0xff]
    %v328 = vld [vmem:[#allocation8 + $0x200] sm:$0xff]
    %v329 = vld [vmem:[#allocation8 + $0x208] sm:$0xff]
    %v330 = vld [vmem:[#allocation8 + $0x210] sm:$0xff]
    %v331 = vld [vmem:[#allocation8 + $0x218] sm:$0xff]
    %v332 = vld [vmem:[#allocation8 + $0x220] sm:$0xff]
    %v333 = vld [vmem:[#allocation8 + $0x228] sm:$0xff]
    %v334 = vld [vmem:[#allocation8 + $0x230] sm:$0xff]
    %v335 = vld [vmem:[#allocation8 + $0x238] sm:$0xff]
    %v336 = vld [vmem:[#allocation8 + $0x240] sm:$0xff]
    %v337 = vld [vmem:[#allocation8 + $0x248] sm:$0xff]
    %v338 = vld [vmem:[#allocation8 + $0x250] sm:$0xff]
    %v339 = vld [vmem:[#allocation8 + $0x258] sm:$0xff]
    %v340 = vld [vmem:[#allocation8 + $0x260] sm:$0xff]
    %v341 = vld [vmem:[#allocation8 + $0x268] sm:$0xff]
    %v342 = vld [vmem:[#allocation8 + $0x270] sm:$0xff]
    %v343 = vld [vmem:[#allocation8 + $0x278] sm:$0xff]
    %v344 = vld [vmem:[#allocation8 + $0x280] sm:$0xff]
    %v345 = vld [vmem:[#allocation8 + $0x288] sm:$0xff]
    %v346 = vld [vmem:[#allocation8 + $0x290] sm:$0xff]
    %v347 = vld [vmem:[#allocation8 + $0x298] sm:$0xff]
    %v348 = vld [vmem:[#allocation8 + $0x2a0] sm:$0xff]
    %v349 = vld [vmem:[#allocation8 + $0x2a8] sm:$0xff]
    %v350 = vld [vmem:[#allocation8 + $0x2b0] sm:$0xff]
    %v351 = vld [vmem:[#allocation8 + $0x2b8] sm:$0xff]
    %v352 = vld [vmem:[#allocation8 + $0x2c0] sm:$0xff]
    %v353 = vld [vmem:[#allocation8 + $0x2c8] sm:$0xff]
    %v354 = vld [vmem:[#allocation8 + $0x2d0] sm:$0xff]
    %v355 = vld [vmem:[#allocation8 + $0x2d8] sm:$0xff]
    %v356 = vld [vmem:[#allocation8 + $0x2e0] sm:$0xff]
    %v357 = vld [vmem:[#allocation8 + $0x2e8] sm:$0xff]
    %v358 = vld [vmem:[#allocation8 + $0x2f0] sm:$0xff]
    %v359 = vld [vmem:[#allocation8 + $0x2f8] sm:$0xff]
    %v360 = vld [vmem:[#allocation8 + $0x300] sm:$0xff]
    %v361 = vld [vmem:[#allocation8 + $0x308] sm:$0xff]
    %v362 = vld [vmem:[#allocation8 + $0x310] sm:$0xff]
    %v363 = vld [vmem:[#allocation8 + $0x318] sm:$0xff]
    %v364 = vld [vmem:[#allocation8 + $0x320] sm:$0xff]
    %v365 = vld [vmem:[#allocation8 + $0x328] sm:$0xff]
    %v366 = vld [vmem:[#allocation8 + $0x330] sm:$0xff]
    %v367 = vld [vmem:[#allocation8 + $0x338] sm:$0xff]
    %v368 = vld [vmem:[#allocation8 + $0x340] sm:$0xff]
    %v369 = vld [vmem:[#allocation8 + $0x348] sm:$0xff]
    %v370 = vld [vmem:[#allocation8 + $0x350] sm:$0xff]
    %v371 = vld [vmem:[#allocation8 + $0x358] sm:$0xff]
    %v372 = vld [vmem:[#allocation8 + $0x360] sm:$0xff]
    %v373 = vld [vmem:[#allocation8 + $0x368] sm:$0xff]
    %v374 = vld [vmem:[#allocation8 + $0x370] sm:$0xff]
    %v375 = vld [vmem:[#allocation8 + $0x378] sm:$0xff]
    %v376 = vld [vmem:[#allocation8 + $0x380] sm:$0xff]
    %v377 = vld [vmem:[#allocation8 + $0x388] sm:$0xff]
    %v378 = vld [vmem:[#allocation8 + $0x390] sm:$0xff]
    %v379 = vld [vmem:[#allocation8 + $0x398] sm:$0xff]
    %v380 = vld [vmem:[#allocation8 + $0x3a0] sm:$0xff]
    %v381 = vld [vmem:[#allocation8 + $0x3a8] sm:$0xff]
    %v382 = vld [vmem:[#allocation8 + $0x3b0] sm:$0xff]
    %v383 = vld [vmem:[#allocation8 + $0x3b8] sm:$0xff]
    %v384 = vld [vmem:[#allocation8 + $0x3c0] sm:$0xff]
    %v385 = vld [vmem:[#allocation8 + $0x3c8] sm:$0xff]
    %v386 = vld [vmem:[#allocation8 + $0x3d0] sm:$0xff]
    %v387 = vld [vmem:[#allocation8 + $0x3d8] sm:$0xff]
    %v388 = vld [vmem:[#allocation8 + $0x3e0] sm:$0xff]
    %v389 = vld [vmem:[#allocation8 + $0x3e8] sm:$0xff]
    %v390 = vld [vmem:[#allocation8 + $0x3f0] sm:$0xff]
    %v391 = vld [vmem:[#allocation8 + $0x3f8] sm:$0xff]
    %v393 = vunpack.c.l.b16 %v187
    %v394 = vunpack.c.h.b16 %v187
    %v395 = vpack.c.b16 %v393, %v393
    %v396 = vpack.c.b16 %v394, %v394
    %v463 = vunpack.c.l.b16 %v328
    %v464 = vunpack.c.h.b16 %v328
    %v465 = vunpack.c.l.b16 %v329
    %v466 = vunpack.c.h.b16 %v329
    %v467 = vunpack.c.l.b16 %v330
    %v468 = vunpack.c.h.b16 %v330
    %v469 = vunpack.c.l.b16 %v331
    %v470 = vunpack.c.h.b16 %v331
    %v471 = vunpack.c.l.b16 %v332
    %v472 = vunpack.c.h.b16 %v332
    %v473 = vunpack.c.l.b16 %v333
    %v474 = vunpack.c.h.b16 %v333
    %v475 = vunpack.c.l.b16 %v334
    %v476 = vunpack.c.h.b16 %v334
    %v477 = vunpack.c.l.b16 %v335
    %v478 = vunpack.c.h.b16 %v335
    %v479 = vunpack.c.l.b16 %v336
    %v480 = vunpack.c.h.b16 %v336
    %v481 = vunpack.c.l.b16 %v337
    %v482 = vunpack.c.h.b16 %v337
    %v483 = vunpack.c.l.b16 %v338
    %v484 = vunpack.c.h.b16 %v338
    %v485 = vunpack.c.l.b16 %v339
    %v486 = vunpack.c.h.b16 %v339
    %v487 = vunpack.c.l.b16 %v340
    %v488 = vunpack.c.h.b16 %v340
    %v489 = vunpack.c.l.b16 %v341
    %v490 = vunpack.c.h.b16 %v341
    %v491 = vunpack.c.l.b16 %v342
    %v492 = vunpack.c.h.b16 %v342
    %v493 = vunpack.c.l.b16 %v343
    %v494 = vunpack.c.h.b16 %v343
    %v495 = vunpack.c.l.b16 %v344
    %v496 = vunpack.c.h.b16 %v344
    %v497 = vunpack.c.l.b16 %v345
    %v498 = vunpack.c.h.b16 %v345
    %v499 = vunpack.c.l.b16 %v346
    %v500 = vunpack.c.h.b16 %v346
    %v501 = vunpack.c.l.b16 %v347
    %v502 = vunpack.c.h.b16 %v347
    %v503 = vunpack.c.l.b16 %v348
    %v504 = vunpack.c.h.b16 %v348
    %v505 = vunpack.c.l.b16 %v349
    %v506 = vunpack.c.h.b16 %v349
    %v507 = vunpack.c.l.b16 %v350
    %v508 = vunpack.c.h.b16 %v350
    %v509 = vunpack.c.l.b16 %v351
    %v510 = vunpack.c.h.b16 %v351
    %v511 = vunpack.c.l.b16 %v352
    %v512 = vunpack.c.h.b16 %v352
    %v513 = vunpack.c.l.b16 %v353
    %v514 = vunpack.c.h.b16 %v353
    %v515 = vunpack.c.l.b16 %v354
    %v516 = vunpack.c.h.b16 %v354
    %v517 = vunpack.c.l.b16 %v355
    %v518 = vunpack.c.h.b16 %v355
    %v519 = vunpack.c.l.b16 %v356
    %v520 = vunpack.c.h.b16 %v356
    %v521 = vunpack.c.l.b16 %v357
    %v522 = vunpack.c.h.b16 %v357
    %v523 = vunpack.c.l.b16 %v358
    %v524 = vunpack.c.h.b16 %v358
    %v525 = vunpack.c.l.b16 %v359
    %v526 = vunpack.c.h.b16 %v359
    %v527 = vunpack.c.l.b16 %v360
    %v528 = vunpack.c.h.b16 %v360
    %v529 = vunpack.c.l.b16 %v361
    %v530 = vunpack.c.h.b16 %v361
    %v531 = vunpack.c.l.b16 %v362
    %v532 = vunpack.c.h.b16 %v362
    %v533 = vunpack.c.l.b16 %v363
    %v534 = vunpack.c.h.b16 %v363
    %v535 = vunpack.c.l.b16 %v364
    %v536 = vunpack.c.h.b16 %v364
    %v537 = vunpack.c.l.b16 %v365
    %v538 = vunpack.c.h.b16 %v365
    %v539 = vunpack.c.l.b16 %v366
    %v540 = vunpack.c.h.b16 %v366
    %v541 = vunpack.c.l.b16 %v367
    %v542 = vunpack.c.h.b16 %v367
    %v543 = vunpack.c.l.b16 %v368
    %v544 = vunpack.c.h.b16 %v368
    %v545 = vunpack.c.l.b16 %v369
    %v546 = vunpack.c.h.b16 %v369
    %v547 = vunpack.c.l.b16 %v370
    %v548 = vunpack.c.h.b16 %v370
    %v549 = vunpack.c.l.b16 %v371
    %v550 = vunpack.c.h.b16 %v371
    %v551 = vunpack.c.l.b16 %v372
    %v552 = vunpack.c.h.b16 %v372
    %v553 = vunpack.c.l.b16 %v373
    %v554 = vunpack.c.h.b16 %v373
    %v555 = vunpack.c.l.b16 %v374
    %v556 = vunpack.c.h.b16 %v374
    %v557 = vunpack.c.l.b16 %v375
    %v558 = vunpack.c.h.b16 %v375
    %v559 = vunpack.c.l.b16 %v376
    %v560 = vunpack.c.h.b16 %v376
    %v561 = vunpack.c.l.b16 %v377
    %v562 = vunpack.c.h.b16 %v377
    %v563 = vunpack.c.l.b16 %v378
    %v564 = vunpack.c.h.b16 %v378
    %v565 = vunpack.c.l.b16 %v379
    %v566 = vunpack.c.h.b16 %v379
    %v567 = vunpack.c.l.b16 %v380
    %v568 = vunpack.c.h.b16 %v380
    %v569 = vunpack.c.l.b16 %v381
    %v570 = vunpack.c.h.b16 %v381
    %v571 = vunpack.c.l.b16 %v382
    %v572 = vunpack.c.h.b16 %v382
    %v573 = vunpack.c.l.b16 %v383
    %v574 = vunpack.c.h.b16 %v383
    %v575 = vunpack.c.l.b16 %v384
    %v576 = vunpack.c.h.b16 %v384
    %v577 = vunpack.c.l.b16 %v385
    %v578 = vunpack.c.h.b16 %v385
    %v579 = vunpack.c.l.b16 %v386
    %v580 = vunpack.c.h.b16 %v386
    %v581 = vunpack.c.l.b16 %v387
    %v582 = vunpack.c.h.b16 %v387
    %v583 = vunpack.c.l.b16 %v388
    %v584 = vunpack.c.h.b16 %v388
    %v585 = vunpack.c.l.b16 %v389
    %v586 = vunpack.c.h.b16 %v389
    %v587 = vunpack.c.l.b16 %v390
    %v588 = vunpack.c.h.b16 %v390
    %v589 = vunpack.c.l.b16 %v391
    %v590 = vunpack.c.h.b16 %v391
    %v591 = vpack.c.b16 %v467, %v463
    %v592 = vpack.c.b16 %v468, %v464
    %v593 = vpack.c.b16 %v469, %v465
    %v594 = vpack.c.b16 %v470, %v466
    %v595 = vpack.c.b16 %v475, %v471
    %v596 = vpack.c.b16 %v476, %v472
    %v597 = vpack.c.b16 %v477, %v473
    %v598 = vpack.c.b16 %v478, %v474
    %v599 = vpack.c.b16 %v483, %v479
    %v600 = vpack.c.b16 %v484, %v480
    %v601 = vpack.c.b16 %v485, %v481
    %v602 = vpack.c.b16 %v486, %v482
    %v603 = vpack.c.b16 %v491, %v487
    %v604 = vpack.c.b16 %v492, %v488
    %v605 = vpack.c.b16 %v493, %v489
    %v606 = vpack.c.b16 %v494, %v490
    %v607 = vpack.c.b16 %v499, %v495
    %v608 = vpack.c.b16 %v500, %v496
    %v609 = vpack.c.b16 %v501, %v497
    %v610 = vpack.c.b16 %v502, %v498
    %v611 = vpack.c.b16 %v507, %v503
    %v612 = vpack.c.b16 %v508, %v504
    %v613 = vpack.c.b16 %v509, %v505
    %v614 = vpack.c.b16 %v510, %v506
    %v615 = vpack.c.b16 %v515, %v511
    %v616 = vpack.c.b16 %v516, %v512
    %v617 = vpack.c.b16 %v517, %v513
    %v618 = vpack.c.b16 %v518, %v514
    %v619 = vpack.c.b16 %v523, %v519
    %v620 = vpack.c.b16 %v524, %v520
    %v621 = vpack.c.b16 %v525, %v521
    %v622 = vpack.c.b16 %v526, %v522
    %v623 = vpack.c.b16 %v531, %v527
    %v624 = vpack.c.b16 %v532, %v528
    %v625 = vpack.c.b16 %v533, %v529
    %v626 = vpack.c.b16 %v534, %v530
    %v627 = vpack.c.b16 %v539, %v535
    %v628 = vpack.c.b16 %v540, %v536
    %v629 = vpack.c.b16 %v541, %v537
    %v630 = vpack.c.b16 %v542, %v538
    %v631 = vpack.c.b16 %v547, %v543
    %v632 = vpack.c.b16 %v548, %v544
    %v633 = vpack.c.b16 %v549, %v545
    %v634 = vpack.c.b16 %v550, %v546
    %v635 = vpack.c.b16 %v555, %v551
    %v636 = vpack.c.b16 %v556, %v552
    %v637 = vpack.c.b16 %v557, %v553
    %v638 = vpack.c.b16 %v558, %v554
    %v639 = vpack.c.b16 %v563, %v559
    %v640 = vpack.c.b16 %v564, %v560
    %v641 = vpack.c.b16 %v565, %v561
    %v642 = vpack.c.b16 %v566, %v562
    %v643 = vpack.c.b16 %v571, %v567
    %v644 = vpack.c.b16 %v572, %v568
    %v645 = vpack.c.b16 %v573, %v569
    %v646 = vpack.c.b16 %v574, %v570
    %v647 = vpack.c.b16 %v579, %v575
    %v648 = vpack.c.b16 %v580, %v576
    %v649 = vpack.c.b16 %v581, %v577
    %v650 = vpack.c.b16 %v582, %v578
    %v651 = vpack.c.b16 %v587, %v583
    %v652 = vpack.c.b16 %v588, %v584
    %v653 = vpack.c.b16 %v589, %v585
    %v654 = vpack.c.b16 %v590, %v586
    %719 = vmatprep.subr.bf16.mxu0 %v592
    %720 = vmatpush1.bf16.msra.mxu0 %v591
    %721 = vmatprep.subr.bf16.mxu0 %v596
    %722 = vmatpush1.bf16.msra.mxu0 %v595
    %723 = vmatprep.subr.bf16.mxu0 %v600
    %724 = vmatpush1.bf16.msra.mxu0 %v599
    %725 = vmatprep.subr.bf16.mxu0 %v604
    %726 = vmatpush1.bf16.msra.mxu0 %v603
    %727 = vmatprep.subr.bf16.mxu0 %v608
    %728 = vmatpush1.bf16.msra.mxu0 %v607
    %729 = vmatprep.subr.bf16.mxu0 %v612
    %730 = vmatpush1.bf16.msra.mxu0 %v611
    %731 = vmatprep.subr.bf16.mxu0 %v616
    %732 = vmatpush1.bf16.msra.mxu0 %v615
    %733 = vmatprep.subr.bf16.mxu0 %v620
    %734 = vmatpush1.bf16.msra.mxu0 %v619
    %735 = vmatprep.subr.bf16.mxu0 %v624
    %736 = vmatpush1.bf16.msra.mxu0 %v623
    %737 = vmatprep.subr.bf16.mxu0 %v628
    %738 = vmatpush1.bf16.msra.mxu0 %v627
    %739 = vmatprep.subr.bf16.mxu0 %v632
    %740 = vmatpush1.bf16.msra.mxu0 %v631
    %741 = vmatprep.subr.bf16.mxu0 %v636
    %742 = vmatpush1.bf16.msra.mxu0 %v635
    %743 = vmatprep.subr.bf16.mxu0 %v640
    %744 = vmatpush1.bf16.msra.mxu0 %v639
    %745 = vmatprep.subr.bf16.mxu0 %v644
    %746 = vmatpush1.bf16.msra.mxu0 %v643
    %747 = vmatprep.subr.bf16.mxu0 %v648
    %748 = vmatpush1.bf16.msra.mxu0 %v647
    %749 = vmatprep.subr.bf16.mxu0 %v652
    %750 = vmatpush1.bf16.msra.mxu0 %v651
    %751 = vmatprep.mubr.bf16.mxu0 %v396
    %752 = vmatmul.mubr.bf16.gmra.mrb[0].mxu0 %v395
    %v753 = vpop.f32.mrb[0].mxu0
    %v754 = vadd.f32 0.0, %v753
    %v755 = vpop.f32.mrb[0].mxu0
    %v756 = vadd.f32 0.0, %v755
    %v757 = vpop.f32.mrb[0].mxu0
    %v758 = vpop.f32.mrb[0].mxu0
    %759 = vdwg.mxu0
    %760 = vmatprep.subr.bf16.mxu0 %v594
    %761 = vmatpush1.bf16.msra.mxu0 %v593
    %762 = vmatprep.subr.bf16.mxu0 %v598
    %763 = vmatpush1.bf16.msra.mxu0 %v597
    %764 = vmatprep.subr.bf16.mxu0 %v602
    %765 = vmatpush1.bf16.msra.mxu0 %v601
    %766 = vmatprep.subr.bf16.mxu0 %v606
    %767 = vmatpush1.bf16.msra.mxu0 %v605
    %768 = vmatprep.subr.bf16.mxu0 %v610
    %769 = vmatpush1.bf16.msra.mxu0 %v609
    %770 = vmatprep.subr.bf16.mxu0 %v614
    %771 = vmatpush1.bf16.msra.mxu0 %v613
    %772 = vmatprep.subr.bf16.mxu0 %v618
    %773 = vmatpush1.bf16.msra.mxu0 %v617
    %774 = vmatprep.subr.bf16.mxu0 %v622
    %775 = vmatpush1.bf16.msra.mxu0 %v621
    %776 = vmatprep.subr.bf16.mxu0 %v626
    %777 = vmatpush1.bf16.msra.mxu0 %v625
    %778 = vmatprep.subr.bf16.mxu0 %v630
    %779 = vmatpush1.bf16.msra.mxu0 %v629
    %780 = vmatprep.subr.bf16.mxu0 %v634
    %781 = vmatpush1.bf16.msra.mxu0 %v633
    %782 = vmatprep.subr.bf16.mxu0 %v638
    %783 = vmatpush1.bf16.msra.mxu0 %v637
    %784 = vmatprep.subr.bf16.mxu0 %v642
    %785 = vmatpush1.bf16.msra.mxu0 %v641
    %786 = vmatprep.subr.bf16.mxu0 %v646
    %787 = vmatpush1.bf16.msra.mxu0 %v645
    %788 = vmatprep.subr.bf16.mxu0 %v650
    %789 = vmatpush1.bf16.msra.mxu0 %v649
    %790 = vmatprep.subr.bf16.mxu0 %v654
    %791 = vmatpush1.bf16.msra.mxu0 %v653
    %792 = vmatprep.mubr.bf16.mxu0 %v396
    %793 = vmatmul.mubr.bf16.gmra.mrb[0].mxu0 %v395
    %v794 = vpop.f32.mrb[0].mxu0
    %v795 = vadd.f32 0.0, %v794
    %v796 = vpop.f32.mrb[0].mxu0
    %v797 = vadd.f32 0.0, %v796
    %v798 = vpop.f32.mrb[0].mxu0
    %v799 = vpop.f32.mrb[0].mxu0
    %800 = vdwg.mxu0
    %v802 = vunpack.c.l.b16 %v186
    %v803 = vunpack.c.h.b16 %v186
    %v804 = vpack.c.b16 %v802, %v802
    %v805 = vpack.c.b16 %v803, %v803
    %v872 = vunpack.c.l.b16 %v264
    %v873 = vunpack.c.h.b16 %v264
    %v874 = vunpack.c.l.b16 %v265
    %v875 = vunpack.c.h.b16 %v265
    %v876 = vunpack.c.l.b16 %v266
    %v877 = vunpack.c.h.b16 %v266
    %v878 = vunpack.c.l.b16 %v267
    %v879 = vunpack.c.h.b16 %v267
    %v880 = vunpack.c.l.b16 %v268
    %v881 = vunpack.c.h.b16 %v268
    %v882 = vunpack.c.l.b16 %v269
    %v883 = vunpack.c.h.b16 %v269
    %v884 = vunpack.c.l.b16 %v270
    %v885 = vunpack.c.h.b16 %v270
    %v886 = vunpack.c.l.b16 %v271
    %v887 = vunpack.c.h.b16 %v271
    %v888 = vunpack.c.l.b16 %v272
    %v889 = vunpack.c.h.b16 %v272
    %v890 = vunpack.c.l.b16 %v273
    %v891 = vunpack.c.h.b16 %v273
    %v892 = vunpack.c.l.b16 %v274
    %v893 = vunpack.c.h.b16 %v274
    %v894 = vunpack.c.l.b16 %v275
    %v895 = vunpack.c.h.b16 %v275
    %v896 = vunpack.c.l.b16 %v276
    %v897 = vunpack.c.h.b16 %v276
    %v898 = vunpack.c.l.b16 %v277
    %v899 = vunpack.c.h.b16 %v277
    %v900 = vunpack.c.l.b16 %v278
    %v901 = vunpack.c.h.b16 %v278
    %v902 = vunpack.c.l.b16 %v279
    %v903 = vunpack.c.h.b16 %v279
    %v904 = vunpack.c.l.b16 %v280
    %v905 = vunpack.c.h.b16 %v280
    %v906 = vunpack.c.l.b16 %v281
    %v907 = vunpack.c.h.b16 %v281
    %v908 = vunpack.c.l.b16 %v282
    %v909 = vunpack.c.h.b16 %v282
    %v910 = vunpack.c.l.b16 %v283
    %v911 = vunpack.c.h.b16 %v283
    %v912 = vunpack.c.l.b16 %v284
    %v913 = vunpack.c.h.b16 %v284
    %v914 = vunpack.c.l.b16 %v285
    %v915 = vunpack.c.h.b16 %v285
    %v916 = vunpack.c.l.b16 %v286
    %v917 = vunpack.c.h.b16 %v286
    %v918 = vunpack.c.l.b16 %v287
    %v919 = vunpack.c.h.b16 %v287
    %v920 = vunpack.c.l.b16 %v288
    %v921 = vunpack.c.h.b16 %v288
    %v922 = vunpack.c.l.b16 %v289
    %v923 = vunpack.c.h.b16 %v289
    %v924 = vunpack.c.l.b16 %v290
    %v925 = vunpack.c.h.b16 %v290
    %v926 = vunpack.c.l.b16 %v291
    %v927 = vunpack.c.h.b16 %v291
    %v928 = vunpack.c.l.b16 %v292
    %v929 = vunpack.c.h.b16 %v292
    %v930 = vunpack.c.l.b16 %v293
    %v931 = vunpack.c.h.b16 %v293
    %v932 = vunpack.c.l.b16 %v294
    %v933 = vunpack.c.h.b16 %v294
    %v934 = vunpack.c.l.b16 %v295
    %v935 = vunpack.c.h.b16 %v295
    %v936 = vunpack.c.l.b16 %v296
    %v937 = vunpack.c.h.b16 %v296
    %v938 = vunpack.c.l.b16 %v297
    %v939 = vunpack.c.h.b16 %v297
    %v940 = vunpack.c.l.b16 %v298
    %v941 = vunpack.c.h.b16 %v298
    %v942 = vunpack.c.l.b16 %v299
    %v943 = vunpack.c.h.b16 %v299
    %v944 = vunpack.c.l.b16 %v300
    %v945 = vunpack.c.h.b16 %v300
    %v946 = vunpack.c.l.b16 %v301
    %v947 = vunpack.c.h.b16 %v301
    %v948 = vunpack.c.l.b16 %v302
    %v949 = vunpack.c.h.b16 %v302
    %v950 = vunpack.c.l.b16 %v303
    %v951 = vunpack.c.h.b16 %v303
    %v952 = vunpack.c.l.b16 %v304
    %v953 = vunpack.c.h.b16 %v304
    %v954 = vunpack.c.l.b16 %v305
    %v955 = vunpack.c.h.b16 %v305
    %v956 = vunpack.c.l.b16 %v306
    %v957 = vunpack.c.h.b16 %v306
    %v958 = vunpack.c.l.b16 %v307
    %v959 = vunpack.c.h.b16 %v307
    %v960 = vunpack.c.l.b16 %v308
    %v961 = vunpack.c.h.b16 %v308
    %v962 = vunpack.c.l.b16 %v309
    %v963 = vunpack.c.h.b16 %v309
    %v964 = vunpack.c.l.b16 %v310
    %v965 = vunpack.c.h.b16 %v310
    %v966 = vunpack.c.l.b16 %v311
    %v967 = vunpack.c.h.b16 %v311
    %v968 = vunpack.c.l.b16 %v312
    %v969 = vunpack.c.h.b16 %v312
    %v970 = vunpack.c.l.b16 %v313
    %v971 = vunpack.c.h.b16 %v313
    %v972 = vunpack.c.l.b16 %v314
    %v973 = vunpack.c.h.b16 %v314
    %v974 = vunpack.c.l.b16 %v315
    %v975 = vunpack.c.h.b16 %v315
    %v976 = vunpack.c.l.b16 %v316
    %v977 = vunpack.c.h.b16 %v316
    %v978 = vunpack.c.l.b16 %v317
    %v979 = vunpack.c.h.b16 %v317
    %v980 = vunpack.c.l.b16 %v318
    %v981 = vunpack.c.h.b16 %v318
    %v982 = vunpack.c.l.b16 %v319
    %v983 = vunpack.c.h.b16 %v319
    %v984 = vunpack.c.l.b16 %v320
    %v985 = vunpack.c.h.b16 %v320
    %v986 = vunpack.c.l.b16 %v321
    %v987 = vunpack.c.h.b16 %v321
    %v988 = vunpack.c.l.b16 %v322
    %v989 = vunpack.c.h.b16 %v322
    %v990 = vunpack.c.l.b16 %v323
    %v991 = vunpack.c.h.b16 %v323
    %v992 = vunpack.c.l.b16 %v324
    %v993 = vunpack.c.h.b16 %v324
    %v994 = vunpack.c.l.b16 %v325
    %v995 = vunpack.c.h.b16 %v325
    %v996 = vunpack.c.l.b16 %v326
    %v997 = vunpack.c.h.b16 %v326
    %v998 = vunpack.c.l.b16 %v327
    %v999 = vunpack.c.h.b16 %v327
    %v1000 = vpack.c.b16 %v876, %v872
    %v1001 = vpack.c.b16 %v877, %v873
    %v1002 = vpack.c.b16 %v878, %v874
    %v1003 = vpack.c.b16 %v879, %v875
    %v1004 = vpack.c.b16 %v884, %v880
    %v1005 = vpack.c.b16 %v885, %v881
    %v1006 = vpack.c.b16 %v886, %v882
    %v1007 = vpack.c.b16 %v887, %v883
    %v1008 = vpack.c.b16 %v892, %v888
    %v1009 = vpack.c.b16 %v893, %v889
    %v1010 = vpack.c.b16 %v894, %v890
    %v1011 = vpack.c.b16 %v895, %v891
    %v1012 = vpack.c.b16 %v900, %v896
    %v1013 = vpack.c.b16 %v901, %v897
    %v1014 = vpack.c.b16 %v902, %v898
    %v1015 = vpack.c.b16 %v903, %v899
    %v1016 = vpack.c.b16 %v908, %v904
    %v1017 = vpack.c.b16 %v909, %v905
    %v1018 = vpack.c.b16 %v910, %v906
    %v1019 = vpack.c.b16 %v911, %v907
    %v1020 = vpack.c.b16 %v916, %v912
    %v1021 = vpack.c.b16 %v917, %v913
    %v1022 = vpack.c.b16 %v918, %v914
    %v1023 = vpack.c.b16 %v919, %v915
    %v1024 = vpack.c.b16 %v924, %v920
    %v1025 = vpack.c.b16 %v925, %v921
    %v1026 = vpack.c.b16 %v926, %v922
    %v1027 = vpack.c.b16 %v927, %v923
    %v1028 = vpack.c.b16 %v932, %v928
    %v1029 = vpack.c.b16 %v933, %v929
    %v1030 = vpack.c.b16 %v934, %v930
    %v1031 = vpack.c.b16 %v935, %v931
    %v1032 = vpack.c.b16 %v940, %v936
    %v1033 = vpack.c.b16 %v941, %v937
    %v1034 = vpack.c.b16 %v942, %v938
    %v1035 = vpack.c.b16 %v943, %v939
    %v1036 = vpack.c.b16 %v948, %v944
    %v1037 = vpack.c.b16 %v949, %v945
    %v1038 = vpack.c.b16 %v950, %v946
    %v1039 = vpack.c.b16 %v951, %v947
    %v1040 = vpack.c.b16 %v956, %v952
    %v1041 = vpack.c.b16 %v957, %v953
    %v1042 = vpack.c.b16 %v958, %v954
    %v1043 = vpack.c.b16 %v959, %v955
    %v1044 = vpack.c.b16 %v964, %v960
    %v1045 = vpack.c.b16 %v965, %v961
    %v1046 = vpack.c.b16 %v966, %v962
    %v1047 = vpack.c.b16 %v967, %v963
    %v1048 = vpack.c.b16 %v972, %v968
    %v1049 = vpack.c.b16 %v973, %v969
    %v1050 = vpack.c.b16 %v974, %v970
    %v1051 = vpack.c.b16 %v975, %v971
    %v1052 = vpack.c.b16 %v980, %v976
    %v1053 = vpack.c.b16 %v981, %v977
    %v1054 = vpack.c.b16 %v982, %v978
    %v1055 = vpack.c.b16 %v983, %v979
    %v1056 = vpack.c.b16 %v988, %v984
    %v1057 = vpack.c.b16 %v989, %v985
    %v1058 = vpack.c.b16 %v990, %v986
    %v1059 = vpack.c.b16 %v991, %v987
    %v1060 = vpack.c.b16 %v996, %v992
    %v1061 = vpack.c.b16 %v997, %v993
    %v1062 = vpack.c.b16 %v998, %v994
    %v1063 = vpack.c.b16 %v999, %v995
    %1128 = vmatprep.subr.bf16.mxu0 %v1001
    %1129 = vmatpush1.bf16.msra.mxu0 %v1000
    %1130 = vmatprep.subr.bf16.mxu0 %v1005
    %1131 = vmatpush1.bf16.msra.mxu0 %v1004
    %1132 = vmatprep.subr.bf16.mxu0 %v1009
    %1133 = vmatpush1.bf16.msra.mxu0 %v1008
    %1134 = vmatprep.subr.bf16.mxu0 %v1013
    %1135 = vmatpush1.bf16.msra.mxu0 %v1012
    %1136 = vmatprep.subr.bf16.mxu0 %v1017
    %1137 = vmatpush1.bf16.msra.mxu0 %v1016
    %1138 = vmatprep.subr.bf16.mxu0 %v1021
    %1139 = vmatpush1.bf16.msra.mxu0 %v1020
    %1140 = vmatprep.subr.bf16.mxu0 %v1025
    %1141 = vmatpush1.bf16.msra.mxu0 %v1024
    %1142 = vmatprep.subr.bf16.mxu0 %v1029
    %1143 = vmatpush1.bf16.msra.mxu0 %v1028
    %1144 = vmatprep.subr.bf16.mxu0 %v1033
    %1145 = vmatpush1.bf16.msra.mxu0 %v1032
    %1146 = vmatprep.subr.bf16.mxu0 %v1037
    %1147 = vmatpush1.bf16.msra.mxu0 %v1036
    %1148 = vmatprep.subr.bf16.mxu0 %v1041
    %1149 = vmatpush1.bf16.msra.mxu0 %v1040
    %1150 = vmatprep.subr.bf16.mxu0 %v1045
    %1151 = vmatpush1.bf16.msra.mxu0 %v1044
    %1152 = vmatprep.subr.bf16.mxu0 %v1049
    %1153 = vmatpush1.bf16.msra.mxu0 %v1048
    %1154 = vmatprep.subr.bf16.mxu0 %v1053
    %1155 = vmatpush1.bf16.msra.mxu0 %v1052
    %1156 = vmatprep.subr.bf16.mxu0 %v1057
    %1157 = vmatpush1.bf16.msra.mxu0 %v1056
    %1158 = vmatprep.subr.bf16.mxu0 %v1061
    %1159 = vmatpush1.bf16.msra.mxu0 %v1060
    %1160 = vmatprep.mubr.bf16.mxu0 %v805
    %1161 = vmatmul.mubr.bf16.gmra.mrb[0].mxu0 %v804
    %v1162 = vpop.f32.mrb[0].mxu0
    %v1163 = vadd.f32 %v754, %v1162
    %v1164 = vpop.f32.mrb[0].mxu0
    %v1165 = vadd.f32 %v756, %v1164
    %v1166 = vpop.f32.mrb[0].mxu0
    %v1167 = vpop.f32.mrb[0].mxu0
    %1168 = vdwg.mxu0
    %1169 = vmatprep.subr.bf16.mxu0 %v1003
    %1170 = vmatpush1.bf16.msra.mxu0 %v1002
    %1171 = vmatprep.subr.bf16.mxu0 %v1007
    %1172 = vmatpush1.bf16.msra.mxu0 %v1006
    %1173 = vmatprep.subr.bf16.mxu0 %v1011
    %1174 = vmatpush1.bf16.msra.mxu0 %v1010
    %1175 = vmatprep.subr.bf16.mxu0 %v1015
    %1176 = vmatpush1.bf16.msra.mxu0 %v1014
    %1177 = vmatprep.subr.bf16.mxu0 %v1019
    %1178 = vmatpush1.bf16.msra.mxu0 %v1018
    %1179 = vmatprep.subr.bf16.mxu0 %v1023
    %1180 = vmatpush1.bf16.msra.mxu0 %v1022
    %1181 = vmatprep.subr.bf16.mxu0 %v1027
    %1182 = vmatpush1.bf16.msra.mxu0 %v1026
    %1183 = vmatprep.subr.bf16.mxu0 %v1031
    %1184 = vmatpush1.bf16.msra.mxu0 %v1030
    %1185 = vmatprep.subr.bf16.mxu0 %v1035
    %1186 = vmatpush1.bf16.msra.mxu0 %v1034
    %1187 = vmatprep.subr.bf16.mxu0 %v1039
    %1188 = vmatpush1.bf16.msra.mxu0 %v1038
    %1189 = vmatprep.subr.bf16.mxu0 %v1043
    %1190 = vmatpush1.bf16.msra.mxu0 %v1042
    %1191 = vmatprep.subr.bf16.mxu0 %v1047
    %1192 = vmatpush1.bf16.msra.mxu0 %v1046
    %1193 = vmatprep.subr.bf16.mxu0 %v1051
    %1194 = vmatpush1.bf16.msra.mxu0 %v1050
    %1195 = vmatprep.subr.bf16.mxu0 %v1055
    %1196 = vmatpush1.bf16.msra.mxu0 %v1054
    %1197 = vmatprep.subr.bf16.mxu0 %v1059
    %1198 = vmatpush1.bf16.msra.mxu0 %v1058
    %1199 = vmatprep.subr.bf16.mxu0 %v1063
    %1200 = vmatpush1.bf16.msra.mxu0 %v1062
    %1201 = vmatprep.mubr.bf16.mxu0 %v805
    %1202 = vmatmul.mubr.bf16.gmra.mrb[0].mxu0 %v804
    %v1203 = vpop.f32.mrb[0].mxu0
    %v1204 = vadd.f32 %v795, %v1203
    %v1205 = vpop.f32.mrb[0].mxu0
    %v1206 = vadd.f32 %v797, %v1205
    %v1207 = vpop.f32.mrb[0].mxu0
    %v1208 = vpop.f32.mrb[0].mxu0
    %1209 = vdwg.mxu0
    %v1210 = vld [vmem:[#allocation8 + $0x400] sm:$0xff]
    %v1211 = vld [vmem:[#allocation8 + $0x408] sm:$0xff]
    %v1212 = vld [vmem:[#allocation8 + $0x410] sm:$0xff]
    %v1213 = vld [vmem:[#allocation8 + $0x418] sm:$0xff]
    %v1214 = vld [vmem:[#allocation8 + $0x420] sm:$0xff]
    %v1215 = vld [vmem:[#allocation8 + $0x428] sm:$0xff]
    %v1216 = vld [vmem:[#allocation8 + $0x430] sm:$0xff]
    %v1217 = vld [vmem:[#allocation8 + $0x438] sm:$0xff]
    %v1218 = vld [vmem:[#allocation8 + $0x440] sm:$0xff]
    %v1219 = vld [vmem:[#allocation8 + $0x448] sm:$0xff]
    %v1220 = vld [vmem:[#allocation8 + $0x450] sm:$0xff]
    %v1221 = vld [vmem:[#allocation8 + $0x458] sm:$0xff]
    %v1222 = vld [vmem:[#allocation8 + $0x460] sm:$0xff]
    %v1223 = vld [vmem:[#allocation8 + $0x468] sm:$0xff]
    %v1224 = vld [vmem:[#allocation8 + $0x470] sm:$0xff]
    %v1225 = vld [vmem:[#allocation8 + $0x478] sm:$0xff]
    %v1226 = vld [vmem:[#allocation8 + $0x480] sm:$0xff]
    %v1227 = vld [vmem:[#allocation8 + $0x488] sm:$0xff]
    %v1228 = vld [vmem:[#allocation8 + $0x490] sm:$0xff]
    %v1229 = vld [vmem:[#allocation8 + $0x498] sm:$0xff]
    %v1230 = vld [vmem:[#allocation8 + $0x4a0] sm:$0xff]
    %v1231 = vld [vmem:[#allocation8 + $0x4a8] sm:$0xff]
    %v1232 = vld [vmem:[#allocation8 + $0x4b0] sm:$0xff]
    %v1233 = vld [vmem:[#allocation8 + $0x4b8] sm:$0xff]
    %v1234 = vld [vmem:[#allocation8 + $0x4c0] sm:$0xff]
    %v1235 = vld [vmem:[#allocation8 + $0x4c8] sm:$0xff]
    %v1236 = vld [vmem:[#allocation8 + $0x4d0] sm:$0xff]
    %v1237 = vld [vmem:[#allocation8 + $0x4d8] sm:$0xff]
    %v1238 = vld [vmem:[#allocation8 + $0x4e0] sm:$0xff]
    %v1239 = vld [vmem:[#allocation8 + $0x4e8] sm:$0xff]
    %v1240 = vld [vmem:[#allocation8 + $0x4f0] sm:$0xff]
    %v1241 = vld [vmem:[#allocation8 + $0x4f8] sm:$0xff]
    %v1242 = vld [vmem:[#allocation8 + $0x500] sm:$0xff]
    %v1243 = vld [vmem:[#allocation8 + $0x508] sm:$0xff]
    %v1244 = vld [vmem:[#allocation8 + $0x510] sm:$0xff]
    %v1245 = vld [vmem:[#allocation8 + $0x518] sm:$0xff]
    %v1246 = vld [vmem:[#allocation8 + $0x520] sm:$0xff]
    %v1247 = vld [vmem:[#allocation8 + $0x528] sm:$0xff]
    %v1248 = vld [vmem:[#allocation8 + $0x530] sm:$0xff]
    %v1249 = vld [vmem:[#allocation8 + $0x538] sm:$0xff]
    %v1250 = vld [vmem:[#allocation8 + $0x540] sm:$0xff]
    %v1251 = vld [vmem:[#allocation8 + $0x548] sm:$0xff]
    %v1252 = vld [vmem:[#allocation8 + $0x550] sm:$0xff]
    %v1253 = vld [vmem:[#allocation8 + $0x558] sm:$0xff]
    %v1254 = vld [vmem:[#allocation8 + $0x560] sm:$0xff]
    %v1255 = vld [vmem:[#allocation8 + $0x568] sm:$0xff]
    %v1256 = vld [vmem:[#allocation8 + $0x570] sm:$0xff]
    %v1257 = vld [vmem:[#allocation8 + $0x578] sm:$0xff]
    %v1258 = vld [vmem:[#allocation8 + $0x580] sm:$0xff]
    %v1259 = vld [vmem:[#allocation8 + $0x588] sm:$0xff]
    %v1260 = vld [vmem:[#allocation8 + $0x590] sm:$0xff]
    %v1261 = vld [vmem:[#allocation8 + $0x598] sm:$0xff]
    %v1262 = vld [vmem:[#allocation8 + $0x5a0] sm:$0xff]
    %v1263 = vld [vmem:[#allocation8 + $0x5a8] sm:$0xff]
    %v1264 = vld [vmem:[#allocation8 + $0x5b0] sm:$0xff]
    %v1265 = vld [vmem:[#allocation8 + $0x5b8] sm:$0xff]
    %v1266 = vld [vmem:[#allocation8 + $0x5c0] sm:$0xff]
    %v1267 = vld [vmem:[#allocation8 + $0x5c8] sm:$0xff]
    %v1268 = vld [vmem:[#allocation8 + $0x5d0] sm:$0xff]
    %v1269 = vld [vmem:[#allocation8 + $0x5d8] sm:$0xff]
    %v1270 = vld [vmem:[#allocation8 + $0x5e0] sm:$0xff]
    %v1271 = vld [vmem:[#allocation8 + $0x5e8] sm:$0xff]
    %v1272 = vld [vmem:[#allocation8 + $0x5f0] sm:$0xff]
    %v1273 = vld [vmem:[#allocation8 + $0x5f8] sm:$0xff]
    %v1274 = vpack.c.bf16 %v262, %v262
    %v1275 = vpack.c.bf16 %v263, %v263
    %v1340 = vunpack.c.l.b16 %v1210
    %v1341 = vunpack.c.h.b16 %v1210
    %v1342 = vunpack.c.l.b16 %v1211
    %v1343 = vunpack.c.h.b16 %v1211
    %v1344 = vunpack.c.l.b16 %v1212
    %v1345 = vunpack.c.h.b16 %v1212
    %v1346 = vunpack.c.l.b16 %v1213
    %v1347 = vunpack.c.h.b16 %v1213
    %v1348 = vunpack.c.l.b16 %v1214
    %v1349 = vunpack.c.h.b16 %v1214
    %v1350 = vunpack.c.l.b16 %v1215
    %v1351 = vunpack.c.h.b16 %v1215
    %v1352 = vunpack.c.l.b16 %v1216
    %v1353 = vunpack.c.h.b16 %v1216
    %v1354 = vunpack.c.l.b16 %v1217
    %v1355 = vunpack.c.h.b16 %v1217
    %v1356 = vunpack.c.l.b16 %v1218
    %v1357 = vunpack.c.h.b16 %v1218
    %v1358 = vunpack.c.l.b16 %v1219
    %v1359 = vunpack.c.h.b16 %v1219
    %v1360 = vunpack.c.l.b16 %v1220
    %v1361 = vunpack.c.h.b16 %v1220
    %v1362 = vunpack.c.l.b16 %v1221
    %v1363 = vunpack.c.h.b16 %v1221
    %v1364 = vunpack.c.l.b16 %v1222
    %v1365 = vunpack.c.h.b16 %v1222
    %v1366 = vunpack.c.l.b16 %v1223
    %v1367 = vunpack.c.h.b16 %v1223
    %v1368 = vunpack.c.l.b16 %v1224
    %v1369 = vunpack.c.h.b16 %v1224
    %v1370 = vunpack.c.l.b16 %v1225
    %v1371 = vunpack.c.h.b16 %v1225
    %v1372 = vunpack.c.l.b16 %v1226
    %v1373 = vunpack.c.h.b16 %v1226
    %v1374 = vunpack.c.l.b16 %v1227
    %v1375 = vunpack.c.h.b16 %v1227
    %v1376 = vunpack.c.l.b16 %v1228
    %v1377 = vunpack.c.h.b16 %v1228
    %v1378 = vunpack.c.l.b16 %v1229
    %v1379 = vunpack.c.h.b16 %v1229
    %v1380 = vunpack.c.l.b16 %v1230
    %v1381 = vunpack.c.h.b16 %v1230
    %v1382 = vunpack.c.l.b16 %v1231
    %v1383 = vunpack.c.h.b16 %v1231
    %v1384 = vunpack.c.l.b16 %v1232
    %v1385 = vunpack.c.h.b16 %v1232
    %v1386 = vunpack.c.l.b16 %v1233
    %v1387 = vunpack.c.h.b16 %v1233
    %v1388 = vunpack.c.l.b16 %v1234
    %v1389 = vunpack.c.h.b16 %v1234
    %v1390 = vunpack.c.l.b16 %v1235
    %v1391 = vunpack.c.h.b16 %v1235
    %v1392 = vunpack.c.l.b16 %v1236
    %v1393 = vunpack.c.h.b16 %v1236
    %v1394 = vunpack.c.l.b16 %v1237
    %v1395 = vunpack.c.h.b16 %v1237
    %v1396 = vunpack.c.l.b16 %v1238
    %v1397 = vunpack.c.h.b16 %v1238
    %v1398 = vunpack.c.l.b16 %v1239
    %v1399 = vunpack.c.h.b16 %v1239
    %v1400 = vunpack.c.l.b16 %v1240
    %v1401 = vunpack.c.h.b16 %v1240
    %v1402 = vunpack.c.l.b16 %v1241
    %v1403 = vunpack.c.h.b16 %v1241
    %v1404 = vunpack.c.l.b16 %v1242
    %v1405 = vunpack.c.h.b16 %v1242
    %v1406 = vunpack.c.l.b16 %v1243
    %v1407 = vunpack.c.h.b16 %v1243
    %v1408 = vunpack.c.l.b16 %v1244
    %v1409 = vunpack.c.h.b16 %v1244
    %v1410 = vunpack.c.l.b16 %v1245
    %v1411 = vunpack.c.h.b16 %v1245
    %v1412 = vunpack.c.l.b16 %v1246
    %v1413 = vunpack.c.h.b16 %v1246
    %v1414 = vunpack.c.l.b16 %v1247
    %v1415 = vunpack.c.h.b16 %v1247
    %v1416 = vunpack.c.l.b16 %v1248
    %v1417 = vunpack.c.h.b16 %v1248
    %v1418 = vunpack.c.l.b16 %v1249
    %v1419 = vunpack.c.h.b16 %v1249
    %v1420 = vunpack.c.l.b16 %v1250
    %v1421 = vunpack.c.h.b16 %v1250
    %v1422 = vunpack.c.l.b16 %v1251
    %v1423 = vunpack.c.h.b16 %v1251
    %v1424 = vunpack.c.l.b16 %v1252
    %v1425 = vunpack.c.h.b16 %v1252
    %v1426 = vunpack.c.l.b16 %v1253
    %v1427 = vunpack.c.h.b16 %v1253
    %v1428 = vunpack.c.l.b16 %v1254
    %v1429 = vunpack.c.h.b16 %v1254
    %v1430 = vunpack.c.l.b16 %v1255
    %v1431 = vunpack.c.h.b16 %v1255
    %v1432 = vunpack.c.l.b16 %v1256
    %v1433 = vunpack.c.h.b16 %v1256
    %v1434 = vunpack.c.l.b16 %v1257
    %v1435 = vunpack.c.h.b16 %v1257
    %v1436 = vunpack.c.l.b16 %v1258
    %v1437 = vunpack.c.h.b16 %v1258
    %v1438 = vunpack.c.l.b16 %v1259
    %v1439 = vunpack.c.h.b16 %v1259
    %v1440 = vunpack.c.l.b16 %v1260
    %v1441 = vunpack.c.h.b16 %v1260
    %v1442 = vunpack.c.l.b16 %v1261
    %v1443 = vunpack.c.h.b16 %v1261
    %v1444 = vunpack.c.l.b16 %v1262
    %v1445 = vunpack.c.h.b16 %v1262
    %v1446 = vunpack.c.l.b16 %v1263
    %v1447 = vunpack.c.h.b16 %v1263
    %v1448 = vunpack.c.l.b16 %v1264
    %v1449 = vunpack.c.h.b16 %v1264
    %v1450 = vunpack.c.l.b16 %v1265
    %v1451 = vunpack.c.h.b16 %v1265
    %v1452 = vunpack.c.l.b16 %v1266
    %v1453 = vunpack.c.h.b16 %v1266
    %v1454 = vunpack.c.l.b16 %v1267
    %v1455 = vunpack.c.h.b16 %v1267
    %v1456 = vunpack.c.l.b16 %v1268
    %v1457 = vunpack.c.h.b16 %v1268
    %v1458 = vunpack.c.l.b16 %v1269
    %v1459 = vunpack.c.h.b16 %v1269
    %v1460 = vunpack.c.l.b16 %v1270
    %v1461 = vunpack.c.h.b16 %v1270
    %v1462 = vunpack.c.l.b16 %v1271
    %v1463 = vunpack.c.h.b16 %v1271
    %v1464 = vunpack.c.l.b16 %v1272
    %v1465 = vunpack.c.h.b16 %v1272
    %v1466 = vunpack.c.l.b16 %v1273
    %v1467 = vunpack.c.h.b16 %v1273
    %v1468 = vpack.c.b16 %v1344, %v1340
    %v1469 = vpack.c.b16 %v1345, %v1341
    %v1470 = vpack.c.b16 %v1346, %v1342
    %v1471 = vpack.c.b16 %v1347, %v1343
    %v1472 = vpack.c.b16 %v1352, %v1348
    %v1473 = vpack.c.b16 %v1353, %v1349
    %v1474 = vpack.c.b16 %v1354, %v1350
    %v1475 = vpack.c.b16 %v1355, %v1351
    %v1476 = vpack.c.b16 %v1360, %v1356
    %v1477 = vpack.c.b16 %v1361, %v1357
    %v1478 = vpack.c.b16 %v1362, %v1358
    %v1479 = vpack.c.b16 %v1363, %v1359
    %v1480 = vpack.c.b16 %v1368, %v1364
    %v1481 = vpack.c.b16 %v1369, %v1365
    %v1482 = vpack.c.b16 %v1370, %v1366
    %v1483 = vpack.c.b16 %v1371, %v1367
    %v1484 = vpack.c.b16 %v1376, %v1372
    %v1485 = vpack.c.b16 %v1377, %v1373
    %v1486 = vpack.c.b16 %v1378, %v1374
    %v1487 = vpack.c.b16 %v1379, %v1375
    %v1488 = vpack.c.b16 %v1384, %v1380
    %v1489 = vpack.c.b16 %v1385, %v1381
    %v1490 = vpack.c.b16 %v1386, %v1382
    %v1491 = vpack.c.b16 %v1387, %v1383
    %v1492 = vpack.c.b16 %v1392, %v1388
    %v1493 = vpack.c.b16 %v1393, %v1389
    %v1494 = vpack.c.b16 %v1394, %v1390
    %v1495 = vpack.c.b16 %v1395, %v1391
    %v1496 = vpack.c.b16 %v1400, %v1396
    %v1497 = vpack.c.b16 %v1401, %v1397
    %v1498 = vpack.c.b16 %v1402, %v1398
    %v1499 = vpack.c.b16 %v1403, %v1399
    %v1500 = vpack.c.b16 %v1408, %v1404
    %v1501 = vpack.c.b16 %v1409, %v1405
    %v1502 = vpack.c.b16 %v1410, %v1406
    %v1503 = vpack.c.b16 %v1411, %v1407
    %v1504 = vpack.c.b16 %v1416, %v1412
    %v1505 = vpack.c.b16 %v1417, %v1413
    %v1506 = vpack.c.b16 %v1418, %v1414
    %v1507 = vpack.c.b16 %v1419, %v1415
    %v1508 = vpack.c.b16 %v1424, %v1420
    %v1509 = vpack.c.b16 %v1425, %v1421
    %v1510 = vpack.c.b16 %v1426, %v1422
    %v1511 = vpack.c.b16 %v1427, %v1423
    %v1512 = vpack.c.b16 %v1432, %v1428
    %v1513 = vpack.c.b16 %v1433, %v1429
    %v1514 = vpack.c.b16 %v1434, %v1430
    %v1515 = vpack.c.b16 %v1435, %v1431
    %v1516 = vpack.c.b16 %v1440, %v1436
    %v1517 = vpack.c.b16 %v1441, %v1437
    %v1518 = vpack.c.b16 %v1442, %v1438
    %v1519 = vpack.c.b16 %v1443, %v1439
    %v1520 = vpack.c.b16 %v1448, %v1444
    %v1521 = vpack.c.b16 %v1449, %v1445
    %v1522 = vpack.c.b16 %v1450, %v1446
    %v1523 = vpack.c.b16 %v1451, %v1447
    %v1524 = vpack.c.b16 %v1456, %v1452
    %v1525 = vpack.c.b16 %v1457, %v1453
    %v1526 = vpack.c.b16 %v1458, %v1454
    %v1527 = vpack.c.b16 %v1459, %v1455
    %v1528 = vpack.c.b16 %v1464, %v1460
    %v1529 = vpack.c.b16 %v1465, %v1461
    %v1530 = vpack.c.b16 %v1466, %v1462
    %v1531 = vpack.c.b16 %v1467, %v1463
    %1596 = vmatprep.subr.bf16.mxu0 %v1469
    %1597 = vmatpush1.bf16.msra.mxu0 %v1468
    %1598 = vmatprep.subr.bf16.mxu0 %v1473
    %1599 = vmatpush1.bf16.msra.mxu0 %v1472
    %1600 = vmatprep.subr.bf16.mxu0 %v1477
    %1601 = vmatpush1.bf16.msra.mxu0 %v1476
    %1602 = vmatprep.subr.bf16.mxu0 %v1481
    %1603 = vmatpush1.bf16.msra.mxu0 %v1480
    %1604 = vmatprep.subr.bf16.mxu0 %v1485
    %1605 = vmatpush1.bf16.msra.mxu0 %v1484
    %1606 = vmatprep.subr.bf16.mxu0 %v1489
    %1607 = vmatpush1.bf16.msra.mxu0 %v1488
    %1608 = vmatprep.subr.bf16.mxu0 %v1493
    %1609 = vmatpush1.bf16.msra.mxu0 %v1492
    %1610 = vmatprep.subr.bf16.mxu0 %v1497
    %1611 = vmatpush1.bf16.msra.mxu0 %v1496
    %1612 = vmatprep.subr.bf16.mxu0 %v1501
    %1613 = vmatpush1.bf16.msra.mxu0 %v1500
    %1614 = vmatprep.subr.bf16.mxu0 %v1505
    %1615 = vmatpush1.bf16.msra.mxu0 %v1504
    %1616 = vmatprep.subr.bf16.mxu0 %v1509
    %1617 = vmatpush1.bf16.msra.mxu0 %v1508
    %1618 = vmatprep.subr.bf16.mxu0 %v1513
    %1619 = vmatpush1.bf16.msra.mxu0 %v1512
    %1620 = vmatprep.subr.bf16.mxu0 %v1517
    %1621 = vmatpush1.bf16.msra.mxu0 %v1516
    %1622 = vmatprep.subr.bf16.mxu0 %v1521
    %1623 = vmatpush1.bf16.msra.mxu0 %v1520
    %1624 = vmatprep.subr.bf16.mxu0 %v1525
    %1625 = vmatpush1.bf16.msra.mxu0 %v1524
    %1626 = vmatprep.subr.bf16.mxu0 %v1529
    %1627 = vmatpush1.bf16.msra.mxu0 %v1528
    %1628 = vmatprep.mubr.bf16.mxu0 %v1275
    %1629 = vmatmul.mubr.bf16.gmra.mrb[0].mxu0 %v1274
    %v1630 = vpop.f32.mrb[0].mxu0
    %v1631 = vadd.f32 0.0, %v1630
    %v1632 = vpop.f32.mrb[0].mxu0
    %v1633 = vadd.f32 0.0, %v1632
    %v1634 = vpop.f32.mrb[0].mxu0
    %v1635 = vpop.f32.mrb[0].mxu0
    %1636 = vdwg.mxu0
    %1637 = vmatprep.subr.bf16.mxu0 %v1471
    %1638 = vmatpush1.bf16.msra.mxu0 %v1470
    %1639 = vmatprep.subr.bf16.mxu0 %v1475
    %1640 = vmatpush1.bf16.msra.mxu0 %v1474
    %1641 = vmatprep.subr.bf16.mxu0 %v1479
    %1642 = vmatpush1.bf16.msra.mxu0 %v1478
    %1643 = vmatprep.subr.bf16.mxu0 %v1483
    %1644 = vmatpush1.bf16.msra.mxu0 %v1482
    %1645 = vmatprep.subr.bf16.mxu0 %v1487
    %1646 = vmatpush1.bf16.msra.mxu0 %v1486
    %1647 = vmatprep.subr.bf16.mxu0 %v1491
    %1648 = vmatpush1.bf16.msra.mxu0 %v1490
    %1649 = vmatprep.subr.bf16.mxu0 %v1495
    %1650 = vmatpush1.bf16.msra.mxu0 %v1494
    %1651 = vmatprep.subr.bf16.mxu0 %v1499
    %1652 = vmatpush1.bf16.msra.mxu0 %v1498
    %1653 = vmatprep.subr.bf16.mxu0 %v1503
    %1654 = vmatpush1.bf16.msra.mxu0 %v1502
    %1655 = vmatprep.subr.bf16.mxu0 %v1507
    %1656 = vmatpush1.bf16.msra.mxu0 %v1506
    %1657 = vmatprep.subr.bf16.mxu0 %v1511
    %1658 = vmatpush1.bf16.msra.mxu0 %v1510
    %1659 = vmatprep.subr.bf16.mxu0 %v1515
    %1660 = vmatpush1.bf16.msra.mxu0 %v1514
    %1661 = vmatprep.subr.bf16.mxu0 %v1519
    %1662 = vmatpush1.bf16.msra.mxu0 %v1518
    %1663 = vmatprep.subr.bf16.mxu0 %v1523
    %1664 = vmatpush1.bf16.msra.mxu0 %v1522
    %1665 = vmatprep.subr.bf16.mxu0 %v1527
    %1666 = vmatpush1.bf16.msra.mxu0 %v1526
    %1667 = vmatprep.subr.bf16.mxu0 %v1531
    %1668 = vmatpush1.bf16.msra.mxu0 %v1530
    %1669 = vmatprep.mubr.bf16.mxu0 %v1275
    %1670 = vmatmul.mubr.bf16.gmra.mrb[0].mxu0 %v1274
    %v1671 = vpop.f32.mrb[0].mxu0
    %v1672 = vadd.f32 0.0, %v1671
    %v1673 = vpop.f32.mrb[0].mxu0
    %v1674 = vadd.f32 0.0, %v1673
    %v1675 = vpop.f32.mrb[0].mxu0
    %v1676 = vpop.f32.mrb[0].mxu0
    %1677 = vdwg.mxu0
    %v1678 = vadd.f32 %v1163, %v1631
    %v1679 = vadd.f32 %v1165, %v1633
    %v1680 = vadd.f32 %v1204, %v1672
    %v1681 = vadd.f32 %v1206, %v1674
    %v1682 = vld [vmem:[#allocation19] ss:$8 sm:$0xf]
    %v1684 = vlaneseq
    %v1685 = vshrl.u32 %v1684, 7
    %v1686 = vsub.s32 0, %v1685
    %v1687 = vrot.slane %v1682, %v1686
    %v1688 = vlaneseq
    %v1689 = vshrl.u32 %v1688, 7
    %v1690 = vsub.s32 1, %v1689
    %v1691 = vrot.slane %v1682, %v1690
    %v1692 = vlaneseq
    %v1693 = vshrl.u32 %v1692, 7
    %v1694 = vsub.s32 2, %v1693
    %v1695 = vrot.slane %v1682, %v1694
    %v1696 = vlaneseq
    %v1697 = vshrl.u32 %v1696, 7
    %v1698 = vsub.s32 3, %v1697
    %v1699 = vrot.slane %v1682, %v1698
    %v1704 = vadd.f32 %v1678, %v1687
    %v1705 = vadd.f32 %v1679, %v1691
    %v1706 = vadd.f32 %v1680, %v1695
    %v1707 = vadd.f32 %v1681, %v1699
    %v1708 = vadd.f32 %v1704, %v1705
    %v1709 = vadd.f32 %v1708, %v1706
    %v1710 = vadd.f32 %v1709, %v1707
    %1711 = vadd.xlane.f32.xlu0 %v1710
    %v1712 = vpop.xlane.xlu0 %1711
    %v1713 = vrcp.pop 512.0
    %v1714 = vmul.f32 %v1712, %v1713
    %v1715 = vsub.f32 %v1704, %v1714
    %v1716 = vsub.f32 %v1705, %v1714
    %v1717 = vsub.f32 %v1706, %v1714
    %v1718 = vsub.f32 %v1707, %v1714
    %v1719 = vmul.f32 %v1715, %v1715
    %v1720 = vmul.f32 %v1716, %v1716
    %v1721 = vmul.f32 %v1717, %v1717
    %v1722 = vmul.f32 %v1718, %v1718
    %v1723 = vadd.f32 %v1719, %v1720
    %v1724 = vadd.f32 %v1723, %v1721
    %v1725 = vadd.f32 %v1724, %v1722
    %1726 = vadd.xlane.f32.xlu0 %v1725
    %v1727 = vpop.xlane.xlu0 %1726
    %v1728 = vmul.f32 %v1727, %v1713
    %v1729 = vadd.f32 %v1728, 1e-05
    %v1730 = vrsqrt.pop %v1729
    %v1731 = vmul.f32 %v1715, %v1730
    %v1732 = vmul.f32 %v1716, %v1730
    %v1733 = vmul.f32 %v1717, %v1730
    %v1734 = vmul.f32 %v1718, %v1730
    %s1735 = scalar_lea.vmem [#allocation19], 1
    %v1736 = vld [vmem:[%s1735] ss:$8 sm:$0xf]
    %v1738 = vlaneseq
    %v1739 = vshrl.u32 %v1738, 7
    %v1740 = vsub.s32 0, %v1739
    %v1741 = vrot.slane %v1736, %v1740
    %v1742 = vlaneseq
    %v1743 = vshrl.u32 %v1742, 7
    %v1744 = vsub.s32 1, %v1743
    %v1745 = vrot.slane %v1736, %v1744
    %v1746 = vlaneseq
    %v1747 = vshrl.u32 %v1746, 7
    %v1748 = vsub.s32 2, %v1747
    %v1749 = vrot.slane %v1736, %v1748
    %v1750 = vlaneseq
    %v1751 = vshrl.u32 %v1750, 7
    %v1752 = vsub.s32 3, %v1751
    %v1753 = vrot.slane %v1736, %v1752
    %v1758 = vmul.f32 %v1731, %v1741
    %v1759 = vmul.f32 %v1732, %v1745
    %v1760 = vmul.f32 %v1733, %v1749
    %v1761 = vmul.f32 %v1734, %v1753
    %s1762 = scalar_lea.vmem [#allocation19], 2
    %v1763 = vld [vmem:[%s1762] ss:$8 sm:$0xf]
    %v1765 = vlaneseq
    %v1766 = vshrl.u32 %v1765, 7
    %v1767 = vsub.s32 0, %v1766
    %v1768 = vrot.slane %v1763, %v1767
    %v1769 = vlaneseq
    %v1770 = vshrl.u32 %v1769, 7
    %v1771 = vsub.s32 1, %v1770
    %v1772 = vrot.slane %v1763, %v1771
    %v1773 = vlaneseq
    %v1774 = vshrl.u32 %v1773, 7
    %v1775 = vsub.s32 2, %v1774
    %v1776 = vrot.slane %v1763, %v1775
    %v1777 = vlaneseq
    %v1778 = vshrl.u32 %v1777, 7
    %v1779 = vsub.s32 3, %v1778
    %v1780 = vrot.slane %v1763, %v1779
    %v1785 = vadd.f32 %v1758, %v1768
    %v1786 = vadd.f32 %v1759, %v1772
    %v1787 = vadd.f32 %v1760, %v1776
    %v1788 = vadd.f32 %v1761, %v1780
    %v1789 = vmax.f32 %v1785, 0.0
    %v1790 = vmax.f32 %v1786, 0.0
    %v1791 = vmax.f32 %v1787, 0.0
    %v1792 = vmax.f32 %v1788, 0.0
    %v1793 = vld [vmem:[#allocation10] sm:$0xff]
    %v1794 = vld [vmem:[#allocation10 + $0x8] sm:$0xff]
    %v1795 = vld [vmem:[#allocation10 + $0x10] sm:$0xff]
    %v1796 = vld [vmem:[#allocation10 + $0x18] sm:$0xff]
    %v1797 = vld [vmem:[#allocation10 + $0x20] sm:$0xff]
    %v1798 = vld [vmem:[#allocation10 + $0x28] sm:$0xff]
    %v1799 = vld [vmem:[#allocation10 + $0x30] sm:$0xff]
    %v1800 = vld [vmem:[#allocation10 + $0x38] sm:$0xff]
    %v1801 = vld [vmem:[#allocation10 + $0x40] sm:$0xff]
    %v1802 = vld [vmem:[#allocation10 + $0x48] sm:$0xff]
    %v1803 = vld [vmem:[#allocation10 + $0x50] sm:$0xff]
    %v1804 = vld [vmem:[#allocation10 + $0x58] sm:$0xff]
    %v1805 = vld [vmem:[#allocation10 + $0x60] sm:$0xff]
    %v1806 = vld [vmem:[#allocation10 + $0x68] sm:$0xff]
    %v1807 = vld [vmem:[#allocation10 + $0x70] sm:$0xff]
    %v1808 = vld [vmem:[#allocation10 + $0x78] sm:$0xff]
    %v1809 = vld [vmem:[#allocation10 + $0x80] sm:$0xff]
    %v1810 = vld [vmem:[#allocation10 + $0x88] sm:$0xff]
    %v1811 = vld [vmem:[#allocation10 + $0x90] sm:$0xff]
    %v1812 = vld [vmem:[#allocation10 + $0x98] sm:$0xff]
    %v1813 = vld [vmem:[#allocation10 + $0xa0] sm:$0xff]
    %v1814 = vld [vmem:[#allocation10 + $0xa8] sm:$0xff]
    %v1815 = vld [vmem:[#allocation10 + $0xb0] sm:$0xff]
    %v1816 = vld [vmem:[#allocation10 + $0xb8] sm:$0xff]
    %v1817 = vld [vmem:[#allocation10 + $0xc0] sm:$0xff]
    %v1818 = vld [vmem:[#allocation10 + $0xc8] sm:$0xff]
    %v1819 = vld [vmem:[#allocation10 + $0xd0] sm:$0xff]
    %v1820 = vld [vmem:[#allocation10 + $0xd8] sm:$0xff]
    %v1821 = vld [vmem:[#allocation10 + $0xe0] sm:$0xff]
    %v1822 = vld [vmem:[#allocation10 + $0xe8] sm:$0xff]
    %v1823 = vld [vmem:[#allocation10 + $0xf0] sm:$0xff]
    %v1824 = vld [vmem:[#allocation10 + $0xf8] sm:$0xff]
    %v1825 = vld [vmem:[#allocation10 + $0x100] sm:$0xff]
    %v1826 = vld [vmem:[#allocation10 + $0x108] sm:$0xff]
    %v1827 = vld [vmem:[#allocation10 + $0x110] sm:$0xff]
    %v1828 = vld [vmem:[#allocation10 + $0x118] sm:$0xff]
    %v1829 = vld [vmem:[#allocation10 + $0x120] sm:$0xff]
    %v1830 = vld [vmem:[#allocation10 + $0x128] sm:$0xff]
    %v1831 = vld [vmem:[#allocation10 + $0x130] sm:$0xff]
    %v1832 = vld [vmem:[#allocation10 + $0x138] sm:$0xff]
    %v1833 = vld [vmem:[#allocation10 + $0x140] sm:$0xff]
    %v1834 = vld [vmem:[#allocation10 + $0x148] sm:$0xff]
    %v1835 = vld [vmem:[#allocation10 + $0x150] sm:$0xff]
    %v1836 = vld [vmem:[#allocation10 + $0x158] sm:$0xff]
    %v1837 = vld [vmem:[#allocation10 + $0x160] sm:$0xff]
    %v1838 = vld [vmem:[#allocation10 + $0x168] sm:$0xff]
    %v1839 = vld [vmem:[#allocation10 + $0x170] sm:$0xff]
    %v1840 = vld [vmem:[#allocation10 + $0x178] sm:$0xff]
    %v1841 = vld [vmem:[#allocation10 + $0x180] sm:$0xff]
    %v1842 = vld [vmem:[#allocation10 + $0x188] sm:$0xff]
    %v1843 = vld [vmem:[#allocation10 + $0x190] sm:$0xff]
    %v1844 = vld [vmem:[#allocation10 + $0x198] sm:$0xff]
    %v1845 = vld [vmem:[#allocation10 + $0x1a0] sm:$0xff]
    %v1846 = vld [vmem:[#allocation10 + $0x1a8] sm:$0xff]
    %v1847 = vld [vmem:[#allocation10 + $0x1b0] sm:$0xff]
    %v1848 = vld [vmem:[#allocation10 + $0x1b8] sm:$0xff]
    %v1849 = vld [vmem:[#allocation10 + $0x1c0] sm:$0xff]
    %v1850 = vld [vmem:[#allocation10 + $0x1c8] sm:$0xff]
    %v1851 = vld [vmem:[#allocation10 + $0x1d0] sm:$0xff]
    %v1852 = vld [vmem:[#allocation10 + $0x1d8] sm:$0xff]
    %v1853 = vld [vmem:[#allocation10 + $0x1e0] sm:$0xff]
    %v1854 = vld [vmem:[#allocation10 + $0x1e8] sm:$0xff]
    %v1855 = vld [vmem:[#allocation10 + $0x1f0] sm:$0xff]
    %v1856 = vld [vmem:[#allocation10 + $0x1f8] sm:$0xff]
    %v1857 = vpack.c.bf16 %v1789, %v1789
    %v1858 = vpack.c.bf16 %v1790, %v1790
    %v1859 = vpack.c.bf16 %v1791, %v1791
    %v1860 = vpack.c.bf16 %v1792, %v1792
    %s1861 = scalar_lea.vmem [#allocation19], 3
    %v1862 = vld [vmem:[%s1861] ss:$8 sm:$0x3]
    %v1864 = vlaneseq
    %v1865 = vshrl.u32 %v1864, 7
    %v1866 = vsub.s32 0, %v1865
    %v1867 = vrot.slane %v1862, %v1866
    %v1868 = vlaneseq
    %v1869 = vshrl.u32 %v1868, 7
    %v1870 = vsub.s32 1, %v1869
    %v1871 = vrot.slane %v1862, %v1870
    %v1938 = vunpack.c.l.b16 %v1793
    %v1939 = vunpack.c.h.b16 %v1793
    %v1940 = vunpack.c.l.b16 %v1794
    %v1941 = vunpack.c.h.b16 %v1794
    %v1942 = vunpack.c.l.b16 %v1795
    %v1943 = vunpack.c.h.b16 %v1795
    %v1944 = vunpack.c.l.b16 %v1796
    %v1945 = vunpack.c.h.b16 %v1796
    %v1946 = vunpack.c.l.b16 %v1797
    %v1947 = vunpack.c.h.b16 %v1797
    %v1948 = vunpack.c.l.b16 %v1798
    %v1949 = vunpack.c.h.b16 %v1798
    %v1950 = vunpack.c.l.b16 %v1799
    %v1951 = vunpack.c.h.b16 %v1799
    %v1952 = vunpack.c.l.b16 %v1800
    %v1953 = vunpack.c.h.b16 %v1800
    %v1954 = vunpack.c.l.b16 %v1801
    %v1955 = vunpack.c.h.b16 %v1801
    %v1956 = vunpack.c.l.b16 %v1802
    %v1957 = vunpack.c.h.b16 %v1802
    %v1958 = vunpack.c.l.b16 %v1803
    %v1959 = vunpack.c.h.b16 %v1803
    %v1960 = vunpack.c.l.b16 %v1804
    %v1961 = vunpack.c.h.b16 %v1804
    %v1962 = vunpack.c.l.b16 %v1805
    %v1963 = vunpack.c.h.b16 %v1805
    %v1964 = vunpack.c.l.b16 %v1806
    %v1965 = vunpack.c.h.b16 %v1806
    %v1966 = vunpack.c.l.b16 %v1807
    %v1967 = vunpack.c.h.b16 %v1807
    %v1968 = vunpack.c.l.b16 %v1808
    %v1969 = vunpack.c.h.b16 %v1808
    %v1970 = vunpack.c.l.b16 %v1809
    %v1971 = vunpack.c.h.b16 %v1809
    %v1972 = vunpack.c.l.b16 %v1810
    %v1973 = vunpack.c.h.b16 %v1810
    %v1974 = vunpack.c.l.b16 %v1811
    %v1975 = vunpack.c.h.b16 %v1811
    %v1976 = vunpack.c.l.b16 %v1812
    %v1977 = vunpack.c.h.b16 %v1812
    %v1978 = vunpack.c.l.b16 %v1813
    %v1979 = vunpack.c.h.b16 %v1813
    %v1980 = vunpack.c.l.b16 %v1814
    %v1981 = vunpack.c.h.b16 %v1814
    %v1982 = vunpack.c.l.b16 %v1815
    %v1983 = vunpack.c.h.b16 %v1815
    %v1984 = vunpack.c.l.b16 %v1816
    %v1985 = vunpack.c.h.b16 %v1816
    %v1986 = vunpack.c.l.b16 %v1817
    %v1987 = vunpack.c.h.b16 %v1817
    %v1988 = vunpack.c.l.b16 %v1818
    %v1989 = vunpack.c.h.b16 %v1818
    %v1990 = vunpack.c.l.b16 %v1819
    %v1991 = vunpack.c.h.b16 %v1819
    %v1992 = vunpack.c.l.b16 %v1820
    %v1993 = vunpack.c.h.b16 %v1820
    %v1994 = vunpack.c.l.b16 %v1821
    %v1995 = vunpack.c.h.b16 %v1821
    %v1996 = vunpack.c.l.b16 %v1822
    %v1997 = vunpack.c.h.b16 %v1822
    %v1998 = vunpack.c.l.b16 %v1823
    %v1999 = vunpack.c.h.b16 %v1823
    %v2000 = vunpack.c.l.b16 %v1824
    %v2001 = vunpack.c.h.b16 %v1824
    %v2002 = vunpack.c.l.b16 %v1825
    %v2003 = vunpack.c.h.b16 %v1825
    %v2004 = vunpack.c.l.b16 %v1826
    %v2005 = vunpack.c.h.b16 %v1826
    %v2006 = vunpack.c.l.b16 %v1827
    %v2007 = vunpack.c.h.b16 %v1827
    %v2008 = vunpack.c.l.b16 %v1828
    %v2009 = vunpack.c.h.b16 %v1828
    %v2010 = vunpack.c.l.b16 %v1829
    %v2011 = vunpack.c.h.b16 %v1829
    %v2012 = vunpack.c.l.b16 %v1830
    %v2013 = vunpack.c.h.b16 %v1830
    %v2014 = vunpack.c.l.b16 %v1831
    %v2015 = vunpack.c.h.b16 %v1831
    %v2016 = vunpack.c.l.b16 %v1832
    %v2017 = vunpack.c.h.b16 %v1832
    %v2018 = vunpack.c.l.b16 %v1833
    %v2019 = vunpack.c.h.b16 %v1833
    %v2020 = vunpack.c.l.b16 %v1834
    %v2021 = vunpack.c.h.b16 %v1834
    %v2022 = vunpack.c.l.b16 %v1835
    %v2023 = vunpack.c.h.b16 %v1835
    %v2024 = vunpack.c.l.b16 %v1836
    %v2025 = vunpack.c.h.b16 %v1836
    %v2026 = vunpack.c.l.b16 %v1837
    %v2027 = vunpack.c.h.b16 %v1837
    %v2028 = vunpack.c.l.b16 %v1838
    %v2029 = vunpack.c.h.b16 %v1838
    %v2030 = vunpack.c.l.b16 %v1839
    %v2031 = vunpack.c.h.b16 %v1839
    %v2032 = vunpack.c.l.b16 %v1840
    %v2033 = vunpack.c.h.b16 %v1840
    %v2034 = vunpack.c.l.b16 %v1841
    %v2035 = vunpack.c.h.b16 %v1841
    %v2036 = vunpack.c.l.b16 %v1842
    %v2037 = vunpack.c.h.b16 %v1842
    %v2038 = vunpack.c.l.b16 %v1843
    %v2039 = vunpack.c.h.b16 %v1843
    %v2040 = vunpack.c.l.b16 %v1844
    %v2041 = vunpack.c.h.b16 %v1844
    %v2042 = vunpack.c.l.b16 %v1845
    %v2043 = vunpack.c.h.b16 %v1845
    %v2044 = vunpack.c.l.b16 %v1846
    %v2045 = vunpack.c.h.b16 %v1846
    %v2046 = vunpack.c.l.b16 %v1847
    %v2047 = vunpack.c.h.b16 %v1847
    %v2048 = vunpack.c.l.b16 %v1848
    %v2049 = vunpack.c.h.b16 %v1848
    %v2050 = vunpack.c.l.b16 %v1849
    %v2051 = vunpack.c.h.b16 %v1849
    %v2052 = vunpack.c.l.b16 %v1850
    %v2053 = vunpack.c.h.b16 %v1850
    %v2054 = vunpack.c.l.b16 %v1851
    %v2055 = vunpack.c.h.b16 %v1851
    %v2056 = vunpack.c.l.b16 %v1852
    %v2057 = vunpack.c.h.b16 %v1852
    %v2058 = vunpack.c.l.b16 %v1853
    %v2059 = vunpack.c.h.b16 %v1853
    %v2060 = vunpack.c.l.b16 %v1854
    %v2061 = vunpack.c.h.b16 %v1854
    %v2062 = vunpack.c.l.b16 %v1855
    %v2063 = vunpack.c.h.b16 %v1855
    %v2064 = vunpack.c.l.b16 %v1856
    %v2065 = vunpack.c.h.b16 %v1856
    %v2066 = vpack.c.b16 %v1940, %v1938
    %v2067 = vpack.c.b16 %v1941, %v1939
    %v2068 = vpack.c.b16 %v1944, %v1942
    %v2069 = vpack.c.b16 %v1945, %v1943
    %v2070 = vpack.c.b16 %v1948, %v1946
    %v2071 = vpack.c.b16 %v1949, %v1947
    %v2072 = vpack.c.b16 %v1952, %v1950
    %v2073 = vpack.c.b16 %v1953, %v1951
    %v2074 = vpack.c.b16 %v1956, %v1954
    %v2075 = vpack.c.b16 %v1957, %v1955
    %v2076 = vpack.c.b16 %v1960, %v1958
    %v2077 = vpack.c.b16 %v1961, %v1959
    %v2078 = vpack.c.b16 %v1964, %v1962
    %v2079 = vpack.c.b16 %v1965, %v1963
    %v2080 = vpack.c.b16 %v1968, %v1966
    %v2081 = vpack.c.b16 %v1969, %v1967
    %v2082 = vpack.c.b16 %v1972, %v1970
    %v2083 = vpack.c.b16 %v1973, %v1971
    %v2084 = vpack.c.b16 %v1976, %v1974
    %v2085 = vpack.c.b16 %v1977, %v1975
    %v2086 = vpack.c.b16 %v1980, %v1978
    %v2087 = vpack.c.b16 %v1981, %v1979
    %v2088 = vpack.c.b16 %v1984, %v1982
    %v2089 = vpack.c.b16 %v1985, %v1983
    %v2090 = vpack.c.b16 %v1988, %v1986
    %v2091 = vpack.c.b16 %v1989, %v1987
    %v2092 = vpack.c.b16 %v1992, %v1990
    %v2093 = vpack.c.b16 %v1993, %v1991
    %v2094 = vpack.c.b16 %v1996, %v1994
    %v2095 = vpack.c.b16 %v1997, %v1995
    %v2096 = vpack.c.b16 %v2000, %v1998
    %v2097 = vpack.c.b16 %v2001, %v1999
    %v2098 = vpack.c.b16 %v2004, %v2002
    %v2099 = vpack.c.b16 %v2005, %v2003
    %v2100 = vpack.c.b16 %v2008, %v2006
    %v2101 = vpack.c.b16 %v2009, %v2007
    %v2102 = vpack.c.b16 %v2012, %v2010
    %v2103 = vpack.c.b16 %v2013, %v2011
    %v2104 = vpack.c.b16 %v2016, %v2014
    %v2105 = vpack.c.b16 %v2017, %v2015
    %v2106 = vpack.c.b16 %v2020, %v2018
    %v2107 = vpack.c.b16 %v2021, %v2019
    %v2108 = vpack.c.b16 %v2024, %v2022
    %v2109 = vpack.c.b16 %v2025, %v2023
    %v2110 = vpack.c.b16 %v2028, %v2026
    %v2111 = vpack.c.b16 %v2029, %v2027
    %v2112 = vpack.c.b16 %v2032, %v2030
    %v2113 = vpack.c.b16 %v2033, %v2031
    %v2114 = vpack.c.b16 %v2036, %v2034
    %v2115 = vpack.c.b16 %v2037, %v2035
    %v2116 = vpack.c.b16 %v2040, %v2038
    %v2117 = vpack.c.b16 %v2041, %v2039
    %v2118 = vpack.c.b16 %v2044, %v2042
    %v2119 = vpack.c.b16 %v2045, %v2043
    %v2120 = vpack.c.b16 %v2048, %v2046
    %v2121 = vpack.c.b16 %v2049, %v2047
    %v2122 = vpack.c.b16 %v2052, %v2050
    %v2123 = vpack.c.b16 %v2053, %v2051
    %v2124 = vpack.c.b16 %v2056, %v2054
    %v2125 = vpack.c.b16 %v2057, %v2055
    %v2126 = vpack.c.b16 %v2060, %v2058
    %v2127 = vpack.c.b16 %v2061, %v2059
    %v2128 = vpack.c.b16 %v2064, %v2062
    %v2129 = vpack.c.b16 %v2065, %v2063
    %2194 = vmatprep.subr.bf16.mxu0 %v2067
    %2195 = vmatpush1.bf16.msra.mxu0 %v2066
    %2196 = vmatprep.subr.bf16.mxu0 %v2069
    %2197 = vmatpush1.bf16.msra.mxu0 %v2068
    %2198 = vmatprep.subr.bf16.mxu0 %v2071
    %2199 = vmatpush1.bf16.msra.mxu0 %v2070
    %2200 = vmatprep.subr.bf16.mxu0 %v2073
    %2201 = vmatpush1.bf16.msra.mxu0 %v2072
    %2202 = vmatprep.subr.bf16.mxu0 %v2075
    %2203 = vmatpush1.bf16.msra.mxu0 %v2074
    %2204 = vmatprep.subr.bf16.mxu0 %v2077
    %2205 = vmatpush1.bf16.msra.mxu0 %v2076
    %2206 = vmatprep.subr.bf16.mxu0 %v2079
    %2207 = vmatpush1.bf16.msra.mxu0 %v2078
    %2208 = vmatprep.subr.bf16.mxu0 %v2081
    %2209 = vmatpush1.bf16.msra.mxu0 %v2080
    %2210 = vmatprep.subr.bf16.mxu0 %v2083
    %2211 = vmatpush1.bf16.msra.mxu0 %v2082
    %2212 = vmatprep.subr.bf16.mxu0 %v2085
    %2213 = vmatpush1.bf16.msra.mxu0 %v2084
    %2214 = vmatprep.subr.bf16.mxu0 %v2087
    %2215 = vmatpush1.bf16.msra.mxu0 %v2086
    %2216 = vmatprep.subr.bf16.mxu0 %v2089
    %2217 = vmatpush1.bf16.msra.mxu0 %v2088
    %2218 = vmatprep.subr.bf16.mxu0 %v2091
    %2219 = vmatpush1.bf16.msra.mxu0 %v2090
    %2220 = vmatprep.subr.bf16.mxu0 %v2093
    %2221 = vmatpush1.bf16.msra.mxu0 %v2092
    %2222 = vmatprep.subr.bf16.mxu0 %v2095
    %2223 = vmatpush1.bf16.msra.mxu0 %v2094
    %2224 = vmatprep.subr.bf16.mxu0 %v2097
    %2225 = vmatpush1.bf16.msra.mxu0 %v2096
    %2226 = vmatprep.mubr.bf16.mxu0 %v1858
    %2227 = vmatmul.mubr.bf16.gmra.mrb[0].mxu0 %v1857
    %v2228 = vpop.f32.mrb[0].mxu0
    %v2229 = vadd.f32 %v1867, %v2228
    %v2230 = vpop.f32.mrb[0].mxu0
    %v2231 = vadd.f32 %v1871, %v2230
    %v2232 = vpop.f32.mrb[0].mxu0
    %v2233 = vpop.f32.mrb[0].mxu0
    %2234 = vdwg.mxu0
    %2235 = vmatprep.subr.bf16.mxu0 %v2099
    %2236 = vmatpush1.bf16.msra.mxu0 %v2098
    %2237 = vmatprep.subr.bf16.mxu0 %v2101
    %2238 = vmatpush1.bf16.msra.mxu0 %v2100
    %2239 = vmatprep.subr.bf16.mxu0 %v2103
    %2240 = vmatpush1.bf16.msra.mxu0 %v2102
    %2241 = vmatprep.subr.bf16.mxu0 %v2105
    %2242 = vmatpush1.bf16.msra.mxu0 %v2104
    %2243 = vmatprep.subr.bf16.mxu0 %v2107
    %2244 = vmatpush1.bf16.msra.mxu0 %v2106
    %2245 = vmatprep.subr.bf16.mxu0 %v2109
    %2246 = vmatpush1.bf16.msra.mxu0 %v2108
    %2247 = vmatprep.subr.bf16.mxu0 %v2111
    %2248 = vmatpush1.bf16.msra.mxu0 %v2110
    %2249 = vmatprep.subr.bf16.mxu0 %v2113
    %2250 = vmatpush1.bf16.msra.mxu0 %v2112
    %2251 = vmatprep.subr.bf16.mxu0 %v2115
    %2252 = vmatpush1.bf16.msra.mxu0 %v2114
    %2253 = vmatprep.subr.bf16.mxu0 %v2117
    %2254 = vmatpush1.bf16.msra.mxu0 %v2116
    %2255 = vmatprep.subr.bf16.mxu0 %v2119
    %2256 = vmatpush1.bf16.msra.mxu0 %v2118
    %2257 = vmatprep.subr.bf16.mxu0 %v2121
    %2258 = vmatpush1.bf16.msra.mxu0 %v2120
    %2259 = vmatprep.subr.bf16.mxu0 %v2123
    %2260 = vmatpush1.bf16.msra.mxu0 %v2122
    %2261 = vmatprep.subr.bf16.mxu0 %v2125
    %2262 = vmatpush1.bf16.msra.mxu0 %v2124
    %2263 = vmatprep.subr.bf16.mxu0 %v2127
    %2264 = vmatpush1.bf16.msra.mxu0 %v2126
    %2265 = vmatprep.subr.bf16.mxu0 %v2129
    %2266 = vmatpush1.bf16.msra.mxu0 %v2128
    %2267 = vmatprep.mubr.bf16.mxu0 %v1860
    %2268 = vmatmul.mubr.bf16.gmra.mrb[0].mxu0 %v1859
    %v2269 = vpop.f32.mrb[0].mxu0
    %v2270 = vadd.f32 %v2229, %v2269
    %v2271 = vpop.f32.mrb[0].mxu0
    %v2272 = vadd.f32 %v2231, %v2271
    %v2273 = vpop.f32.mrb[0].mxu0
    %v2274 = vpop.f32.mrb[0].mxu0
    %2275 = vdwg.mxu0
    %v2276 = vadd.f32 %v2270, %v2272
    %2277 = vadd.xlane.f32.xlu0 %v2276
    %v2278 = vpop.xlane.xlu0 %2277
    %v2279 = vrcp.pop 256.0
    %v2280 = vmul.f32 %v2278, %v2279
    %v2281 = vsub.f32 %v2270, %v2280
    %v2282 = vsub.f32 %v2272, %v2280
    %v2283 = vmul.f32 %v2281, %v2281
    %v2284 = vmul.f32 %v2282, %v2282
    %v2285 = vadd.f32 %v2283, %v2284
    %2286 = vadd.xlane.f32.xlu0 %v2285
    %v2287 = vpop.xlane.xlu0 %2286
    %v2288 = vmul.f32 %v2287, %v2279
    %v2289 = vadd.f32 %v2288, 1e-05
    %v2290 = vrsqrt.pop %v2289
    %v2291 = vmul.f32 %v2281, %v2290
    %v2292 = vmul.f32 %v2282, %v2290
    %s2293 = scalar_lea.vmem [#allocation19], 4
    %v2294 = vld [vmem:[%s2293] ss:$8 sm:$0x3]
    %v2296 = vlaneseq
    %v2297 = vshrl.u32 %v2296, 7
    %v2298 = vsub.s32 0, %v2297
    %v2299 = vrot.slane %v2294, %v2298
    %v2300 = vlaneseq
    %v2301 = vshrl.u32 %v2300, 7
    %v2302 = vsub.s32 1, %v2301
    %v2303 = vrot.slane %v2294, %v2302
    %v2306 = vmul.f32 %v2291, %v2299
    %v2307 = vmul.f32 %v2292, %v2303
    %s2308 = scalar_lea.vmem [#allocation19], 5
    %v2309 = vld [vmem:[%s2308] ss:$8 sm:$0x3]
    %v2311 = vlaneseq
    %v2312 = vshrl.u32 %v2311, 7
    %v2313 = vsub.s32 0, %v2312
    %v2314 = vrot.slane %v2309, %v2313
    %v2315 = vlaneseq
    %v2316 = vshrl.u32 %v2315, 7
    %v2317 = vsub.s32 1, %v2316
    %v2318 = vrot.slane %v2309, %v2317
    %v2321 = vadd.f32 %v2306, %v2314
    %v2322 = vadd.f32 %v2307, %v2318
    %2323 = vst [vmem:[#allocation20] sm:$0xff] %v2321
    %2324 = vst [vmem:[#allocation20 + $0x8] sm:$0xff] %v2322
    %v2325 = vld [vmem:[#allocation11] sm:$0xff]
    %v2326 = vld [vmem:[#allocation11 + $0x8] sm:$0xff]
    %v2327 = vld [vmem:[#allocation11 + $0x10] sm:$0xff]
    %v2328 = vld [vmem:[#allocation11 + $0x18] sm:$0xff]
    %v2329 = vld [vmem:[#allocation11 + $0x20] sm:$0xf]
    %v2330 = vld [vmem:[#allocation11 + $0x24] sm:$0xff]
    %v2331 = vld [vmem:[#allocation11 + $0x2c] sm:$0xff]
    %v2332 = vld [vmem:[#allocation11 + $0x34] sm:$0xff]
    %v2333 = vld [vmem:[#allocation11 + $0x3c] sm:$0xff]
    %v2334 = vld [vmem:[#allocation11 + $0x44] sm:$0xf]
    %v2335 = vld [vmem:[#allocation11 + $0x48] sm:$0xff]
    %v2336 = vld [vmem:[#allocation11 + $0x50] sm:$0xff]
    %v2337 = vld [vmem:[#allocation11 + $0x58] sm:$0xff]
    %v2338 = vld [vmem:[#allocation11 + $0x60] sm:$0xff]
    %v2339 = vld [vmem:[#allocation11 + $0x68] sm:$0xf]
    %v2340 = vld [vmem:[#allocation11 + $0x6c] sm:$0xff]
    %v2341 = vld [vmem:[#allocation11 + $0x74] sm:$0xff]
    %v2342 = vld [vmem:[#allocation11 + $0x7c] sm:$0xff]
    %v2343 = vld [vmem:[#allocation11 + $0x84] sm:$0xff]
    %v2344 = vld [vmem:[#allocation11 + $0x8c] sm:$0xf]
    %v2345 = vld [vmem:[#allocation11 + $0x90] sm:$0xff]
    %v2346 = vld [vmem:[#allocation11 + $0x98] sm:$0xff]
    %v2347 = vld [vmem:[#allocation11 + $0xa0] sm:$0xff]
    %v2348 = vld [vmem:[#allocation11 + $0xa8] sm:$0xff]
    %v2349 = vld [vmem:[#allocation11 + $0xb0] sm:$0xf]
    %v2350 = vld [vmem:[#allocation11 + $0xb4] sm:$0xff]
    %v2351 = vld [vmem:[#allocation11 + $0xbc] sm:$0xff]
    %v2352 = vld [vmem:[#allocation11 + $0xc4] sm:$0xff]
    %v2353 = vld [vmem:[#allocation11 + $0xcc] sm:$0xff]
    %v2354 = vld [vmem:[#allocation11 + $0xd4] sm:$0xf]
    %v2355 = vld [vmem:[#allocation11 + $0xd8] sm:$0xff]
    %v2356 = vld [vmem:[#allocation11 + $0xe0] sm:$0xff]
    %v2357 = vld [vmem:[#allocation11 + $0xe8] sm:$0xff]
    %v2358 = vld [vmem:[#allocation11 + $0xf0] sm:$0xff]
    %v2359 = vld [vmem:[#allocation11 + $0xf8] sm:$0xf]
    %v2360 = vld [vmem:[#allocation11 + $0xfc] sm:$0xff]
    %v2361 = vld [vmem:[#allocation11 + $0x104] sm:$0xff]
    %v2362 = vld [vmem:[#allocation11 + $0x10c] sm:$0xff]
    %v2363 = vld [vmem:[#allocation11 + $0x114] sm:$0xff]
    %v2364 = vld [vmem:[#allocation11 + $0x11c] sm:$0xf]
    %v2365 = vld [vmem:[#allocation11 + $0x120] sm:$0xff]
    %v2366 = vld [vmem:[#allocation11 + $0x128] sm:$0xff]
    %v2367 = vld [vmem:[#allocation11 + $0x130] sm:$0xff]
    %v2368 = vld [vmem:[#allocation11 + $0x138] sm:$0xff]
    %v2369 = vld [vmem:[#allocation11 + $0x140] sm:$0xf]
    %v2370 = vld [vmem:[#allocation11 + $0x144] sm:$0xff]
    %v2371 = vld [vmem:[#allocation11 + $0x14c] sm:$0xff]
    %v2372 = vld [vmem:[#allocation11 + $0x154] sm:$0xff]
    %v2373 = vld [vmem:[#allocation11 + $0x15c] sm:$0xff]
    %v2374 = vld [vmem:[#allocation11 + $0x164] sm:$0xf]
    %v2375 = vld [vmem:[#allocation11 + $0x168] sm:$0xff]
    %v2376 = vld [vmem:[#allocation11 + $0x170] sm:$0xff]
    %v2377 = vld [vmem:[#allocation11 + $0x178] sm:$0xff]
    %v2378 = vld [vmem:[#allocation11 + $0x180] sm:$0xff]
    %v2379 = vld [vmem:[#allocation11 + $0x188] sm:$0xf]
    %v2380 = vld [vmem:[#allocation11 + $0x18c] sm:$0xff]
    %v2381 = vld [vmem:[#allocation11 + $0x194] sm:$0xff]
    %v2382 = vld [vmem:[#allocation11 + $0x19c] sm:$0xff]
    %v2383 = vld [vmem:[#allocation11 + $0x1a4] sm:$0xff]
    %v2384 = vld [vmem:[#allocation11 + $0x1ac] sm:$0xf]
    %v2385 = vld [vmem:[#allocation11 + $0x1b0] sm:$0xff]
    %v2386 = vld [vmem:[#allocation11 + $0x1b8] sm:$0xff]
    %v2387 = vld [vmem:[#allocation11 + $0x1c0] sm:$0xff]
    %v2388 = vld [vmem:[#allocation11 + $0x1c8] sm:$0xff]
    %v2389 = vld [vmem:[#allocation11 + $0x1d0] sm:$0xf]
    %v2390 = vld [vmem:[#allocation11 + $0x1d4] sm:$0xff]
    %v2391 = vld [vmem:[#allocation11 + $0x1dc] sm:$0xff]
    %v2392 = vld [vmem:[#allocation11 + $0x1e4] sm:$0xff]
    %v2393 = vld [vmem:[#allocation11 + $0x1ec] sm:$0xff]
    %v2394 = vld [vmem:[#allocation11 + $0x1f4] sm:$0xf]
    %v2395 = vld [vmem:[#allocation11 + $0x1f8] sm:$0xff]
    %v2396 = vld [vmem:[#allocation11 + $0x200] sm:$0xff]
    %v2397 = vld [vmem:[#allocation11 + $0x208] sm:$0xff]
    %v2398 = vld [vmem:[#allocation11 + $0x210] sm:$0xff]
    %v2399 = vld [vmem:[#allocation11 + $0x218] sm:$0xf]
    %v2400 = vld [vmem:[#allocation11 + $0x21c] sm:$0xff]
    %v2401 = vld [vmem:[#allocation11 + $0x224] sm:$0xff]
    %v2402 = vld [vmem:[#allocation11 + $0x22c] sm:$0xff]
    %v2403 = vld [vmem:[#allocation11 + $0x234] sm:$0xff]
    %v2404 = vld [vmem:[#allocation11 + $0x23c] sm:$0xf]
    %v2405 = vld [vmem:[#allocation11 + $0x240] sm:$0xff]
    %v2406 = vld [vmem:[#allocation11 + $0x248] sm:$0xff]
    %v2407 = vld [vmem:[#allocation11 + $0x250] sm:$0xff]
    %v2408 = vld [vmem:[#allocation11 + $0x258] sm:$0xff]
    %v2409 = vld [vmem:[#allocation11 + $0x260] sm:$0xf]
    %v2410 = vld [vmem:[#allocation11 + $0x264] sm:$0xff]
    %v2411 = vld [vmem:[#allocation11 + $0x26c] sm:$0xff]
    %v2412 = vld [vmem:[#allocation11 + $0x274] sm:$0xff]
    %v2413 = vld [vmem:[#allocation11 + $0x27c] sm:$0xff]
    %v2414 = vld [vmem:[#allocation11 + $0x284] sm:$0xf]
    %v2415 = vld [vmem:[#allocation11 + $0x288] sm:$0xff]
    %v2416 = vld [vmem:[#allocation11 + $0x290] sm:$0xff]
    %v2417 = vld [vmem:[#allocation11 + $0x298] sm:$0xff]
    %v2418 = vld [vmem:[#allocation11 + $0x2a0] sm:$0xff]
    %v2419 = vld [vmem:[#allocation11 + $0x2a8] sm:$0xf]
    %v2420 = vld [vmem:[#allocation11 + $0x2ac] sm:$0xff]
    %v2421 = vld [vmem:[#allocation11 + $0x2b4] sm:$0xff]
    %v2422 = vld [vmem:[#allocation11 + $0x2bc] sm:$0xff]
    %v2423 = vld [vmem:[#allocation11 + $0x2c4] sm:$0xff]
    %v2424 = vld [vmem:[#allocation11 + $0x2cc] sm:$0xf]
    %v2425 = vld [vmem:[#allocation11 + $0x2d0] sm:$0xff]
    %v2426 = vld [vmem:[#allocation11 + $0x2d8] sm:$0xff]
    %v2427 = vld [vmem:[#allocation11 + $0x2e0] sm:$0xff]
    %v2428 = vld [vmem:[#allocation11 + $0x2e8] sm:$0xff]
    %v2429 = vld [vmem:[#allocation11 + $0x2f0] sm:$0xf]
    %v2430 = vld [vmem:[#allocation11 + $0x2f4] sm:$0xff]
    %v2431 = vld [vmem:[#allocation11 + $0x2fc] sm:$0xff]
    %v2432 = vld [vmem:[#allocation11 + $0x304] sm:$0xff]
    %v2433 = vld [vmem:[#allocation11 + $0x30c] sm:$0xff]
    %v2434 = vld [vmem:[#allocation11 + $0x314] sm:$0xf]
    %v2435 = vld [vmem:[#allocation11 + $0x318] sm:$0xff]
    %v2436 = vld [vmem:[#allocation11 + $0x320] sm:$0xff]
    %v2437 = vld [vmem:[#allocation11 + $0x328] sm:$0xff]
    %v2438 = vld [vmem:[#allocation11 + $0x330] sm:$0xff]
    %v2439 = vld [vmem:[#allocation11 + $0x338] sm:$0xf]
    %v2440 = vld [vmem:[#allocation11 + $0x33c] sm:$0xff]
    %v2441 = vld [vmem:[#allocation11 + $0x344] sm:$0xff]
    %v2442 = vld [vmem:[#allocation11 + $0x34c] sm:$0xff]
    %v2443 = vld [vmem:[#allocation11 + $0x354] sm:$0xff]
    %v2444 = vld [vmem:[#allocation11 + $0x35c] sm:$0xf]
    %v2445 = vld [vmem:[#allocation11 + $0x360] sm:$0xff]
    %v2446 = vld [vmem:[#allocation11 + $0x368] sm:$0xff]
    %v2447 = vld [vmem:[#allocation11 + $0x370] sm:$0xff]
    %v2448 = vld [vmem:[#allocation11 + $0x378] sm:$0xff]
    %v2449 = vld [vmem:[#allocation11 + $0x380] sm:$0xf]
    %v2450 = vld [vmem:[#allocation11 + $0x384] sm:$0xff]
    %v2451 = vld [vmem:[#allocation11 + $0x38c] sm:$0xff]
    %v2452 = vld [vmem:[#allocation11 + $0x394] sm:$0xff]
    %v2453 = vld [vmem:[#allocation11 + $0x39c] sm:$0xff]
    %v2454 = vld [vmem:[#allocation11 + $0x3a4] sm:$0xf]
    %v2455 = vld [vmem:[#allocation11 + $0x3a8] sm:$0xff]
    %v2456 = vld [vmem:[#allocation11 + $0x3b0] sm:$0xff]
    %v2457 = vld [vmem:[#allocation11 + $0x3b8] sm:$0xff]
    %v2458 = vld [vmem:[#allocation11 + $0x3c0] sm:$0xff]
    %v2459 = vld [vmem:[#allocation11 + $0x3c8] sm:$0xf]
    %v2460 = vld [vmem:[#allocation11 + $0x3cc] sm:$0xff]
    %v2461 = vld [vmem:[#allocation11 + $0x3d4] sm:$0xff]
    %v2462 = vld [vmem:[#allocation11 + $0x3dc] sm:$0xff]
    %v2463 = vld [vmem:[#allocation11 + $0x3e4] sm:$0xff]
    %v2464 = vld [vmem:[#allocation11 + $0x3ec] sm:$0xf]
    %v2465 = vld [vmem:[#allocation11 + $0x3f0] sm:$0xff]
    %v2466 = vld [vmem:[#allocation11 + $0x3f8] sm:$0xff]
    %v2467 = vld [vmem:[#allocation11 + $0x400] sm:$0xff]
    %v2468 = vld [vmem:[#allocation11 + $0x408] sm:$0xff]
    %v2469 = vld [vmem:[#allocation11 + $0x410] sm:$0xf]
    %v2470 = vld [vmem:[#allocation11 + $0x414] sm:$0xff]
    %v2471 = vld [vmem:[#allocation11 + $0x41c] sm:$0xff]
    %v2472 = vld [vmem:[#allocation11 + $0x424] sm:$0xff]
    %v2473 = vld [vmem:[#allocation11 + $0x42c] sm:$0xff]
    %v2474 = vld [vmem:[#allocation11 + $0x434] sm:$0xf]
    %v2475 = vld [vmem:[#allocation11 + $0x438] sm:$0xff]
    %v2476 = vld [vmem:[#allocation11 + $0x440] sm:$0xff]
    %v2477 = vld [vmem:[#allocation11 + $0x448] sm:$0xff]
    %v2478 = vld [vmem:[#allocation11 + $0x450] sm:$0xff]
    %v2479 = vld [vmem:[#allocation11 + $0x458] sm:$0xf]
    %v2480 = vld [vmem:[#allocation11 + $0x45c] sm:$0xff]
    %v2481 = vld [vmem:[#allocation11 + $0x464] sm:$0xff]
    %v2482 = vld [vmem:[#allocation11 + $0x46c] sm:$0xff]
    %v2483 = vld [vmem:[#allocation11 + $0x474] sm:$0xff]
    %v2484 = vld [vmem:[#allocation11 + $0x47c] sm:$0xf]
    %v2485 = vpack.c.bf16 %v2321, %v2321
    %v2486 = vpack.c.bf16 %v2322, %v2322
    %s2487 = scalar_lea.vmem [#allocation19], 6
    %v2488 = vld [vmem:[%s2487] ss:$8 sm:$0xf]
    %v2489 = vld [vmem:[%s2487] ss:$8 sm:$0xf0]
    %v2490 = vor.u32 %v2488, %v2489
    %s2491 = scalar_lea.vmem [#allocation19], 70
    %v2492 = vld [vmem:[%s2491] ss:$8 sm:$0x1]
    %v2495 = vlaneseq
    %v2496 = vshrl.u32 %v2495, 7
    %v2497 = vsub.s32 0, %v2496
    %v2498 = vrot.slane %v2490, %v2497
    %v2499 = vlaneseq
    %v2500 = vshrl.u32 %v2499, 7
    %v2501 = vsub.s32 1, %v2500
    %v2502 = vrot.slane %v2490, %v2501
    %v2503 = vlaneseq
    %v2504 = vshrl.u32 %v2503, 7
    %v2505 = vsub.s32 2, %v2504
    %v2506 = vrot.slane %v2490, %v2505
    %v2507 = vlaneseq
    %v2508 = vshrl.u32 %v2507, 7
    %v2509 = vsub.s32 3, %v2508
    %v2510 = vrot.slane %v2490, %v2509
    %v2511 = vlaneseq
    %v2512 = vshrl.u32 %v2511, 7
    %v2513 = vsub.s32 4, %v2512
    %v2514 = vrot.slane %v2490, %v2513
    %v2515 = vlaneseq
    %v2516 = vshrl.u32 %v2515, 7
    %v2517 = vsub.s32 5, %v2516
    %v2518 = vrot.slane %v2490, %v2517
    %v2519 = vlaneseq
    %v2520 = vshrl.u32 %v2519, 7
    %v2521 = vsub.s32 6, %v2520
    %v2522 = vrot.slane %v2490, %v2521
    %v2523 = vlaneseq
    %v2524 = vshrl.u32 %v2523, 7
    %v2525 = vsub.s32 7, %v2524
    %v2526 = vrot.slane %v2490, %v2525
    %v2527 = vlaneseq
    %v2528 = vshrl.u32 %v2527, 7
    %v2529 = vsub.s32 0, %v2528
    %v2530 = vrot.slane %v2492, %v2529
    %v2700 = vunpack.c.l.b16 %v2325
    %v2701 = vunpack.c.h.b16 %v2325
    %v2702 = vunpack.c.l.b16 %v2326
    %v2703 = vunpack.c.h.b16 %v2326
    %v2704 = vunpack.c.l.b16 %v2327
    %v2705 = vunpack.c.h.b16 %v2327
    %v2706 = vunpack.c.l.b16 %v2328
    %v2707 = vunpack.c.h.b16 %v2328
    %v2708 = vunpack.c.l.b16 %v2329
    %v2709 = vunpack.c.l.b16 %v2330
    %v2710 = vunpack.c.h.b16 %v2330
    %v2711 = vunpack.c.l.b16 %v2331
    %v2712 = vunpack.c.h.b16 %v2331
    %v2713 = vunpack.c.l.b16 %v2332
    %v2714 = vunpack.c.h.b16 %v2332
    %v2715 = vunpack.c.l.b16 %v2333
    %v2716 = vunpack.c.h.b16 %v2333
    %v2717 = vunpack.c.l.b16 %v2334
    %v2718 = vunpack.c.l.b16 %v2335
    %v2719 = vunpack.c.h.b16 %v2335
    %v2720 = vunpack.c.l.b16 %v2336
    %v2721 = vunpack.c.h.b16 %v2336
    %v2722 = vunpack.c.l.b16 %v2337
    %v2723 = vunpack.c.h.b16 %v2337
    %v2724 = vunpack.c.l.b16 %v2338
    %v2725 = vunpack.c.h.b16 %v2338
    %v2726 = vunpack.c.l.b16 %v2339
    %v2727 = vunpack.c.l.b16 %v2340
    %v2728 = vunpack.c.h.b16 %v2340
    %v2729 = vunpack.c.l.b16 %v2341
    %v2730 = vunpack.c.h.b16 %v2341
    %v2731 = vunpack.c.l.b16 %v2342
    %v2732 = vunpack.c.h.b16 %v2342
    %v2733 = vunpack.c.l.b16 %v2343
    %v2734 = vunpack.c.h.b16 %v2343
    %v2735 = vunpack.c.l.b16 %v2344
    %v2736 = vunpack.c.l.b16 %v2345
    %v2737 = vunpack.c.h.b16 %v2345
    %v2738 = vunpack.c.l.b16 %v2346
    %v2739 = vunpack.c.h.b16 %v2346
    %v2740 = vunpack.c.l.b16 %v2347
    %v2741 = vunpack.c.h.b16 %v2347
    %v2742 = vunpack.c.l.b16 %v2348
    %v2743 = vunpack.c.h.b16 %v2348
    %v2744 = vunpack.c.l.b16 %v2349
    %v2745 = vunpack.c.l.b16 %v2350
    %v2746 = vunpack.c.h.b16 %v2350
    %v2747 = vunpack.c.l.b16 %v2351
    %v2748 = vunpack.c.h.b16 %v2351
    %v2749 = vunpack.c.l.b16 %v2352
    %v2750 = vunpack.c.h.b16 %v2352
    %v2751 = vunpack.c.l.b16 %v2353
    %v2752 = vunpack.c.h.b16 %v2353
    %v2753 = vunpack.c.l.b16 %v2354
    %v2754 = vunpack.c.l.b16 %v2355
    %v2755 = vunpack.c.h.b16 %v2355
    %v2756 = vunpack.c.l.b16 %v2356
    %v2757 = vunpack.c.h.b16 %v2356
    %v2758 = vunpack.c.l.b16 %v2357
    %v2759 = vunpack.c.h.b16 %v2357
    %v2760 = vunpack.c.l.b16 %v2358
    %v2761 = vunpack.c.h.b16 %v2358
    %v2762 = vunpack.c.l.b16 %v2359
    %v2763 = vunpack.c.l.b16 %v2360
    %v2764 = vunpack.c.h.b16 %v2360
    %v2765 = vunpack.c.l.b16 %v2361
    %v2766 = vunpack.c.h.b16 %v2361
    %v2767 = vunpack.c.l.b16 %v2362
    %v2768 = vunpack.c.h.b16 %v2362
    %v2769 = vunpack.c.l.b16 %v2363
    %v2770 = vunpack.c.h.b16 %v2363
    %v2771 = vunpack.c.l.b16 %v2364
    %v2772 = vunpack.c.l.b16 %v2365
    %v2773 = vunpack.c.h.b16 %v2365
    %v2774 = vunpack.c.l.b16 %v2366
    %v2775 = vunpack.c.h.b16 %v2366
    %v2776 = vunpack.c.l.b16 %v2367
    %v2777 = vunpack.c.h.b16 %v2367
    %v2778 = vunpack.c.l.b16 %v2368
    %v2779 = vunpack.c.h.b16 %v2368
    %v2780 = vunpack.c.l.b16 %v2369
    %v2781 = vunpack.c.l.b16 %v2370
    %v2782 = vunpack.c.h.b16 %v2370
    %v2783 = vunpack.c.l.b16 %v2371
    %v2784 = vunpack.c.h.b16 %v2371
    %v2785 = vunpack.c.l.b16 %v2372
    %v2786 = vunpack.c.h.b16 %v2372
    %v2787 = vunpack.c.l.b16 %v2373
    %v2788 = vunpack.c.h.b16 %v2373
    %v2789 = vunpack.c.l.b16 %v2374
    %v2790 = vunpack.c.l.b16 %v2375
    %v2791 = vunpack.c.h.b16 %v2375
    %v2792 = vunpack.c.l.b16 %v2376
    %v2793 = vunpack.c.h.b16 %v2376
    %v2794 = vunpack.c.l.b16 %v2377
    %v2795 = vunpack.c.h.b16 %v2377
    %v2796 = vunpack.c.l.b16 %v2378
    %v2797 = vunpack.c.h.b16 %v2378
    %v2798 = vunpack.c.l.b16 %v2379
    %v2799 = vunpack.c.l.b16 %v2380
    %v2800 = vunpack.c.h.b16 %v2380
    %v2801 = vunpack.c.l.b16 %v2381
    %v2802 = vunpack.c.h.b16 %v2381
    %v2803 = vunpack.c.l.b16 %v2382
    %v2804 = vunpack.c.h.b16 %v2382
    %v2805 = vunpack.c.l.b16 %v2383
    %v2806 = vunpack.c.h.b16 %v2383
    %v2807 = vunpack.c.l.b16 %v2384
    %v2808 = vunpack.c.l.b16 %v2385
    %v2809 = vunpack.c.h.b16 %v2385
    %v2810 = vunpack.c.l.b16 %v2386
    %v2811 = vunpack.c.h.b16 %v2386
    %v2812 = vunpack.c.l.b16 %v2387
    %v2813 = vunpack.c.h.b16 %v2387
    %v2814 = vunpack.c.l.b16 %v2388
    %v2815 = vunpack.c.h.b16 %v2388
    %v2816 = vunpack.c.l.b16 %v2389
    %v2817 = vunpack.c.l.b16 %v2390
    %v2818 = vunpack.c.h.b16 %v2390
    %v2819 = vunpack.c.l.b16 %v2391
    %v2820 = vunpack.c.h.b16 %v2391
    %v2821 = vunpack.c.l.b16 %v2392
    %v2822 = vunpack.c.h.b16 %v2392
    %v2823 = vunpack.c.l.b16 %v2393
    %v2824 = vunpack.c.h.b16 %v2393
    %v2825 = vunpack.c.l.b16 %v2394
    %v2826 = vunpack.c.l.b16 %v2395
    %v2827 = vunpack.c.h.b16 %v2395
    %v2828 = vunpack.c.l.b16 %v2396
    %v2829 = vunpack.c.h.b16 %v2396
    %v2830 = vunpack.c.l.b16 %v2397
    %v2831 = vunpack.c.h.b16 %v2397
    %v2832 = vunpack.c.l.b16 %v2398
    %v2833 = vunpack.c.h.b16 %v2398
    %v2834 = vunpack.c.l.b16 %v2399
    %v2835 = vunpack.c.l.b16 %v2400
    %v2836 = vunpack.c.h.b16 %v2400
    %v2837 = vunpack.c.l.b16 %v2401
    %v2838 = vunpack.c.h.b16 %v2401
    %v2839 = vunpack.c.l.b16 %v2402
    %v2840 = vunpack.c.h.b16 %v2402
    %v2841 = vunpack.c.l.b16 %v2403
    %v2842 = vunpack.c.h.b16 %v2403
    %v2843 = vunpack.c.l.b16 %v2404
    %v2844 = vunpack.c.l.b16 %v2405
    %v2845 = vunpack.c.h.b16 %v2405
    %v2846 = vunpack.c.l.b16 %v2406
    %v2847 = vunpack.c.h.b16 %v2406
    %v2848 = vunpack.c.l.b16 %v2407
    %v2849 = vunpack.c.h.b16 %v2407
    %v2850 = vunpack.c.l.b16 %v2408
    %v2851 = vunpack.c.h.b16 %v2408
    %v2852 = vunpack.c.l.b16 %v2409
    %v2853 = vunpack.c.l.b16 %v2410
    %v2854 = vunpack.c.h.b16 %v2410
    %v2855 = vunpack.c.l.b16 %v2411
    %v2856 = vunpack.c.h.b16 %v2411
    %v2857 = vunpack.c.l.b16 %v2412
    %v2858 = vunpack.c.h.b16 %v2412
    %v2859 = vunpack.c.l.b16 %v2413
    %v2860 = vunpack.c.h.b16 %v2413
    %v2861 = vunpack.c.l.b16 %v2414
    %v2862 = vunpack.c.l.b16 %v2415
    %v2863 = vunpack.c.h.b16 %v2415
    %v2864 = vunpack.c.l.b16 %v2416
    %v2865 = vunpack.c.h.b16 %v2416
    %v2866 = vunpack.c.l.b16 %v2417
    %v2867 = vunpack.c.h.b16 %v2417
    %v2868 = vunpack.c.l.b16 %v2418
    %v2869 = vunpack.c.h.b16 %v2418
    %v2870 = vunpack.c.l.b16 %v2419
    %v2871 = vunpack.c.l.b16 %v2420
    %v2872 = vunpack.c.h.b16 %v2420
    %v2873 = vunpack.c.l.b16 %v2421
    %v2874 = vunpack.c.h.b16 %v2421
    %v2875 = vunpack.c.l.b16 %v2422
    %v2876 = vunpack.c.h.b16 %v2422
    %v2877 = vunpack.c.l.b16 %v2423
    %v2878 = vunpack.c.h.b16 %v2423
    %v2879 = vunpack.c.l.b16 %v2424
    %v2880 = vunpack.c.l.b16 %v2425
    %v2881 = vunpack.c.h.b16 %v2425
    %v2882 = vunpack.c.l.b16 %v2426
    %v2883 = vunpack.c.h.b16 %v2426
    %v2884 = vunpack.c.l.b16 %v2427
    %v2885 = vunpack.c.h.b16 %v2427
    %v2886 = vunpack.c.l.b16 %v2428
    %v2887 = vunpack.c.h.b16 %v2428
    %v2888 = vunpack.c.l.b16 %v2429
    %v2889 = vunpack.c.l.b16 %v2430
    %v2890 = vunpack.c.h.b16 %v2430
    %v2891 = vunpack.c.l.b16 %v2431
    %v2892 = vunpack.c.h.b16 %v2431
    %v2893 = vunpack.c.l.b16 %v2432
    %v2894 = vunpack.c.h.b16 %v2432
    %v2895 = vunpack.c.l.b16 %v2433
    %v2896 = vunpack.c.h.b16 %v2433
    %v2897 = vunpack.c.l.b16 %v2434
    %v2898 = vunpack.c.l.b16 %v2435
    %v2899 = vunpack.c.h.b16 %v2435
    %v2900 = vunpack.c.l.b16 %v2436
    %v2901 = vunpack.c.h.b16 %v2436
    %v2902 = vunpack.c.l.b16 %v2437
    %v2903 = vunpack.c.h.b16 %v2437
    %v2904 = vunpack.c.l.b16 %v2438
    %v2905 = vunpack.c.h.b16 %v2438
    %v2906 = vunpack.c.l.b16 %v2439
    %v2907 = vunpack.c.l.b16 %v2440
    %v2908 = vunpack.c.h.b16 %v2440
    %v2909 = vunpack.c.l.b16 %v2441
    %v2910 = vunpack.c.h.b16 %v2441
    %v2911 = vunpack.c.l.b16 %v2442
    %v2912 = vunpack.c.h.b16 %v2442
    %v2913 = vunpack.c.l.b16 %v2443
    %v2914 = vunpack.c.h.b16 %v2443
    %v2915 = vunpack.c.l.b16 %v2444
    %v2916 = vunpack.c.l.b16 %v2445
    %v2917 = vunpack.c.h.b16 %v2445
    %v2918 = vunpack.c.l.b16 %v2446
    %v2919 = vunpack.c.h.b16 %v2446
    %v2920 = vunpack.c.l.b16 %v2447
    %v2921 = vunpack.c.h.b16 %v2447
    %v2922 = vunpack.c.l.b16 %v2448
    %v2923 = vunpack.c.h.b16 %v2448
    %v2924 = vunpack.c.l.b16 %v2449
    %v2925 = vunpack.c.l.b16 %v2450
    %v2926 = vunpack.c.h.b16 %v2450
    %v2927 = vunpack.c.l.b16 %v2451
    %v2928 = vunpack.c.h.b16 %v2451
    %v2929 = vunpack.c.l.b16 %v2452
    %v2930 = vunpack.c.h.b16 %v2452
    %v2931 = vunpack.c.l.b16 %v2453
    %v2932 = vunpack.c.h.b16 %v2453
    %v2933 = vunpack.c.l.b16 %v2454
    %v2934 = vunpack.c.l.b16 %v2455
    %v2935 = vunpack.c.h.b16 %v2455
    %v2936 = vunpack.c.l.b16 %v2456
    %v2937 = vunpack.c.h.b16 %v2456
    %v2938 = vunpack.c.l.b16 %v2457
    %v2939 = vunpack.c.h.b16 %v2457
    %v2940 = vunpack.c.l.b16 %v2458
    %v2941 = vunpack.c.h.b16 %v2458
    %v2942 = vunpack.c.l.b16 %v2459
    %v2943 = vunpack.c.l.b16 %v2460
    %v2944 = vunpack.c.h.b16 %v2460
    %v2945 = vunpack.c.l.b16 %v2461
    %v2946 = vunpack.c.h.b16 %v2461
    %v2947 = vunpack.c.l.b16 %v2462
    %v2948 = vunpack.c.h.b16 %v2462
    %v2949 = vunpack.c.l.b16 %v2463
    %v2950 = vunpack.c.h.b16 %v2463
    %v2951 = vunpack.c.l.b16 %v2464
    %v2952 = vunpack.c.l.b16 %v2465
    %v2953 = vunpack.c.h.b16 %v2465
    %v2954 = vunpack.c.l.b16 %v2466
    %v2955 = vunpack.c.h.b16 %v2466
    %v2956 = vunpack.c.l.b16 %v2467
    %v2957 = vunpack.c.h.b16 %v2467
    %v2958 = vunpack.c.l.b16 %v2468
    %v2959 = vunpack.c.h.b16 %v2468
    %v2960 = vunpack.c.l.b16 %v2469
    %v2961 = vunpack.c.l.b16 %v2470
    %v2962 = vunpack.c.h.b16 %v2470
    %v2963 = vunpack.c.l.b16 %v2471
    %v2964 = vunpack.c.h.b16 %v2471
    %v2965 = vunpack.c.l.b16 %v2472
    %v2966 = vunpack.c.h.b16 %v2472
    %v2967 = vunpack.c.l.b16 %v2473
    %v2968 = vunpack.c.h.b16 %v2473
    %v2969 = vunpack.c.l.b16 %v2474
    %v2970 = vunpack.c.l.b16 %v2475
    %v2971 = vunpack.c.h.b16 %v2475
    %v2972 = vunpack.c.l.b16 %v2476
    %v2973 = vunpack.c.h.b16 %v2476
    %v2974 = vunpack.c.l.b16 %v2477
    %v2975 = vunpack.c.h.b16 %v2477
    %v2976 = vunpack.c.l.b16 %v2478
    %v2977 = vunpack.c.h.b16 %v2478
    %v2978 = vunpack.c.l.b16 %v2479
    %v2979 = vunpack.c.l.b16 %v2480
    %v2980 = vunpack.c.h.b16 %v2480
    %v2981 = vunpack.c.l.b16 %v2481
    %v2982 = vunpack.c.h.b16 %v2481
    %v2983 = vunpack.c.l.b16 %v2482
    %v2984 = vunpack.c.h.b16 %v2482
    %v2985 = vunpack.c.l.b16 %v2483
    %v2986 = vunpack.c.h.b16 %v2483
    %v2987 = vunpack.c.l.b16 %v2484
    %v2988 = vpack.c.b16 %v2709, %v2700
    %v2989 = vpack.c.b16 %v2710, %v2701
    %v2990 = vpack.c.b16 %v2711, %v2702
    %v2991 = vpack.c.b16 %v2712, %v2703
    %v2992 = vpack.c.b16 %v2713, %v2704
    %v2993 = vpack.c.b16 %v2714, %v2705
    %v2994 = vpack.c.b16 %v2715, %v2706
    %v2995 = vpack.c.b16 %v2716, %v2707
    %v2996 = vpack.c.b16 %v2717, %v2708
    %v2997 = vpack.c.b16 %v2727, %v2718
    %v2998 = vpack.c.b16 %v2728, %v2719
    %v2999 = vpack.c.b16 %v2729, %v2720
    %v3000 = vpack.c.b16 %v2730, %v2721
    %v3001 = vpack.c.b16 %v2731, %v2722
    %v3002 = vpack.c.b16 %v2732, %v2723
    %v3003 = vpack.c.b16 %v2733, %v2724
    %v3004 = vpack.c.b16 %v2734, %v2725
    %v3005 = vpack.c.b16 %v2735, %v2726
    %v3006 = vpack.c.b16 %v2745, %v2736
    %v3007 = vpack.c.b16 %v2746, %v2737
    %v3008 = vpack.c.b16 %v2747, %v2738
    %v3009 = vpack.c.b16 %v2748, %v2739
    %v3010 = vpack.c.b16 %v2749, %v2740
    %v3011 = vpack.c.b16 %v2750, %v2741
    %v3012 = vpack.c.b16 %v2751, %v2742
    %v3013 = vpack.c.b16 %v2752, %v2743
    %v3014 = vpack.c.b16 %v2753, %v2744
    %v3015 = vpack.c.b16 %v2763, %v2754
    %v3016 = vpack.c.b16 %v2764, %v2755
    %v3017 = vpack.c.b16 %v2765, %v2756
    %v3018 = vpack.c.b16 %v2766, %v2757
    %v3019 = vpack.c.b16 %v2767, %v2758
    %v3020 = vpack.c.b16 %v2768, %v2759
    %v3021 = vpack.c.b16 %v2769, %v2760
    %v3022 = vpack.c.b16 %v2770, %v2761
    %v3023 = vpack.c.b16 %v2771, %v2762
    %v3024 = vpack.c.b16 %v2781, %v2772
    %v3025 = vpack.c.b16 %v2782, %v2773
    %v3026 = vpack.c.b16 %v2783, %v2774
    %v3027 = vpack.c.b16 %v2784, %v2775
    %v3028 = vpack.c.b16 %v2785, %v2776
    %v3029 = vpack.c.b16 %v2786, %v2777
    %v3030 = vpack.c.b16 %v2787, %v2778
    %v3031 = vpack.c.b16 %v2788, %v2779
    %v3032 = vpack.c.b16 %v2789, %v2780
    %v3033 = vpack.c.b16 %v2799, %v2790
    %v3034 = vpack.c.b16 %v2800, %v2791
    %v3035 = vpack.c.b16 %v2801, %v2792
    %v3036 = vpack.c.b16 %v2802, %v2793
    %v3037 = vpack.c.b16 %v2803, %v2794
    %v3038 = vpack.c.b16 %v2804, %v2795
    %v3039 = vpack.c.b16 %v2805, %v2796
    %v3040 = vpack.c.b16 %v2806, %v2797
    %v3041 = vpack.c.b16 %v2807, %v2798
    %v3042 = vpack.c.b16 %v2817, %v2808
    %v3043 = vpack.c.b16 %v2818, %v2809
    %v3044 = vpack.c.b16 %v2819, %v2810
    %v3045 = vpack.c.b16 %v2820, %v2811
    %v3046 = vpack.c.b16 %v2821, %v2812
    %v3047 = vpack.c.b16 %v2822, %v2813
    %v3048 = vpack.c.b16 %v2823, %v2814
    %v3049 = vpack.c.b16 %v2824, %v2815
    %v3050 = vpack.c.b16 %v2825, %v2816
    %v3051 = vpack.c.b16 %v2835, %v2826
    %v3052 = vpack.c.b16 %v2836, %v2827
    %v3053 = vpack.c.b16 %v2837, %v2828
    %v3054 = vpack.c.b16 %v2838, %v2829
    %v3055 = vpack.c.b16 %v2839, %v2830
    %v3056 = vpack.c.b16 %v2840, %v2831
    %v3057 = vpack.c.b16 %v2841, %v2832
    %v3058 = vpack.c.b16 %v2842, %v2833
    %v3059 = vpack.c.b16 %v2843, %v2834
    %v3060 = vpack.c.b16 %v2853, %v2844
    %v3061 = vpack.c.b16 %v2854, %v2845
    %v3062 = vpack.c.b16 %v2855, %v2846
    %v3063 = vpack.c.b16 %v2856, %v2847
    %v3064 = vpack.c.b16 %v2857, %v2848
    %v3065 = vpack.c.b16 %v2858, %v2849
    %v3066 = vpack.c.b16 %v2859, %v2850
    %v3067 = vpack.c.b16 %v2860, %v2851
    %v3068 = vpack.c.b16 %v2861, %v2852
    %v3069 = vpack.c.b16 %v2871, %v2862
    %v3070 = vpack.c.b16 %v2872, %v2863
    %v3071 = vpack.c.b16 %v2873, %v2864
    %v3072 = vpack.c.b16 %v2874, %v2865
    %v3073 = vpack.c.b16 %v2875, %v2866
    %v3074 = vpack.c.b16 %v2876, %v2867
    %v3075 = vpack.c.b16 %v2877, %v2868
    %v3076 = vpack.c.b16 %v2878, %v2869
    %v3077 = vpack.c.b16 %v2879, %v2870
    %v3078 = vpack.c.b16 %v2889, %v2880
    %v3079 = vpack.c.b16 %v2890, %v2881
    %v3080 = vpack.c.b16 %v2891, %v2882
    %v3081 = vpack.c.b16 %v2892, %v2883
    %v3082 = vpack.c.b16 %v2893, %v2884
    %v3083 = vpack.c.b16 %v2894, %v2885
    %v3084 = vpack.c.b16 %v2895, %v2886
    %v3085 = vpack.c.b16 %v2896, %v2887
    %v3086 = vpack.c.b16 %v2897, %v2888
    %v3087 = vpack.c.b16 %v2907, %v2898
    %v3088 = vpack.c.b16 %v2908, %v2899
    %v3089 = vpack.c.b16 %v2909, %v2900
    %v3090 = vpack.c.b16 %v2910, %v2901
    %v3091 = vpack.c.b16 %v2911, %v2902
    %v3092 = vpack.c.b16 %v2912, %v2903
    %v3093 = vpack.c.b16 %v2913, %v2904
    %v3094 = vpack.c.b16 %v2914, %v2905
    %v3095 = vpack.c.b16 %v2915, %v2906
    %v3096 = vpack.c.b16 %v2925, %v2916
    %v3097 = vpack.c.b16 %v2926, %v2917
    %v3098 = vpack.c.b16 %v2927, %v2918
    %v3099 = vpack.c.b16 %v2928, %v2919
    %v3100 = vpack.c.b16 %v2929, %v2920
    %v3101 = vpack.c.b16 %v2930, %v2921
    %v3102 = vpack.c.b16 %v2931, %v2922
    %v3103 = vpack.c.b16 %v2932, %v2923
    %v3104 = vpack.c.b16 %v2933, %v2924
    %v3105 = vpack.c.b16 %v2943, %v2934
    %v3106 = vpack.c.b16 %v2944, %v2935
    %v3107 = vpack.c.b16 %v2945, %v2936
    %v3108 = vpack.c.b16 %v2946, %v2937
    %v3109 = vpack.c.b16 %v2947, %v2938
    %v3110 = vpack.c.b16 %v2948, %v2939
    %v3111 = vpack.c.b16 %v2949, %v2940
    %v3112 = vpack.c.b16 %v2950, %v2941
    %v3113 = vpack.c.b16 %v2951, %v2942
    %v3114 = vpack.c.b16 %v2961, %v2952
    %v3115 = vpack.c.b16 %v2962, %v2953
    %v3116 = vpack.c.b16 %v2963, %v2954
    %v3117 = vpack.c.b16 %v2964, %v2955
    %v3118 = vpack.c.b16 %v2965, %v2956
    %v3119 = vpack.c.b16 %v2966, %v2957
    %v3120 = vpack.c.b16 %v2967, %v2958
    %v3121 = vpack.c.b16 %v2968, %v2959
    %v3122 = vpack.c.b16 %v2969, %v2960
    %v3123 = vpack.c.b16 %v2979, %v2970
    %v3124 = vpack.c.b16 %v2980, %v2971
    %v3125 = vpack.c.b16 %v2981, %v2972
    %v3126 = vpack.c.b16 %v2982, %v2973
    %v3127 = vpack.c.b16 %v2983, %v2974
    %v3128 = vpack.c.b16 %v2984, %v2975
    %v3129 = vpack.c.b16 %v2985, %v2976
    %v3130 = vpack.c.b16 %v2986, %v2977
    %v3131 = vpack.c.b16 %v2987, %v2978
    %3276 = vmatprep.subr.bf16.mxu0 %v2989
    %3277 = vmatpush1.bf16.msra.mxu0 %v2988
    %3278 = vmatprep.subr.bf16.mxu0 %v2998
    %3279 = vmatpush1.bf16.msra.mxu0 %v2997
    %3280 = vmatprep.subr.bf16.mxu0 %v3007
    %3281 = vmatpush1.bf16.msra.mxu0 %v3006
    %3282 = vmatprep.subr.bf16.mxu0 %v3016
    %3283 = vmatpush1.bf16.msra.mxu0 %v3015
    %3284 = vmatprep.subr.bf16.mxu0 %v3025
    %3285 = vmatpush1.bf16.msra.mxu0 %v3024
    %3286 = vmatprep.subr.bf16.mxu0 %v3034
    %3287 = vmatpush1.bf16.msra.mxu0 %v3033
    %3288 = vmatprep.subr.bf16.mxu0 %v3043
    %3289 = vmatpush1.bf16.msra.mxu0 %v3042
    %3290 = vmatprep.subr.bf16.mxu0 %v3052
    %3291 = vmatpush1.bf16.msra.mxu0 %v3051
    %3292 = vmatprep.subr.bf16.mxu0 %v3061
    %3293 = vmatpush1.bf16.msra.mxu0 %v3060
    %3294 = vmatprep.subr.bf16.mxu0 %v3070
    %3295 = vmatpush1.bf16.msra.mxu0 %v3069
    %3296 = vmatprep.subr.bf16.mxu0 %v3079
    %3297 = vmatpush1.bf16.msra.mxu0 %v3078
    %3298 = vmatprep.subr.bf16.mxu0 %v3088
    %3299 = vmatpush1.bf16.msra.mxu0 %v3087
    %3300 = vmatprep.subr.bf16.mxu0 %v3097
    %3301 = vmatpush1.bf16.msra.mxu0 %v3096
    %3302 = vmatprep.subr.bf16.mxu0 %v3106
    %3303 = vmatpush1.bf16.msra.mxu0 %v3105
    %3304 = vmatprep.subr.bf16.mxu0 %v3115
    %3305 = vmatpush1.bf16.msra.mxu0 %v3114
    %3306 = vmatprep.subr.bf16.mxu0 %v3124
    %3307 = vmatpush1.bf16.msra.mxu0 %v3123
    %3308 = vmatprep.mubr.bf16.mxu0 %v2486
    %3309 = vmatmul.mubr.bf16.gmra.mrb[0].mxu0 %v2485
    %v3310 = vpop.f32.mrb[0].mxu0
    %v3311 = vadd.f32 %v2498, %v3310
    %v3312 = vpop.f32.mrb[0].mxu0
    %v3313 = vadd.f32 %v2502, %v3312
    %v3314 = vpop.f32.mrb[0].mxu0
    %v3315 = vpop.f32.mrb[0].mxu0
    %3316 = vdwg.mxu0
    %3317 = vmatprep.subr.bf16.mxu0 %v2991
    %3318 = vmatpush1.bf16.msra.mxu0 %v2990
    %3319 = vmatprep.subr.bf16.mxu0 %v3000
    %3320 = vmatpush1.bf16.msra.mxu0 %v2999
    %3321 = vmatprep.subr.bf16.mxu0 %v3009
    %3322 = vmatpush1.bf16.msra.mxu0 %v3008
    %3323 = vmatprep.subr.bf16.mxu0 %v3018
    %3324 = vmatpush1.bf16.msra.mxu0 %v3017
    %3325 = vmatprep.subr.bf16.mxu0 %v3027
    %3326 = vmatpush1.bf16.msra.mxu0 %v3026
    %3327 = vmatprep.subr.bf16.mxu0 %v3036
    %3328 = vmatpush1.bf16.msra.mxu0 %v3035
    %3329 = vmatprep.subr.bf16.mxu0 %v3045
    %3330 = vmatpush1.bf16.msra.mxu0 %v3044
    %3331 = vmatprep.subr.bf16.mxu0 %v3054
    %3332 = vmatpush1.bf16.msra.mxu0 %v3053
    %3333 = vmatprep.subr.bf16.mxu0 %v3063
    %3334 = vmatpush1.bf16.msra.mxu0 %v3062
    %3335 = vmatprep.subr.bf16.mxu0 %v3072
    %3336 = vmatpush1.bf16.msra.mxu0 %v3071
    %3337 = vmatprep.subr.bf16.mxu0 %v3081
    %3338 = vmatpush1.bf16.msra.mxu0 %v3080
    %3339 = vmatprep.subr.bf16.mxu0 %v3090
    %3340 = vmatpush1.bf16.msra.mxu0 %v3089
    %3341 = vmatprep.subr.bf16.mxu0 %v3099
    %3342 = vmatpush1.bf16.msra.mxu0 %v3098
    %3343 = vmatprep.subr.bf16.mxu0 %v3108
    %3344 = vmatpush1.bf16.msra.mxu0 %v3107
    %3345 = vmatprep.subr.bf16.mxu0 %v3117
    %3346 = vmatpush1.bf16.msra.mxu0 %v3116
    %3347 = vmatprep.subr.bf16.mxu0 %v3126
    %3348 = vmatpush1.bf16.msra.mxu0 %v3125
    %3349 = vmatprep.mubr.bf16.mxu0 %v2486
    %3350 = vmatmul.mubr.bf16.gmra.mrb[0].mxu0 %v2485
    %v3351 = vpop.f32.mrb[0].mxu0
    %v3352 = vadd.f32 %v2506, %v3351
    %v3353 = vpop.f32.mrb[0].mxu0
    %v3354 = vadd.f32 %v2510, %v3353
    %v3355 = vpop.f32.mrb[0].mxu0
    %v3356 = vpop.f32.mrb[0].mxu0
    %3357 = vdwg.mxu0
    %3358 = vmatprep.subr.bf16.mxu0 %v2993
    %3359 = vmatpush1.bf16.msra.mxu0 %v2992
    %3360 = vmatprep.subr.bf16.mxu0 %v3002
    %3361 = vmatpush1.bf16.msra.mxu0 %v3001
    %3362 = vmatprep.subr.bf16.mxu0 %v3011
    %3363 = vmatpush1.bf16.msra.mxu0 %v3010
    %3364 = vmatprep.subr.bf16.mxu0 %v3020
    %3365 = vmatpush1.bf16.msra.mxu0 %v3019
    %3366 = vmatprep.subr.bf16.mxu0 %v3029
    %3367 = vmatpush1.bf16.msra.mxu0 %v3028
    %3368 = vmatprep.subr.bf16.mxu0 %v3038
    %3369 = vmatpush1.bf16.msra.mxu0 %v3037
    %3370 = vmatprep.subr.bf16.mxu0 %v3047
    %3371 = vmatpush1.bf16.msra.mxu0 %v3046
    %3372 = vmatprep.subr.bf16.mxu0 %v3056
    %3373 = vmatpush1.bf16.msra.mxu0 %v3055
    %3374 = vmatprep.subr.bf16.mxu0 %v3065
    %3375 = vmatpush1.bf16.msra.mxu0 %v3064
    %3376 = vmatprep.subr.bf16.mxu0 %v3074
    %3377 = vmatpush1.bf16.msra.mxu0 %v3073
    %3378 = vmatprep.subr.bf16.mxu0 %v3083
    %3379 = vmatpush1.bf16.msra.mxu0 %v3082
    %3380 = vmatprep.subr.bf16.mxu0 %v3092
    %3381 = vmatpush1.bf16.msra.mxu0 %v3091
    %3382 = vmatprep.subr.bf16.mxu0 %v3101
    %3383 = vmatpush1.bf16.msra.mxu0 %v3100
    %3384 = vmatprep.subr.bf16.mxu0 %v3110
    %3385 = vmatpush1.bf16.msra.mxu0 %v3109
    %3386 = vmatprep.subr.bf16.mxu0 %v3119
    %3387 = vmatpush1.bf16.msra.mxu0 %v3118
    %3388 = vmatprep.subr.bf16.mxu0 %v3128
    %3389 = vmatpush1.bf16.msra.mxu0 %v3127
    %3390 = vmatprep.mubr.bf16.mxu0 %v2486
    %3391 = vmatmul.mubr.bf16.gmra.mrb[0].mxu0 %v2485
    %v3392 = vpop.f32.mrb[0].mxu0
    %v3393 = vadd.f32 %v2514, %v3392
    %v3394 = vpop.f32.mrb[0].mxu0
    %v3395 = vadd.f32 %v2518, %v3394
    %v3396 = vpop.f32.mrb[0].mxu0
    %v3397 = vpop.f32.mrb[0].mxu0
    %3398 = vdwg.mxu0
    %3399 = vmatprep.subr.bf16.mxu0 %v2995
    %3400 = vmatpush1.bf16.msra.mxu0 %v2994
    %3401 = vmatprep.subr.bf16.mxu0 %v3004
    %3402 = vmatpush1.bf16.msra.mxu0 %v3003
    %3403 = vmatprep.subr.bf16.mxu0 %v3013
    %3404 = vmatpush1.bf16.msra.mxu0 %v3012
    %3405 = vmatprep.subr.bf16.mxu0 %v3022
    %3406 = vmatpush1.bf16.msra.mxu0 %v3021
    %3407 = vmatprep.subr.bf16.mxu0 %v3031
    %3408 = vmatpush1.bf16.msra.mxu0 %v3030
    %3409 = vmatprep.subr.bf16.mxu0 %v3040
    %3410 = vmatpush1.bf16.msra.mxu0 %v3039
    %3411 = vmatprep.subr.bf16.mxu0 %v3049
    %3412 = vmatpush1.bf16.msra.mxu0 %v3048
    %3413 = vmatprep.subr.bf16.mxu0 %v3058
    %3414 = vmatpush1.bf16.msra.mxu0 %v3057
    %3415 = vmatprep.subr.bf16.mxu0 %v3067
    %3416 = vmatpush1.bf16.msra.mxu0 %v3066
    %3417 = vmatprep.subr.bf16.mxu0 %v3076
    %3418 = vmatpush1.bf16.msra.mxu0 %v3075
    %3419 = vmatprep.subr.bf16.mxu0 %v3085
    %3420 = vmatpush1.bf16.msra.mxu0 %v3084
    %3421 = vmatprep.subr.bf16.mxu0 %v3094
    %3422 = vmatpush1.bf16.msra.mxu0 %v3093
    %3423 = vmatprep.subr.bf16.mxu0 %v3103
    %3424 = vmatpush1.bf16.msra.mxu0 %v3102
    %3425 = vmatprep.subr.bf16.mxu0 %v3112
    %3426 = vmatpush1.bf16.msra.mxu0 %v3111
    %3427 = vmatprep.subr.bf16.mxu0 %v3121
    %3428 = vmatpush1.bf16.msra.mxu0 %v3120
    %3429 = vmatprep.subr.bf16.mxu0 %v3130
    %3430 = vmatpush1.bf16.msra.mxu0 %v3129
    %3431 = vmatprep.mubr.bf16.mxu0 %v2486
    %3432 = vmatmul.mubr.bf16.gmra.mrb[0].mxu0 %v2485
    %v3433 = vpop.f32.mrb[0].mxu0
    %v3434 = vadd.f32 %v2522, %v3433
    %v3435 = vpop.f32.mrb[0].mxu0
    %v3436 = vadd.f32 %v2526, %v3435
    %v3437 = vpop.f32.mrb[0].mxu0
    %v3438 = vpop.f32.mrb[0].mxu0
    %3439 = vdwg.mxu0
    %3440 = vmatprep.subr.bf16.mxu0 0
    %3441 = vmatpush1.bf16.msra.mxu0 %v2996
    %3442 = vmatprep.subr.bf16.mxu0 0
    %3443 = vmatpush1.bf16.msra.mxu0 %v3005
    %3444 = vmatprep.subr.bf16.mxu0 0
    %3445 = vmatpush1.bf16.msra.mxu0 %v3014
    %3446 = vmatprep.subr.bf16.mxu0 0
    %3447 = vmatpush1.bf16.msra.mxu0 %v3023
    %3448 = vmatprep.subr.bf16.mxu0 0
    %3449 = vmatpush1.bf16.msra.mxu0 %v3032
    %3450 = vmatprep.subr.bf16.mxu0 0
    %3451 = vmatpush1.bf16.msra.mxu0 %v3041
    %3452 = vmatprep.subr.bf16.mxu0 0
    %3453 = vmatpush1.bf16.msra.mxu0 %v3050
    %3454 = vmatprep.subr.bf16.mxu0 0
    %3455 = vmatpush1.bf16.msra.mxu0 %v3059
    %3456 = vmatprep.subr.bf16.mxu0 0
    %3457 = vmatpush1.bf16.msra.mxu0 %v3068
    %3458 = vmatprep.subr.bf16.mxu0 0
    %3459 = vmatpush1.bf16.msra.mxu0 %v3077
    %3460 = vmatprep.subr.bf16.mxu0 0
    %3461 = vmatpush1.bf16.msra.mxu0 %v3086
    %3462 = vmatprep.subr.bf16.mxu0 0
    %3463 = vmatpush1.bf16.msra.mxu0 %v3095
    %3464 = vmatprep.subr.bf16.mxu0 0
    %3465 = vmatpush1.bf16.msra.mxu0 %v3104
    %3466 = vmatprep.subr.bf16.mxu0 0
    %3467 = vmatpush1.bf16.msra.mxu0 %v3113
    %3468 = vmatprep.subr.bf16.mxu0 0
    %3469 = vmatpush1.bf16.msra.mxu0 %v3122
    %3470 = vmatprep.subr.bf16.mxu0 0
    %3471 = vmatpush1.bf16.msra.mxu0 %v3131
    %3472 = vmatprep.mubr.bf16.mxu0 %v2486
    %3473 = vmatmul.mubr.bf16.gmra.mrb[0].mxu0 %v2485
    %v3474 = vpop.f32.mrb[0].mxu0
    %v3475 = vadd.f32 %v2530, %v3474
    %v3476 = vpop.f32.mrb[0].mxu0
    %v3477 = vpop.f32.mrb[0].mxu0
    %v3478 = vpop.f32.mrb[0].mxu0
    %3479 = vdwg.mxu0
    %v3480 = vadd.f32 %v3311, %v3313
    %v3481 = vadd.f32 %v3480, %v3352
    %v3482 = vadd.f32 %v3481, %v3354
    %3483 = vadd.xlane.f32.xlu0 %v3482
    %v3484 = vpop.xlane.xlu0 %3483
    %v3485 = vmul.f32 %v3484, %v1713
    %v3486 = vsub.f32 %v3311, %v3485
    %v3487 = vsub.f32 %v3313, %v3485
    %v3488 = vsub.f32 %v3352, %v3485
    %v3489 = vsub.f32 %v3354, %v3485
    %v3490 = vmul.f32 %v3486, %v3486
    %v3491 = vmul.f32 %v3487, %v3487
    %v3492 = vmul.f32 %v3488, %v3488
    %v3493 = vmul.f32 %v3489, %v3489
    %v3494 = vadd.f32 %v3490, %v3491
    %v3495 = vadd.f32 %v3494, %v3492
    %v3496 = vadd.f32 %v3495, %v3493
    %3497 = vadd.xlane.f32.xlu0 %v3496
    %v3498 = vpop.xlane.xlu0 %3497
    %v3499 = vmul.f32 %v3498, %v1713
    %v3500 = vadd.f32 %v3499, 1e-05
    %v3501 = vrsqrt.pop %v3500
    %v3502 = vmul.f32 %v3486, %v3501
    %v3503 = vmul.f32 %v3487, %v3501
    %v3504 = vmul.f32 %v3488, %v3501
    %v3505 = vmul.f32 %v3489, %v3501
    %s3506 = scalar_lea.vmem [#allocation19], 7
    %v3507 = vld [vmem:[%s3506] ss:$8 sm:$0xf]
    %v3509 = vlaneseq
    %v3510 = vshrl.u32 %v3509, 7
    %v3511 = vsub.s32 0, %v3510
    %v3512 = vrot.slane %v3507, %v3511
    %v3513 = vlaneseq
    %v3514 = vshrl.u32 %v3513, 7
    %v3515 = vsub.s32 1, %v3514
    %v3516 = vrot.slane %v3507, %v3515
    %v3517 = vlaneseq
    %v3518 = vshrl.u32 %v3517, 7
    %v3519 = vsub.s32 2, %v3518
    %v3520 = vrot.slane %v3507, %v3519
    %v3521 = vlaneseq
    %v3522 = vshrl.u32 %v3521, 7
    %v3523 = vsub.s32 3, %v3522
    %v3524 = vrot.slane %v3507, %v3523
    %v3529 = vmul.f32 %v3502, %v3512
    %v3530 = vmul.f32 %v3503, %v3516
    %v3531 = vmul.f32 %v3504, %v3520
    %v3532 = vmul.f32 %v3505, %v3524
    %s3533 = scalar_lea.vmem [#allocation19], 72
    %v3534 = vld [vmem:[%s3533] ss:$8 sm:$0xf]
    %v3536 = vlaneseq
    %v3537 = vshrl.u32 %v3536, 7
    %v3538 = vsub.s32 0, %v3537
    %v3539 = vrot.slane %v3534, %v3538
    %v3540 = vlaneseq
    %v3541 = vshrl.u32 %v3540, 7
    %v3542 = vsub.s32 1, %v3541
    %v3543 = vrot.slane %v3534, %v3542
    %v3544 = vlaneseq
    %v3545 = vshrl.u32 %v3544, 7
    %v3546 = vsub.s32 2, %v3545
    %v3547 = vrot.slane %v3534, %v3546
    %v3548 = vlaneseq
    %v3549 = vshrl.u32 %v3548, 7
    %v3550 = vsub.s32 3, %v3549
    %v3551 = vrot.slane %v3534, %v3550
    %v3556 = vadd.f32 %v3529, %v3539
    %v3557 = vadd.f32 %v3530, %v3543
    %v3558 = vadd.f32 %v3531, %v3547
    %v3559 = vadd.f32 %v3532, %v3551
    %v3560 = vmax.f32 %v3556, 0.0
    %v3561 = vmax.f32 %v3557, 0.0
    %v3562 = vmax.f32 %v3558, 0.0
    %v3563 = vmax.f32 %v3559, 0.0
    %v3564 = vld [vmem:[#allocation13] sm:$0xff]
    %v3565 = vld [vmem:[#allocation13 + $0x8] sm:$0xff]
    %v3566 = vld [vmem:[#allocation13 + $0x10] sm:$0xff]
    %v3567 = vld [vmem:[#allocation13 + $0x18] sm:$0xff]
    %v3568 = vld [vmem:[#allocation13 + $0x20] sm:$0xff]
    %v3569 = vld [vmem:[#allocation13 + $0x28] sm:$0xff]
    %v3570 = vld [vmem:[#allocation13 + $0x30] sm:$0xff]
    %v3571 = vld [vmem:[#allocation13 + $0x38] sm:$0xff]
    %v3572 = vld [vmem:[#allocation13 + $0x40] sm:$0xff]
    %v3573 = vld [vmem:[#allocation13 + $0x48] sm:$0xff]
    %v3574 = vld [vmem:[#allocation13 + $0x50] sm:$0xff]
    %v3575 = vld [vmem:[#allocation13 + $0x58] sm:$0xff]
    %v3576 = vld [vmem:[#allocation13 + $0x60] sm:$0xff]
    %v3577 = vld [vmem:[#allocation13 + $0x68] sm:$0xff]
    %v3578 = vld [vmem:[#allocation13 + $0x70] sm:$0xff]
    %v3579 = vld [vmem:[#allocation13 + $0x78] sm:$0xff]
    %v3580 = vld [vmem:[#allocation13 + $0x80] sm:$0xff]
    %v3581 = vld [vmem:[#allocation13 + $0x88] sm:$0xff]
    %v3582 = vld [vmem:[#allocation13 + $0x90] sm:$0xff]
    %v3583 = vld [vmem:[#allocation13 + $0x98] sm:$0xff]
    %v3584 = vld [vmem:[#allocation13 + $0xa0] sm:$0xff]
    %v3585 = vld [vmem:[#allocation13 + $0xa8] sm:$0xff]
    %v3586 = vld [vmem:[#allocation13 + $0xb0] sm:$0xff]
    %v3587 = vld [vmem:[#allocation13 + $0xb8] sm:$0xff]
    %v3588 = vld [vmem:[#allocation13 + $0xc0] sm:$0xff]
    %v3589 = vld [vmem:[#allocation13 + $0xc8] sm:$0xff]
    %v3590 = vld [vmem:[#allocation13 + $0xd0] sm:$0xff]
    %v3591 = vld [vmem:[#allocation13 + $0xd8] sm:$0xff]
    %v3592 = vld [vmem:[#allocation13 + $0xe0] sm:$0xff]
    %v3593 = vld [vmem:[#allocation13 + $0xe8] sm:$0xff]
    %v3594 = vld [vmem:[#allocation13 + $0xf0] sm:$0xff]
    %v3595 = vld [vmem:[#allocation13 + $0xf8] sm:$0xff]
    %v3596 = vld [vmem:[#allocation13 + $0x100] sm:$0xff]
    %v3597 = vld [vmem:[#allocation13 + $0x108] sm:$0xff]
    %v3598 = vld [vmem:[#allocation13 + $0x110] sm:$0xff]
    %v3599 = vld [vmem:[#allocation13 + $0x118] sm:$0xff]
    %v3600 = vld [vmem:[#allocation13 + $0x120] sm:$0xff]
    %v3601 = vld [vmem:[#allocation13 + $0x128] sm:$0xff]
    %v3602 = vld [vmem:[#allocation13 + $0x130] sm:$0xff]
    %v3603 = vld [vmem:[#allocation13 + $0x138] sm:$0xff]
    %v3604 = vld [vmem:[#allocation13 + $0x140] sm:$0xff]
    %v3605 = vld [vmem:[#allocation13 + $0x148] sm:$0xff]
    %v3606 = vld [vmem:[#allocation13 + $0x150] sm:$0xff]
    %v3607 = vld [vmem:[#allocation13 + $0x158] sm:$0xff]
    %v3608 = vld [vmem:[#allocation13 + $0x160] sm:$0xff]
    %v3609 = vld [vmem:[#allocation13 + $0x168] sm:$0xff]
    %v3610 = vld [vmem:[#allocation13 + $0x170] sm:$0xff]
    %v3611 = vld [vmem:[#allocation13 + $0x178] sm:$0xff]
    %v3612 = vld [vmem:[#allocation13 + $0x180] sm:$0xff]
    %v3613 = vld [vmem:[#allocation13 + $0x188] sm:$0xff]
    %v3614 = vld [vmem:[#allocation13 + $0x190] sm:$0xff]
    %v3615 = vld [vmem:[#allocation13 + $0x198] sm:$0xff]
    %v3616 = vld [vmem:[#allocation13 + $0x1a0] sm:$0xff]
    %v3617 = vld [vmem:[#allocation13 + $0x1a8] sm:$0xff]
    %v3618 = vld [vmem:[#allocation13 + $0x1b0] sm:$0xff]
    %v3619 = vld [vmem:[#allocation13 + $0x1b8] sm:$0xff]
    %v3620 = vld [vmem:[#allocation13 + $0x1c0] sm:$0xff]
    %v3621 = vld [vmem:[#allocation13 + $0x1c8] sm:$0xff]
    %v3622 = vld [vmem:[#allocation13 + $0x1d0] sm:$0xff]
    %v3623 = vld [vmem:[#allocation13 + $0x1d8] sm:$0xff]
    %v3624 = vld [vmem:[#allocation13 + $0x1e0] sm:$0xff]
    %v3625 = vld [vmem:[#allocation13 + $0x1e8] sm:$0xff]
    %v3626 = vld [vmem:[#allocation13 + $0x1f0] sm:$0xff]
    %v3627 = vld [vmem:[#allocation13 + $0x1f8] sm:$0xff]
    %v3628 = vld [vmem:[#allocation13 + $0x200] sm:$0xff]
    %v3629 = vld [vmem:[#allocation13 + $0x208] sm:$0xff]
    %v3630 = vld [vmem:[#allocation13 + $0x210] sm:$0xff]
    %v3631 = vld [vmem:[#allocation13 + $0x218] sm:$0xff]
    %v3632 = vld [vmem:[#allocation13 + $0x220] sm:$0xff]
    %v3633 = vld [vmem:[#allocation13 + $0x228] sm:$0xff]
    %v3634 = vld [vmem:[#allocation13 + $0x230] sm:$0xff]
    %v3635 = vld [vmem:[#allocation13 + $0x238] sm:$0xff]
    %v3636 = vld [vmem:[#allocation13 + $0x240] sm:$0xff]
    %v3637 = vld [vmem:[#allocation13 + $0x248] sm:$0xff]
    %v3638 = vld [vmem:[#allocation13 + $0x250] sm:$0xff]
    %v3639 = vld [vmem:[#allocation13 + $0x258] sm:$0xff]
    %v3640 = vld [vmem:[#allocation13 + $0x260] sm:$0xff]
    %v3641 = vld [vmem:[#allocation13 + $0x268] sm:$0xff]
    %v3642 = vld [vmem:[#allocation13 + $0x270] sm:$0xff]
    %v3643 = vld [vmem:[#allocation13 + $0x278] sm:$0xff]
    %v3644 = vld [vmem:[#allocation13 + $0x280] sm:$0xff]
    %v3645 = vld [vmem:[#allocation13 + $0x288] sm:$0xff]
    %v3646 = vld [vmem:[#allocation13 + $0x290] sm:$0xff]
    %v3647 = vld [vmem:[#allocation13 + $0x298] sm:$0xff]
    %v3648 = vld [vmem:[#allocation13 + $0x2a0] sm:$0xff]
    %v3649 = vld [vmem:[#allocation13 + $0x2a8] sm:$0xff]
    %v3650 = vld [vmem:[#allocation13 + $0x2b0] sm:$0xff]
    %v3651 = vld [vmem:[#allocation13 + $0x2b8] sm:$0xff]
    %v3652 = vld [vmem:[#allocation13 + $0x2c0] sm:$0xff]
    %v3653 = vld [vmem:[#allocation13 + $0x2c8] sm:$0xff]
    %v3654 = vld [vmem:[#allocation13 + $0x2d0] sm:$0xff]
    %v3655 = vld [vmem:[#allocation13 + $0x2d8] sm:$0xff]
    %v3656 = vld [vmem:[#allocation13 + $0x2e0] sm:$0xff]
    %v3657 = vld [vmem:[#allocation13 + $0x2e8] sm:$0xff]
    %v3658 = vld [vmem:[#allocation13 + $0x2f0] sm:$0xff]
    %v3659 = vld [vmem:[#allocation13 + $0x2f8] sm:$0xff]
    %v3660 = vld [vmem:[#allocation13 + $0x300] sm:$0xff]
    %v3661 = vld [vmem:[#allocation13 + $0x308] sm:$0xff]
    %v3662 = vld [vmem:[#allocation13 + $0x310] sm:$0xff]
    %v3663 = vld [vmem:[#allocation13 + $0x318] sm:$0xff]
    %v3664 = vld [vmem:[#allocation13 + $0x320] sm:$0xff]
    %v3665 = vld [vmem:[#allocation13 + $0x328] sm:$0xff]
    %v3666 = vld [vmem:[#allocation13 + $0x330] sm:$0xff]
    %v3667 = vld [vmem:[#allocation13 + $0x338] sm:$0xff]
    %v3668 = vld [vmem:[#allocation13 + $0x340] sm:$0xff]
    %v3669 = vld [vmem:[#allocation13 + $0x348] sm:$0xff]
    %v3670 = vld [vmem:[#allocation13 + $0x350] sm:$0xff]
    %v3671 = vld [vmem:[#allocation13 + $0x358] sm:$0xff]
    %v3672 = vld [vmem:[#allocation13 + $0x360] sm:$0xff]
    %v3673 = vld [vmem:[#allocation13 + $0x368] sm:$0xff]
    %v3674 = vld [vmem:[#allocation13 + $0x370] sm:$0xff]
    %v3675 = vld [vmem:[#allocation13 + $0x378] sm:$0xff]
    %v3676 = vld [vmem:[#allocation13 + $0x380] sm:$0xff]
    %v3677 = vld [vmem:[#allocation13 + $0x388] sm:$0xff]
    %v3678 = vld [vmem:[#allocation13 + $0x390] sm:$0xff]
    %v3679 = vld [vmem:[#allocation13 + $0x398] sm:$0xff]
    %v3680 = vld [vmem:[#allocation13 + $0x3a0] sm:$0xff]
    %v3681 = vld [vmem:[#allocation13 + $0x3a8] sm:$0xff]
    %v3682 = vld [vmem:[#allocation13 + $0x3b0] sm:$0xff]
    %v3683 = vld [vmem:[#allocation13 + $0x3b8] sm:$0xff]
    %v3684 = vld [vmem:[#allocation13 + $0x3c0] sm:$0xff]
    %v3685 = vld [vmem:[#allocation13 + $0x3c8] sm:$0xff]
    %v3686 = vld [vmem:[#allocation13 + $0x3d0] sm:$0xff]
    %v3687 = vld [vmem:[#allocation13 + $0x3d8] sm:$0xff]
    %v3688 = vld [vmem:[#allocation13 + $0x3e0] sm:$0xff]
    %v3689 = vld [vmem:[#allocation13 + $0x3e8] sm:$0xff]
    %v3690 = vld [vmem:[#allocation13 + $0x3f0] sm:$0xff]
    %v3691 = vld [vmem:[#allocation13 + $0x3f8] sm:$0xff]
    %v3692 = vpack.c.bf16 %v3560, %v3560
    %v3693 = vpack.c.bf16 %v3561, %v3561
    %v3694 = vpack.c.bf16 %v3562, %v3562
    %v3695 = vpack.c.bf16 %v3563, %v3563
    %s3696 = scalar_lea.vmem [#allocation19], 73
    %v3697 = vld [vmem:[%s3696] ss:$8 sm:$0xf]
    %v3699 = vlaneseq
    %v3700 = vshrl.u32 %v3699, 7
    %v3701 = vsub.s32 0, %v3700
    %v3702 = vrot.slane %v3697, %v3701
    %v3703 = vlaneseq
    %v3704 = vshrl.u32 %v3703, 7
    %v3705 = vsub.s32 1, %v3704
    %v3706 = vrot.slane %v3697, %v3705
    %v3707 = vlaneseq
    %v3708 = vshrl.u32 %v3707, 7
    %v3709 = vsub.s32 2, %v3708
    %v3710 = vrot.slane %v3697, %v3709
    %v3711 = vlaneseq
    %v3712 = vshrl.u32 %v3711, 7
    %v3713 = vsub.s32 3, %v3712
    %v3714 = vrot.slane %v3697, %v3713
    %v3847 = vunpack.c.l.b16 %v3564
    %v3848 = vunpack.c.h.b16 %v3564
    %v3849 = vunpack.c.l.b16 %v3565
    %v3850 = vunpack.c.h.b16 %v3565
    %v3851 = vunpack.c.l.b16 %v3566
    %v3852 = vunpack.c.h.b16 %v3566
    %v3853 = vunpack.c.l.b16 %v3567
    %v3854 = vunpack.c.h.b16 %v3567
    %v3855 = vunpack.c.l.b16 %v3568
    %v3856 = vunpack.c.h.b16 %v3568
    %v3857 = vunpack.c.l.b16 %v3569
    %v3858 = vunpack.c.h.b16 %v3569
    %v3859 = vunpack.c.l.b16 %v3570
    %v3860 = vunpack.c.h.b16 %v3570
    %v3861 = vunpack.c.l.b16 %v3571
    %v3862 = vunpack.c.h.b16 %v3571
    %v3863 = vunpack.c.l.b16 %v3572
    %v3864 = vunpack.c.h.b16 %v3572
    %v3865 = vunpack.c.l.b16 %v3573
    %v3866 = vunpack.c.h.b16 %v3573
    %v3867 = vunpack.c.l.b16 %v3574
    %v3868 = vunpack.c.h.b16 %v3574
    %v3869 = vunpack.c.l.b16 %v3575
    %v3870 = vunpack.c.h.b16 %v3575
    %v3871 = vunpack.c.l.b16 %v3576
    %v3872 = vunpack.c.h.b16 %v3576
    %v3873 = vunpack.c.l.b16 %v3577
    %v3874 = vunpack.c.h.b16 %v3577
    %v3875 = vunpack.c.l.b16 %v3578
    %v3876 = vunpack.c.h.b16 %v3578
    %v3877 = vunpack.c.l.b16 %v3579
    %v3878 = vunpack.c.h.b16 %v3579
    %v3879 = vunpack.c.l.b16 %v3580
    %v3880 = vunpack.c.h.b16 %v3580
    %v3881 = vunpack.c.l.b16 %v3581
    %v3882 = vunpack.c.h.b16 %v3581
    %v3883 = vunpack.c.l.b16 %v3582
    %v3884 = vunpack.c.h.b16 %v3582
    %v3885 = vunpack.c.l.b16 %v3583
    %v3886 = vunpack.c.h.b16 %v3583
    %v3887 = vunpack.c.l.b16 %v3584
    %v3888 = vunpack.c.h.b16 %v3584
    %v3889 = vunpack.c.l.b16 %v3585
    %v3890 = vunpack.c.h.b16 %v3585
    %v3891 = vunpack.c.l.b16 %v3586
    %v3892 = vunpack.c.h.b16 %v3586
    %v3893 = vunpack.c.l.b16 %v3587
    %v3894 = vunpack.c.h.b16 %v3587
    %v3895 = vunpack.c.l.b16 %v3588
    %v3896 = vunpack.c.h.b16 %v3588
    %v3897 = vunpack.c.l.b16 %v3589
    %v3898 = vunpack.c.h.b16 %v3589
    %v3899 = vunpack.c.l.b16 %v3590
    %v3900 = vunpack.c.h.b16 %v3590
    %v3901 = vunpack.c.l.b16 %v3591
    %v3902 = vunpack.c.h.b16 %v3591
    %v3903 = vunpack.c.l.b16 %v3592
    %v3904 = vunpack.c.h.b16 %v3592
    %v3905 = vunpack.c.l.b16 %v3593
    %v3906 = vunpack.c.h.b16 %v3593
    %v3907 = vunpack.c.l.b16 %v3594
    %v3908 = vunpack.c.h.b16 %v3594
    %v3909 = vunpack.c.l.b16 %v3595
    %v3910 = vunpack.c.h.b16 %v3595
    %v3911 = vunpack.c.l.b16 %v3596
    %v3912 = vunpack.c.h.b16 %v3596
    %v3913 = vunpack.c.l.b16 %v3597
    %v3914 = vunpack.c.h.b16 %v3597
    %v3915 = vunpack.c.l.b16 %v3598
    %v3916 = vunpack.c.h.b16 %v3598
    %v3917 = vunpack.c.l.b16 %v3599
    %v3918 = vunpack.c.h.b16 %v3599
    %v3919 = vunpack.c.l.b16 %v3600
    %v3920 = vunpack.c.h.b16 %v3600
    %v3921 = vunpack.c.l.b16 %v3601
    %v3922 = vunpack.c.h.b16 %v3601
    %v3923 = vunpack.c.l.b16 %v3602
    %v3924 = vunpack.c.h.b16 %v3602
    %v3925 = vunpack.c.l.b16 %v3603
    %v3926 = vunpack.c.h.b16 %v3603
    %v3927 = vunpack.c.l.b16 %v3604
    %v3928 = vunpack.c.h.b16 %v3604
    %v3929 = vunpack.c.l.b16 %v3605
    %v3930 = vunpack.c.h.b16 %v3605
    %v3931 = vunpack.c.l.b16 %v3606
    %v3932 = vunpack.c.h.b16 %v3606
    %v3933 = vunpack.c.l.b16 %v3607
    %v3934 = vunpack.c.h.b16 %v3607
    %v3935 = vunpack.c.l.b16 %v3608
    %v3936 = vunpack.c.h.b16 %v3608
    %v3937 = vunpack.c.l.b16 %v3609
    %v3938 = vunpack.c.h.b16 %v3609
    %v3939 = vunpack.c.l.b16 %v3610
    %v3940 = vunpack.c.h.b16 %v3610
    %v3941 = vunpack.c.l.b16 %v3611
    %v3942 = vunpack.c.h.b16 %v3611
    %v3943 = vunpack.c.l.b16 %v3612
    %v3944 = vunpack.c.h.b16 %v3612
    %v3945 = vunpack.c.l.b16 %v3613
    %v3946 = vunpack.c.h.b16 %v3613
    %v3947 = vunpack.c.l.b16 %v3614
    %v3948 = vunpack.c.h.b16 %v3614
    %v3949 = vunpack.c.l.b16 %v3615
    %v3950 = vunpack.c.h.b16 %v3615
    %v3951 = vunpack.c.l.b16 %v3616
    %v3952 = vunpack.c.h.b16 %v3616
    %v3953 = vunpack.c.l.b16 %v3617
    %v3954 = vunpack.c.h.b16 %v3617
    %v3955 = vunpack.c.l.b16 %v3618
    %v3956 = vunpack.c.h.b16 %v3618
    %v3957 = vunpack.c.l.b16 %v3619
    %v3958 = vunpack.c.h.b16 %v3619
    %v3959 = vunpack.c.l.b16 %v3620
    %v3960 = vunpack.c.h.b16 %v3620
    %v3961 = vunpack.c.l.b16 %v3621
    %v3962 = vunpack.c.h.b16 %v3621
    %v3963 = vunpack.c.l.b16 %v3622
    %v3964 = vunpack.c.h.b16 %v3622
    %v3965 = vunpack.c.l.b16 %v3623
    %v3966 = vunpack.c.h.b16 %v3623
    %v3967 = vunpack.c.l.b16 %v3624
    %v3968 = vunpack.c.h.b16 %v3624
    %v3969 = vunpack.c.l.b16 %v3625
    %v3970 = vunpack.c.h.b16 %v3625
    %v3971 = vunpack.c.l.b16 %v3626
    %v3972 = vunpack.c.h.b16 %v3626
    %v3973 = vunpack.c.l.b16 %v3627
    %v3974 = vunpack.c.h.b16 %v3627
    %v3975 = vunpack.c.l.b16 %v3628
    %v3976 = vunpack.c.h.b16 %v3628
    %v3977 = vunpack.c.l.b16 %v3629
    %v3978 = vunpack.c.h.b16 %v3629
    %v3979 = vunpack.c.l.b16 %v3630
    %v3980 = vunpack.c.h.b16 %v3630
    %v3981 = vunpack.c.l.b16 %v3631
    %v3982 = vunpack.c.h.b16 %v3631
    %v3983 = vunpack.c.l.b16 %v3632
    %v3984 = vunpack.c.h.b16 %v3632
    %v3985 = vunpack.c.l.b16 %v3633
    %v3986 = vunpack.c.h.b16 %v3633
    %v3987 = vunpack.c.l.b16 %v3634
    %v3988 = vunpack.c.h.b16 %v3634
    %v3989 = vunpack.c.l.b16 %v3635
    %v3990 = vunpack.c.h.b16 %v3635
    %v3991 = vunpack.c.l.b16 %v3636
    %v3992 = vunpack.c.h.b16 %v3636
    %v3993 = vunpack.c.l.b16 %v3637
    %v3994 = vunpack.c.h.b16 %v3637
    %v3995 = vunpack.c.l.b16 %v3638
    %v3996 = vunpack.c.h.b16 %v3638
    %v3997 = vunpack.c.l.b16 %v3639
    %v3998 = vunpack.c.h.b16 %v3639
    %v3999 = vunpack.c.l.b16 %v3640
    %v4000 = vunpack.c.h.b16 %v3640
    %v4001 = vunpack.c.l.b16 %v3641
    %v4002 = vunpack.c.h.b16 %v3641
    %v4003 = vunpack.c.l.b16 %v3642
    %v4004 = vunpack.c.h.b16 %v3642
    %v4005 = vunpack.c.l.b16 %v3643
    %v4006 = vunpack.c.h.b16 %v3643
    %v4007 = vunpack.c.l.b16 %v3644
    %v4008 = vunpack.c.h.b16 %v3644
    %v4009 = vunpack.c.l.b16 %v3645
    %v4010 = vunpack.c.h.b16 %v3645
    %v4011 = vunpack.c.l.b16 %v3646
    %v4012 = vunpack.c.h.b16 %v3646
    %v4013 = vunpack.c.l.b16 %v3647
    %v4014 = vunpack.c.h.b16 %v3647
    %v4015 = vunpack.c.l.b16 %v3648
    %v4016 = vunpack.c.h.b16 %v3648
    %v4017 = vunpack.c.l.b16 %v3649
    %v4018 = vunpack.c.h.b16 %v3649
    %v4019 = vunpack.c.l.b16 %v3650
    %v4020 = vunpack.c.h.b16 %v3650
    %v4021 = vunpack.c.l.b16 %v3651
    %v4022 = vunpack.c.h.b16 %v3651
    %v4023 = vunpack.c.l.b16 %v3652
    %v4024 = vunpack.c.h.b16 %v3652
    %v4025 = vunpack.c.l.b16 %v3653
    %v4026 = vunpack.c.h.b16 %v3653
    %v4027 = vunpack.c.l.b16 %v3654
    %v4028 = vunpack.c.h.b16 %v3654
    %v4029 = vunpack.c.l.b16 %v3655
    %v4030 = vunpack.c.h.b16 %v3655
    %v4031 = vunpack.c.l.b16 %v3656
    %v4032 = vunpack.c.h.b16 %v3656
    %v4033 = vunpack.c.l.b16 %v3657
    %v4034 = vunpack.c.h.b16 %v3657
    %v4035 = vunpack.c.l.b16 %v3658
    %v4036 = vunpack.c.h.b16 %v3658
    %v4037 = vunpack.c.l.b16 %v3659
    %v4038 = vunpack.c.h.b16 %v3659
    %v4039 = vunpack.c.l.b16 %v3660
    %v4040 = vunpack.c.h.b16 %v3660
    %v4041 = vunpack.c.l.b16 %v3661
    %v4042 = vunpack.c.h.b16 %v3661
    %v4043 = vunpack.c.l.b16 %v3662
    %v4044 = vunpack.c.h.b16 %v3662
    %v4045 = vunpack.c.l.b16 %v3663
    %v4046 = vunpack.c.h.b16 %v3663
    %v4047 = vunpack.c.l.b16 %v3664
    %v4048 = vunpack.c.h.b16 %v3664
    %v4049 = vunpack.c.l.b16 %v3665
    %v4050 = vunpack.c.h.b16 %v3665
    %v4051 = vunpack.c.l.b16 %v3666
    %v4052 = vunpack.c.h.b16 %v3666
    %v4053 = vunpack.c.l.b16 %v3667
    %v4054 = vunpack.c.h.b16 %v3667
    %v4055 = vunpack.c.l.b16 %v3668
    %v4056 = vunpack.c.h.b16 %v3668
    %v4057 = vunpack.c.l.b16 %v3669
    %v4058 = vunpack.c.h.b16 %v3669
    %v4059 = vunpack.c.l.b16 %v3670
    %v4060 = vunpack.c.h.b16 %v3670
    %v4061 = vunpack.c.l.b16 %v3671
    %v4062 = vunpack.c.h.b16 %v3671
    %v4063 = vunpack.c.l.b16 %v3672
    %v4064 = vunpack.c.h.b16 %v3672
    %v4065 = vunpack.c.l.b16 %v3673
    %v4066 = vunpack.c.h.b16 %v3673
    %v4067 = vunpack.c.l.b16 %v3674
    %v4068 = vunpack.c.h.b16 %v3674
    %v4069 = vunpack.c.l.b16 %v3675
    %v4070 = vunpack.c.h.b16 %v3675
    %v4071 = vunpack.c.l.b16 %v3676
    %v4072 = vunpack.c.h.b16 %v3676
    %v4073 = vunpack.c.l.b16 %v3677
    %v4074 = vunpack.c.h.b16 %v3677
    %v4075 = vunpack.c.l.b16 %v3678
    %v4076 = vunpack.c.h.b16 %v3678
    %v4077 = vunpack.c.l.b16 %v3679
    %v4078 = vunpack.c.h.b16 %v3679
    %v4079 = vunpack.c.l.b16 %v3680
    %v4080 = vunpack.c.h.b16 %v3680
    %v4081 = vunpack.c.l.b16 %v3681
    %v4082 = vunpack.c.h.b16 %v3681
    %v4083 = vunpack.c.l.b16 %v3682
    %v4084 = vunpack.c.h.b16 %v3682
    %v4085 = vunpack.c.l.b16 %v3683
    %v4086 = vunpack.c.h.b16 %v3683
    %v4087 = vunpack.c.l.b16 %v3684
    %v4088 = vunpack.c.h.b16 %v3684
    %v4089 = vunpack.c.l.b16 %v3685
    %v4090 = vunpack.c.h.b16 %v3685
    %v4091 = vunpack.c.l.b16 %v3686
    %v4092 = vunpack.c.h.b16 %v3686
    %v4093 = vunpack.c.l.b16 %v3687
    %v4094 = vunpack.c.h.b16 %v3687
    %v4095 = vunpack.c.l.b16 %v3688
    %v4096 = vunpack.c.h.b16 %v3688
    %v4097 = vunpack.c.l.b16 %v3689
    %v4098 = vunpack.c.h.b16 %v3689
    %v4099 = vunpack.c.l.b16 %v3690
    %v4100 = vunpack.c.h.b16 %v3690
    %v4101 = vunpack.c.l.b16 %v3691
    %v4102 = vunpack.c.h.b16 %v3691
    %v4103 = vpack.c.b16 %v3851, %v3847
    %v4104 = vpack.c.b16 %v3852, %v3848
    %v4105 = vpack.c.b16 %v3853, %v3849
    %v4106 = vpack.c.b16 %v3854, %v3850
    %v4107 = vpack.c.b16 %v3859, %v3855
    %v4108 = vpack.c.b16 %v3860, %v3856
    %v4109 = vpack.c.b16 %v3861, %v3857
    %v4110 = vpack.c.b16 %v3862, %v3858
    %v4111 = vpack.c.b16 %v3867, %v3863
    %v4112 = vpack.c.b16 %v3868, %v3864
    %v4113 = vpack.c.b16 %v3869, %v3865
    %v4114 = vpack.c.b16 %v3870, %v3866
    %v4115 = vpack.c.b16 %v3875, %v3871
    %v4116 = vpack.c.b16 %v3876, %v3872
    %v4117 = vpack.c.b16 %v3877, %v3873
    %v4118 = vpack.c.b16 %v3878, %v3874
    %v4119 = vpack.c.b16 %v3883, %v3879
    %v4120 = vpack.c.b16 %v3884, %v3880
    %v4121 = vpack.c.b16 %v3885, %v3881
    %v4122 = vpack.c.b16 %v3886, %v3882
    %v4123 = vpack.c.b16 %v3891, %v3887
    %v4124 = vpack.c.b16 %v3892, %v3888
    %v4125 = vpack.c.b16 %v3893, %v3889
    %v4126 = vpack.c.b16 %v3894, %v3890
    %v4127 = vpack.c.b16 %v3899, %v3895
    %v4128 = vpack.c.b16 %v3900, %v3896
    %v4129 = vpack.c.b16 %v3901, %v3897
    %v4130 = vpack.c.b16 %v3902, %v3898
    %v4131 = vpack.c.b16 %v3907, %v3903
    %v4132 = vpack.c.b16 %v3908, %v3904
    %v4133 = vpack.c.b16 %v3909, %v3905
    %v4134 = vpack.c.b16 %v3910, %v3906
    %v4135 = vpack.c.b16 %v3915, %v3911
    %v4136 = vpack.c.b16 %v3916, %v3912
    %v4137 = vpack.c.b16 %v3917, %v3913
    %v4138 = vpack.c.b16 %v3918, %v3914
    %v4139 = vpack.c.b16 %v3923, %v3919
    %v4140 = vpack.c.b16 %v3924, %v3920
    %v4141 = vpack.c.b16 %v3925, %v3921
    %v4142 = vpack.c.b16 %v3926, %v3922
    %v4143 = vpack.c.b16 %v3931, %v3927
    %v4144 = vpack.c.b16 %v3932, %v3928
    %v4145 = vpack.c.b16 %v3933, %v3929
    %v4146 = vpack.c.b16 %v3934, %v3930
    %v4147 = vpack.c.b16 %v3939, %v3935
    %v4148 = vpack.c.b16 %v3940, %v3936
    %v4149 = vpack.c.b16 %v3941, %v3937
    %v4150 = vpack.c.b16 %v3942, %v3938
    %v4151 = vpack.c.b16 %v3947, %v3943
    %v4152 = vpack.c.b16 %v3948, %v3944
    %v4153 = vpack.c.b16 %v3949, %v3945
    %v4154 = vpack.c.b16 %v3950, %v3946
    %v4155 = vpack.c.b16 %v3955, %v3951
    %v4156 = vpack.c.b16 %v3956, %v3952
    %v4157 = vpack.c.b16 %v3957, %v3953
    %v4158 = vpack.c.b16 %v3958, %v3954
    %v4159 = vpack.c.b16 %v3963, %v3959
    %v4160 = vpack.c.b16 %v3964, %v3960
    %v4161 = vpack.c.b16 %v3965, %v3961
    %v4162 = vpack.c.b16 %v3966, %v3962
    %v4163 = vpack.c.b16 %v3971, %v3967
    %v4164 = vpack.c.b16 %v3972, %v3968
    %v4165 = vpack.c.b16 %v3973, %v3969
    %v4166 = vpack.c.b16 %v3974, %v3970
    %v4167 = vpack.c.b16 %v3979, %v3975
    %v4168 = vpack.c.b16 %v3980, %v3976
    %v4169 = vpack.c.b16 %v3981, %v3977
    %v4170 = vpack.c.b16 %v3982, %v3978
    %v4171 = vpack.c.b16 %v3987, %v3983
    %v4172 = vpack.c.b16 %v3988, %v3984
    %v4173 = vpack.c.b16 %v3989, %v3985
    %v4174 = vpack.c.b16 %v3990, %v3986
    %v4175 = vpack.c.b16 %v3995, %v3991
    %v4176 = vpack.c.b16 %v3996, %v3992
    %v4177 = vpack.c.b16 %v3997, %v3993
    %v4178 = vpack.c.b16 %v3998, %v3994
    %v4179 = vpack.c.b16 %v4003, %v3999
    %v4180 = vpack.c.b16 %v4004, %v4000
    %v4181 = vpack.c.b16 %v4005, %v4001
    %v4182 = vpack.c.b16 %v4006, %v4002
    %v4183 = vpack.c.b16 %v4011, %v4007
    %v4184 = vpack.c.b16 %v4012, %v4008
    %v4185 = vpack.c.b16 %v4013, %v4009
    %v4186 = vpack.c.b16 %v4014, %v4010
    %v4187 = vpack.c.b16 %v4019, %v4015
    %v4188 = vpack.c.b16 %v4020, %v4016
    %v4189 = vpack.c.b16 %v4021, %v4017
    %v4190 = vpack.c.b16 %v4022, %v4018
    %v4191 = vpack.c.b16 %v4027, %v4023
    %v4192 = vpack.c.b16 %v4028, %v4024
    %v4193 = vpack.c.b16 %v4029, %v4025
    %v4194 = vpack.c.b16 %v4030, %v4026
    %v4195 = vpack.c.b16 %v4035, %v4031
    %v4196 = vpack.c.b16 %v4036, %v4032
    %v4197 = vpack.c.b16 %v4037, %v4033
    %v4198 = vpack.c.b16 %v4038, %v4034
    %v4199 = vpack.c.b16 %v4043, %v4039
    %v4200 = vpack.c.b16 %v4044, %v4040
    %v4201 = vpack.c.b16 %v4045, %v4041
    %v4202 = vpack.c.b16 %v4046, %v4042
    %v4203 = vpack.c.b16 %v4051, %v4047
    %v4204 = vpack.c.b16 %v4052, %v4048
    %v4205 = vpack.c.b16 %v4053, %v4049
    %v4206 = vpack.c.b16 %v4054, %v4050
    %v4207 = vpack.c.b16 %v4059, %v4055
    %v4208 = vpack.c.b16 %v4060, %v4056
    %v4209 = vpack.c.b16 %v4061, %v4057
    %v4210 = vpack.c.b16 %v4062, %v4058
    %v4211 = vpack.c.b16 %v4067, %v4063
    %v4212 = vpack.c.b16 %v4068, %v4064
    %v4213 = vpack.c.b16 %v4069, %v4065
    %v4214 = vpack.c.b16 %v4070, %v4066
    %v4215 = vpack.c.b16 %v4075, %v4071
    %v4216 = vpack.c.b16 %v4076, %v4072
    %v4217 = vpack.c.b16 %v4077, %v4073
    %v4218 = vpack.c.b16 %v4078, %v4074
    %v4219 = vpack.c.b16 %v4083, %v4079
    %v4220 = vpack.c.b16 %v4084, %v4080
    %v4221 = vpack.c.b16 %v4085, %v4081
    %v4222 = vpack.c.b16 %v4086, %v4082
    %v4223 = vpack.c.b16 %v4091, %v4087
    %v4224 = vpack.c.b16 %v4092, %v4088
    %v4225 = vpack.c.b16 %v4093, %v4089
    %v4226 = vpack.c.b16 %v4094, %v4090
    %v4227 = vpack.c.b16 %v4099, %v4095
    %v4228 = vpack.c.b16 %v4100, %v4096
    %v4229 = vpack.c.b16 %v4101, %v4097
    %v4230 = vpack.c.b16 %v4102, %v4098
    %4359 = vmatprep.subr.bf16.mxu0 %v4104
    %4360 = vmatpush1.bf16.msra.mxu0 %v4103
    %4361 = vmatprep.subr.bf16.mxu0 %v4108
    %4362 = vmatpush1.bf16.msra.mxu0 %v4107
    %4363 = vmatprep.subr.bf16.mxu0 %v4112
    %4364 = vmatpush1.bf16.msra.mxu0 %v4111
    %4365 = vmatprep.subr.bf16.mxu0 %v4116
    %4366 = vmatpush1.bf16.msra.mxu0 %v4115
    %4367 = vmatprep.subr.bf16.mxu0 %v4120
    %4368 = vmatpush1.bf16.msra.mxu0 %v4119
    %4369 = vmatprep.subr.bf16.mxu0 %v4124
    %4370 = vmatpush1.bf16.msra.mxu0 %v4123
    %4371 = vmatprep.subr.bf16.mxu0 %v4128
    %4372 = vmatpush1.bf16.msra.mxu0 %v4127
    %4373 = vmatprep.subr.bf16.mxu0 %v4132
    %4374 = vmatpush1.bf16.msra.mxu0 %v4131
    %4375 = vmatprep.subr.bf16.mxu0 %v4136
    %4376 = vmatpush1.bf16.msra.mxu0 %v4135
    %4377 = vmatprep.subr.bf16.mxu0 %v4140
    %4378 = vmatpush1.bf16.msra.mxu0 %v4139
    %4379 = vmatprep.subr.bf16.mxu0 %v4144
    %4380 = vmatpush1.bf16.msra.mxu0 %v4143
    %4381 = vmatprep.subr.bf16.mxu0 %v4148
    %4382 = vmatpush1.bf16.msra.mxu0 %v4147
    %4383 = vmatprep.subr.bf16.mxu0 %v4152
    %4384 = vmatpush1.bf16.msra.mxu0 %v4151
    %4385 = vmatprep.subr.bf16.mxu0 %v4156
    %4386 = vmatpush1.bf16.msra.mxu0 %v4155
    %4387 = vmatprep.subr.bf16.mxu0 %v4160
    %4388 = vmatpush1.bf16.msra.mxu0 %v4159
    %4389 = vmatprep.subr.bf16.mxu0 %v4164
    %4390 = vmatpush1.bf16.msra.mxu0 %v4163
    %4391 = vmatprep.mubr.bf16.mxu0 %v3693
    %4392 = vmatmul.mubr.bf16.gmra.mrb[0].mxu0 %v3692
    %v4393 = vpop.f32.mrb[0].mxu0
    %v4394 = vadd.f32 %v3702, %v4393
    %v4395 = vpop.f32.mrb[0].mxu0
    %v4396 = vadd.f32 %v3706, %v4395
    %v4397 = vpop.f32.mrb[0].mxu0
    %v4398 = vpop.f32.mrb[0].mxu0
    %4399 = vdwg.mxu0
    %4400 = vmatprep.subr.bf16.mxu0 %v4168
    %4401 = vmatpush1.bf16.msra.mxu0 %v4167
    %4402 = vmatprep.subr.bf16.mxu0 %v4172
    %4403 = vmatpush1.bf16.msra.mxu0 %v4171
    %4404 = vmatprep.subr.bf16.mxu0 %v4176
    %4405 = vmatpush1.bf16.msra.mxu0 %v4175
    %4406 = vmatprep.subr.bf16.mxu0 %v4180
    %4407 = vmatpush1.bf16.msra.mxu0 %v4179
    %4408 = vmatprep.subr.bf16.mxu0 %v4184
    %4409 = vmatpush1.bf16.msra.mxu0 %v4183
    %4410 = vmatprep.subr.bf16.mxu0 %v4188
    %4411 = vmatpush1.bf16.msra.mxu0 %v4187
    %4412 = vmatprep.subr.bf16.mxu0 %v4192
    %4413 = vmatpush1.bf16.msra.mxu0 %v4191
    %4414 = vmatprep.subr.bf16.mxu0 %v4196
    %4415 = vmatpush1.bf16.msra.mxu0 %v4195
    %4416 = vmatprep.subr.bf16.mxu0 %v4200
    %4417 = vmatpush1.bf16.msra.mxu0 %v4199
    %4418 = vmatprep.subr.bf16.mxu0 %v4204
    %4419 = vmatpush1.bf16.msra.mxu0 %v4203
    %4420 = vmatprep.subr.bf16.mxu0 %v4208
    %4421 = vmatpush1.bf16.msra.mxu0 %v4207
    %4422 = vmatprep.subr.bf16.mxu0 %v4212
    %4423 = vmatpush1.bf16.msra.mxu0 %v4211
    %4424 = vmatprep.subr.bf16.mxu0 %v4216
    %4425 = vmatpush1.bf16.msra.mxu0 %v4215
    %4426 = vmatprep.subr.bf16.mxu0 %v4220
    %4427 = vmatpush1.bf16.msra.mxu0 %v4219
    %4428 = vmatprep.subr.bf16.mxu0 %v4224
    %4429 = vmatpush1.bf16.msra.mxu0 %v4223
    %4430 = vmatprep.subr.bf16.mxu0 %v4228
    %4431 = vmatpush1.bf16.msra.mxu0 %v4227
    %4432 = vmatprep.mubr.bf16.mxu0 %v3695
    %4433 = vmatmul.mubr.bf16.gmra.mrb[0].mxu0 %v3694
    %v4434 = vpop.f32.mrb[0].mxu0
    %v4435 = vadd.f32 %v4394, %v4434
    %v4436 = vpop.f32.mrb[0].mxu0
    %v4437 = vadd.f32 %v4396, %v4436
    %v4438 = vpop.f32.mrb[0].mxu0
    %v4439 = vpop.f32.mrb[0].mxu0
    %4440 = vdwg.mxu0
    %4441 = vmatprep.subr.bf16.mxu0 %v4106
    %4442 = vmatpush1.bf16.msra.mxu0 %v4105
    %4443 = vmatprep.subr.bf16.mxu0 %v4110
    %4444 = vmatpush1.bf16.msra.mxu0 %v4109
    %4445 = vmatprep.subr.bf16.mxu0 %v4114
    %4446 = vmatpush1.bf16.msra.mxu0 %v4113
    %4447 = vmatprep.subr.bf16.mxu0 %v4118
    %4448 = vmatpush1.bf16.msra.mxu0 %v4117
    %4449 = vmatprep.subr.bf16.mxu0 %v4122
    %4450 = vmatpush1.bf16.msra.mxu0 %v4121
    %4451 = vmatprep.subr.bf16.mxu0 %v4126
    %4452 = vmatpush1.bf16.msra.mxu0 %v4125
    %4453 = vmatprep.subr.bf16.mxu0 %v4130
    %4454 = vmatpush1.bf16.msra.mxu0 %v4129
    %4455 = vmatprep.subr.bf16.mxu0 %v4134
    %4456 = vmatpush1.bf16.msra.mxu0 %v4133
    %4457 = vmatprep.subr.bf16.mxu0 %v4138
    %4458 = vmatpush1.bf16.msra.mxu0 %v4137
    %4459 = vmatprep.subr.bf16.mxu0 %v4142
    %4460 = vmatpush1.bf16.msra.mxu0 %v4141
    %4461 = vmatprep.subr.bf16.mxu0 %v4146
    %4462 = vmatpush1.bf16.msra.mxu0 %v4145
    %4463 = vmatprep.subr.bf16.mxu0 %v4150
    %4464 = vmatpush1.bf16.msra.mxu0 %v4149
    %4465 = vmatprep.subr.bf16.mxu0 %v4154
    %4466 = vmatpush1.bf16.msra.mxu0 %v4153
    %4467 = vmatprep.subr.bf16.mxu0 %v4158
    %4468 = vmatpush1.bf16.msra.mxu0 %v4157
    %4469 = vmatprep.subr.bf16.mxu0 %v4162
    %4470 = vmatpush1.bf16.msra.mxu0 %v4161
    %4471 = vmatprep.subr.bf16.mxu0 %v4166
    %4472 = vmatpush1.bf16.msra.mxu0 %v4165
    %4473 = vmatprep.mubr.bf16.mxu0 %v3693
    %4474 = vmatmul.mubr.bf16.gmra.mrb[0].mxu0 %v3692
    %v4475 = vpop.f32.mrb[0].mxu0
    %v4476 = vadd.f32 %v3710, %v4475
    %v4477 = vpop.f32.mrb[0].mxu0
    %v4478 = vadd.f32 %v3714, %v4477
    %v4479 = vpop.f32.mrb[0].mxu0
    %v4480 = vpop.f32.mrb[0].mxu0
    %4481 = vdwg.mxu0
    %4482 = vmatprep.subr.bf16.mxu0 %v4170
    %4483 = vmatpush1.bf16.msra.mxu0 %v4169
    %4484 = vmatprep.subr.bf16.mxu0 %v4174
    %4485 = vmatpush1.bf16.msra.mxu0 %v4173
    %4486 = vmatprep.subr.bf16.mxu0 %v4178
    %4487 = vmatpush1.bf16.msra.mxu0 %v4177
    %4488 = vmatprep.subr.bf16.mxu0 %v4182
    %4489 = vmatpush1.bf16.msra.mxu0 %v4181
    %4490 = vmatprep.subr.bf16.mxu0 %v4186
    %4491 = vmatpush1.bf16.msra.mxu0 %v4185
    %4492 = vmatprep.subr.bf16.mxu0 %v4190
    %4493 = vmatpush1.bf16.msra.mxu0 %v4189
    %4494 = vmatprep.subr.bf16.mxu0 %v4194
    %4495 = vmatpush1.bf16.msra.mxu0 %v4193
    %4496 = vmatprep.subr.bf16.mxu0 %v4198
    %4497 = vmatpush1.bf16.msra.mxu0 %v4197
    %4498 = vmatprep.subr.bf16.mxu0 %v4202
    %4499 = vmatpush1.bf16.msra.mxu0 %v4201
    %4500 = vmatprep.subr.bf16.mxu0 %v4206
    %4501 = vmatpush1.bf16.msra.mxu0 %v4205
    %4502 = vmatprep.subr.bf16.mxu0 %v4210
    %4503 = vmatpush1.bf16.msra.mxu0 %v4209
    %4504 = vmatprep.subr.bf16.mxu0 %v4214
    %4505 = vmatpush1.bf16.msra.mxu0 %v4213
    %4506 = vmatprep.subr.bf16.mxu0 %v4218
    %4507 = vmatpush1.bf16.msra.mxu0 %v4217
    %4508 = vmatprep.subr.bf16.mxu0 %v4222
    %4509 = vmatpush1.bf16.msra.mxu0 %v4221
    %4510 = vmatprep.subr.bf16.mxu0 %v4226
    %4511 = vmatpush1.bf16.msra.mxu0 %v4225
    %4512 = vmatprep.subr.bf16.mxu0 %v4230
    %4513 = vmatpush1.bf16.msra.mxu0 %v4229
    %4514 = vmatprep.mubr.bf16.mxu0 %v3695
    %4515 = vmatmul.mubr.bf16.gmra.mrb[0].mxu0 %v3694
    %v4516 = vpop.f32.mrb[0].mxu0
    %v4517 = vadd.f32 %v4476, %v4516
    %v4518 = vpop.f32.mrb[0].mxu0
    %v4519 = vadd.f32 %v4478, %v4518
    %v4520 = vpop.f32.mrb[0].mxu0
    %v4521 = vpop.f32.mrb[0].mxu0
    %4522 = vdwg.mxu0
    %v4523 = vadd.f32 %v4435, %v4437
    %v4524 = vadd.f32 %v4523, %v4517
    %v4525 = vadd.f32 %v4524, %v4519
    %4526 = vadd.xlane.f32.xlu0 %v4525
    %v4527 = vpop.xlane.xlu0 %4526
    %v4528 = vmul.f32 %v4527, %v1713
    %v4529 = vsub.f32 %v4435, %v4528
    %v4530 = vsub.f32 %v4437, %v4528
    %v4531 = vsub.f32 %v4517, %v4528
    %v4532 = vsub.f32 %v4519, %v4528
    %v4533 = vmul.f32 %v4529, %v4529
    %v4534 = vmul.f32 %v4530, %v4530
    %v4535 = vmul.f32 %v4531, %v4531
    %v4536 = vmul.f32 %v4532, %v4532
    %v4537 = vadd.f32 %v4533, %v4534
    %v4538 = vadd.f32 %v4537, %v4535
    %v4539 = vadd.f32 %v4538, %v4536
    %4540 = vadd.xlane.f32.xlu0 %v4539
    %v4541 = vpop.xlane.xlu0 %4540
    %v4542 = vmul.f32 %v4541, %v1713
    %v4543 = vadd.f32 %v4542, 1e-05
    %v4544 = vrsqrt.pop %v4543
    %v4545 = vmul.f32 %v4529, %v4544
    %v4546 = vmul.f32 %v4530, %v4544
    %v4547 = vmul.f32 %v4531, %v4544
    %v4548 = vmul.f32 %v4532, %v4544
    %s4549 = scalar_lea.vmem [#allocation19], 74
    %v4550 = vld [vmem:[%s4549] ss:$8 sm:$0xf]
    %v4552 = vlaneseq
    %v4553 = vshrl.u32 %v4552, 7
    %v4554 = vsub.s32 0, %v4553
    %v4555 = vrot.slane %v4550, %v4554
    %v4556 = vlaneseq
    %v4557 = vshrl.u32 %v4556, 7
    %v4558 = vsub.s32 1, %v4557
    %v4559 = vrot.slane %v4550, %v4558
    %v4560 = vlaneseq
    %v4561 = vshrl.u32 %v4560, 7
    %v4562 = vsub.s32 2, %v4561
    %v4563 = vrot.slane %v4550, %v4562
    %v4564 = vlaneseq
    %v4565 = vshrl.u32 %v4564, 7
    %v4566 = vsub.s32 3, %v4565
    %v4567 = vrot.slane %v4550, %v4566
    %v4572 = vmul.f32 %v4545, %v4555
    %v4573 = vmul.f32 %v4546, %v4559
    %v4574 = vmul.f32 %v4547, %v4563
    %v4575 = vmul.f32 %v4548, %v4567
    %s4576 = scalar_lea.vmem [#allocation19], 75
    %v4577 = vld [vmem:[%s4576] ss:$8 sm:$0xf]
    %v4579 = vlaneseq
    %v4580 = vshrl.u32 %v4579, 7
    %v4581 = vsub.s32 0, %v4580
    %v4582 = vrot.slane %v4577, %v4581
    %v4583 = vlaneseq
    %v4584 = vshrl.u32 %v4583, 7
    %v4585 = vsub.s32 1, %v4584
    %v4586 = vrot.slane %v4577, %v4585
    %v4587 = vlaneseq
    %v4588 = vshrl.u32 %v4587, 7
    %v4589 = vsub.s32 2, %v4588
    %v4590 = vrot.slane %v4577, %v4589
    %v4591 = vlaneseq
    %v4592 = vshrl.u32 %v4591, 7
    %v4593 = vsub.s32 3, %v4592
    %v4594 = vrot.slane %v4577, %v4593
    %v4599 = vadd.f32 %v4572, %v4582
    %v4600 = vadd.f32 %v4573, %v4586
    %v4601 = vadd.f32 %v4574, %v4590
    %v4602 = vadd.f32 %v4575, %v4594
    %v4603 = vmax.f32 %v4599, 0.0
    %v4604 = vmax.f32 %v4600, 0.0
    %v4605 = vmax.f32 %v4601, 0.0
    %v4606 = vmax.f32 %v4602, 0.0
    %v4607 = vadd.f32 %v3393, %v3395
    %v4608 = vadd.f32 %v4607, %v3434
    %v4609 = vadd.f32 %v4608, %v3436
    %4610 = vadd.xlane.f32.xlu0 %v4609
    %v4611 = vpop.xlane.xlu0 %4610
    %v4612 = vmul.f32 %v4611, %v1713
    %v4613 = vsub.f32 %v3393, %v4612
    %v4614 = vsub.f32 %v3395, %v4612
    %v4615 = vsub.f32 %v3434, %v4612
    %v4616 = vsub.f32 %v3436, %v4612
    %v4617 = vmul.f32 %v4613, %v4613
    %v4618 = vmul.f32 %v4614, %v4614
    %v4619 = vmul.f32 %v4615, %v4615
    %v4620 = vmul.f32 %v4616, %v4616
    %v4621 = vadd.f32 %v4617, %v4618
    %v4622 = vadd.f32 %v4621, %v4619
    %v4623 = vadd.f32 %v4622, %v4620
    %4624 = vadd.xlane.f32.xlu0 %v4623
    %v4625 = vpop.xlane.xlu0 %4624
    %v4626 = vmul.f32 %v4625, %v1713
    %v4627 = vadd.f32 %v4626, 1e-05
    %v4628 = vrsqrt.pop %v4627
    %v4629 = vmul.f32 %v4613, %v4628
    %v4630 = vmul.f32 %v4614, %v4628
    %v4631 = vmul.f32 %v4615, %v4628
    %v4632 = vmul.f32 %v4616, %v4628
    %s4633 = scalar_lea.vmem [#allocation19], 76
    %v4634 = vld [vmem:[%s4633] ss:$8 sm:$0xf]
    %v4636 = vlaneseq
    %v4637 = vshrl.u32 %v4636, 7
    %v4638 = vsub.s32 0, %v4637
    %v4639 = vrot.slane %v4634, %v4638
    %v4640 = vlaneseq
    %v4641 = vshrl.u32 %v4640, 7
    %v4642 = vsub.s32 1, %v4641
    %v4643 = vrot.slane %v4634, %v4642
    %v4644 = vlaneseq
    %v4645 = vshrl.u32 %v4644, 7
    %v4646 = vsub.s32 2, %v4645
    %v4647 = vrot.slane %v4634, %v4646
    %v4648 = vlaneseq
    %v4649 = vshrl.u32 %v4648, 7
    %v4650 = vsub.s32 3, %v4649
    %v4651 = vrot.slane %v4634, %v4650
    %v4656 = vmul.f32 %v4629, %v4639
    %v4657 = vmul.f32 %v4630, %v4643
    %v4658 = vmul.f32 %v4631, %v4647
    %v4659 = vmul.f32 %v4632, %v4651
    %s4660 = scalar_lea.vmem [#allocation19], 77
    %v4661 = vld [vmem:[%s4660] ss:$8 sm:$0xf]
    %v4663 = vlaneseq
    %v4664 = vshrl.u32 %v4663, 7
    %v4665 = vsub.s32 0, %v4664
    %v4666 = vrot.slane %v4661, %v4665
    %v4667 = vlaneseq
    %v4668 = vshrl.u32 %v4667, 7
    %v4669 = vsub.s32 1, %v4668
    %v4670 = vrot.slane %v4661, %v4669
    %v4671 = vlaneseq
    %v4672 = vshrl.u32 %v4671, 7
    %v4673 = vsub.s32 2, %v4672
    %v4674 = vrot.slane %v4661, %v4673
    %v4675 = vlaneseq
    %v4676 = vshrl.u32 %v4675, 7
    %v4677 = vsub.s32 3, %v4676
    %v4678 = vrot.slane %v4661, %v4677
    %v4683 = vadd.f32 %v4656, %v4666
    %v4684 = vadd.f32 %v4657, %v4670
    %v4685 = vadd.f32 %v4658, %v4674
    %v4686 = vadd.f32 %v4659, %v4678
    %v4687 = vmax.f32 %v4683, 0.0
    %v4688 = vmax.f32 %v4684, 0.0
    %v4689 = vmax.f32 %v4685, 0.0
    %v4690 = vmax.f32 %v4686, 0.0
    %v4691 = vld [vmem:[#allocation14] sm:$0xff]
    %v4692 = vld [vmem:[#allocation14 + $0x8] sm:$0xff]
    %v4693 = vld [vmem:[#allocation14 + $0x10] sm:$0xff]
    %v4694 = vld [vmem:[#allocation14 + $0x18] sm:$0xff]
    %v4695 = vld [vmem:[#allocation14 + $0x20] sm:$0xff]
    %v4696 = vld [vmem:[#allocation14 + $0x28] sm:$0xff]
    %v4697 = vld [vmem:[#allocation14 + $0x30] sm:$0xff]
    %v4698 = vld [vmem:[#allocation14 + $0x38] sm:$0xff]
    %v4699 = vld [vmem:[#allocation14 + $0x40] sm:$0xff]
    %v4700 = vld [vmem:[#allocation14 + $0x48] sm:$0xff]
    %v4701 = vld [vmem:[#allocation14 + $0x50] sm:$0xff]
    %v4702 = vld [vmem:[#allocation14 + $0x58] sm:$0xff]
    %v4703 = vld [vmem:[#allocation14 + $0x60] sm:$0xff]
    %v4704 = vld [vmem:[#allocation14 + $0x68] sm:$0xff]
    %v4705 = vld [vmem:[#allocation14 + $0x70] sm:$0xff]
    %v4706 = vld [vmem:[#allocation14 + $0x78] sm:$0xff]
    %v4707 = vld [vmem:[#allocation14 + $0x80] sm:$0xff]
    %v4708 = vld [vmem:[#allocation14 + $0x88] sm:$0xff]
    %v4709 = vld [vmem:[#allocation14 + $0x90] sm:$0xff]
    %v4710 = vld [vmem:[#allocation14 + $0x98] sm:$0xff]
    %v4711 = vld [vmem:[#allocation14 + $0xa0] sm:$0xff]
    %v4712 = vld [vmem:[#allocation14 + $0xa8] sm:$0xff]
    %v4713 = vld [vmem:[#allocation14 + $0xb0] sm:$0xff]
    %v4714 = vld [vmem:[#allocation14 + $0xb8] sm:$0xff]
    %v4715 = vld [vmem:[#allocation14 + $0xc0] sm:$0xff]
    %v4716 = vld [vmem:[#allocation14 + $0xc8] sm:$0xff]
    %v4717 = vld [vmem:[#allocation14 + $0xd0] sm:$0xff]
    %v4718 = vld [vmem:[#allocation14 + $0xd8] sm:$0xff]
    %v4719 = vld [vmem:[#allocation14 + $0xe0] sm:$0xff]
    %v4720 = vld [vmem:[#allocation14 + $0xe8] sm:$0xff]
    %v4721 = vld [vmem:[#allocation14 + $0xf0] sm:$0xff]
    %v4722 = vld [vmem:[#allocation14 + $0xf8] sm:$0xff]
    %v4723 = vld [vmem:[#allocation14 + $0x100] sm:$0xff]
    %v4724 = vld [vmem:[#allocation14 + $0x108] sm:$0xff]
    %v4725 = vld [vmem:[#allocation14 + $0x110] sm:$0xff]
    %v4726 = vld [vmem:[#allocation14 + $0x118] sm:$0xff]
    %v4727 = vld [vmem:[#allocation14 + $0x120] sm:$0xff]
    %v4728 = vld [vmem:[#allocation14 + $0x128] sm:$0xff]
    %v4729 = vld [vmem:[#allocation14 + $0x130] sm:$0xff]
    %v4730 = vld [vmem:[#allocation14 + $0x138] sm:$0xff]
    %v4731 = vld [vmem:[#allocation14 + $0x140] sm:$0xff]
    %v4732 = vld [vmem:[#allocation14 + $0x148] sm:$0xff]
    %v4733 = vld [vmem:[#allocation14 + $0x150] sm:$0xff]
    %v4734 = vld [vmem:[#allocation14 + $0x158] sm:$0xff]
    %v4735 = vld [vmem:[#allocation14 + $0x160] sm:$0xff]
    %v4736 = vld [vmem:[#allocation14 + $0x168] sm:$0xff]
    %v4737 = vld [vmem:[#allocation14 + $0x170] sm:$0xff]
    %v4738 = vld [vmem:[#allocation14 + $0x178] sm:$0xff]
    %v4739 = vld [vmem:[#allocation14 + $0x180] sm:$0xff]
    %v4740 = vld [vmem:[#allocation14 + $0x188] sm:$0xff]
    %v4741 = vld [vmem:[#allocation14 + $0x190] sm:$0xff]
    %v4742 = vld [vmem:[#allocation14 + $0x198] sm:$0xff]
    %v4743 = vld [vmem:[#allocation14 + $0x1a0] sm:$0xff]
    %v4744 = vld [vmem:[#allocation14 + $0x1a8] sm:$0xff]
    %v4745 = vld [vmem:[#allocation14 + $0x1b0] sm:$0xff]
    %v4746 = vld [vmem:[#allocation14 + $0x1b8] sm:$0xff]
    %v4747 = vld [vmem:[#allocation14 + $0x1c0] sm:$0xff]
    %v4748 = vld [vmem:[#allocation14 + $0x1c8] sm:$0xff]
    %v4749 = vld [vmem:[#allocation14 + $0x1d0] sm:$0xff]
    %v4750 = vld [vmem:[#allocation14 + $0x1d8] sm:$0xff]
    %v4751 = vld [vmem:[#allocation14 + $0x1e0] sm:$0xff]
    %v4752 = vld [vmem:[#allocation14 + $0x1e8] sm:$0xff]
    %v4753 = vld [vmem:[#allocation14 + $0x1f0] sm:$0xff]
    %v4754 = vld [vmem:[#allocation14 + $0x1f8] sm:$0xff]
    %v4755 = vpack.c.bf16 %v4687, %v4687
    %v4756 = vpack.c.bf16 %v4688, %v4688
    %v4757 = vpack.c.bf16 %v4689, %v4689
    %v4758 = vpack.c.bf16 %v4690, %v4690
    %s4759 = scalar_lea.vmem [#allocation19], 78
    %v4760 = vld [vmem:[%s4759] ss:$8 sm:$0x3]
    %v4762 = vlaneseq
    %v4763 = vshrl.u32 %v4762, 7
    %v4764 = vsub.s32 0, %v4763
    %v4765 = vrot.slane %v4760, %v4764
    %v4766 = vlaneseq
    %v4767 = vshrl.u32 %v4766, 7
    %v4768 = vsub.s32 1, %v4767
    %v4769 = vrot.slane %v4760, %v4768
    %v4836 = vunpack.c.l.b16 %v4691
    %v4837 = vunpack.c.h.b16 %v4691
    %v4838 = vunpack.c.l.b16 %v4692
    %v4839 = vunpack.c.h.b16 %v4692
    %v4840 = vunpack.c.l.b16 %v4693
    %v4841 = vunpack.c.h.b16 %v4693
    %v4842 = vunpack.c.l.b16 %v4694
    %v4843 = vunpack.c.h.b16 %v4694
    %v4844 = vunpack.c.l.b16 %v4695
    %v4845 = vunpack.c.h.b16 %v4695
    %v4846 = vunpack.c.l.b16 %v4696
    %v4847 = vunpack.c.h.b16 %v4696
    %v4848 = vunpack.c.l.b16 %v4697
    %v4849 = vunpack.c.h.b16 %v4697
    %v4850 = vunpack.c.l.b16 %v4698
    %v4851 = vunpack.c.h.b16 %v4698
    %v4852 = vunpack.c.l.b16 %v4699
    %v4853 = vunpack.c.h.b16 %v4699
    %v4854 = vunpack.c.l.b16 %v4700
    %v4855 = vunpack.c.h.b16 %v4700
    %v4856 = vunpack.c.l.b16 %v4701
    %v4857 = vunpack.c.h.b16 %v4701
    %v4858 = vunpack.c.l.b16 %v4702
    %v4859 = vunpack.c.h.b16 %v4702
    %v4860 = vunpack.c.l.b16 %v4703
    %v4861 = vunpack.c.h.b16 %v4703
    %v4862 = vunpack.c.l.b16 %v4704
    %v4863 = vunpack.c.h.b16 %v4704
    %v4864 = vunpack.c.l.b16 %v4705
    %v4865 = vunpack.c.h.b16 %v4705
    %v4866 = vunpack.c.l.b16 %v4706
    %v4867 = vunpack.c.h.b16 %v4706
    %v4868 = vunpack.c.l.b16 %v4707
    %v4869 = vunpack.c.h.b16 %v4707
    %v4870 = vunpack.c.l.b16 %v4708
    %v4871 = vunpack.c.h.b16 %v4708
    %v4872 = vunpack.c.l.b16 %v4709
    %v4873 = vunpack.c.h.b16 %v4709
    %v4874 = vunpack.c.l.b16 %v4710
    %v4875 = vunpack.c.h.b16 %v4710
    %v4876 = vunpack.c.l.b16 %v4711
    %v4877 = vunpack.c.h.b16 %v4711
    %v4878 = vunpack.c.l.b16 %v4712
    %v4879 = vunpack.c.h.b16 %v4712
    %v4880 = vunpack.c.l.b16 %v4713
    %v4881 = vunpack.c.h.b16 %v4713
    %v4882 = vunpack.c.l.b16 %v4714
    %v4883 = vunpack.c.h.b16 %v4714
    %v4884 = vunpack.c.l.b16 %v4715
    %v4885 = vunpack.c.h.b16 %v4715
    %v4886 = vunpack.c.l.b16 %v4716
    %v4887 = vunpack.c.h.b16 %v4716
    %v4888 = vunpack.c.l.b16 %v4717
    %v4889 = vunpack.c.h.b16 %v4717
    %v4890 = vunpack.c.l.b16 %v4718
    %v4891 = vunpack.c.h.b16 %v4718
    %v4892 = vunpack.c.l.b16 %v4719
    %v4893 = vunpack.c.h.b16 %v4719
    %v4894 = vunpack.c.l.b16 %v4720
    %v4895 = vunpack.c.h.b16 %v4720
    %v4896 = vunpack.c.l.b16 %v4721
    %v4897 = vunpack.c.h.b16 %v4721
    %v4898 = vunpack.c.l.b16 %v4722
    %v4899 = vunpack.c.h.b16 %v4722
    %v4900 = vunpack.c.l.b16 %v4723
    %v4901 = vunpack.c.h.b16 %v4723
    %v4902 = vunpack.c.l.b16 %v4724
    %v4903 = vunpack.c.h.b16 %v4724
    %v4904 = vunpack.c.l.b16 %v4725
    %v4905 = vunpack.c.h.b16 %v4725
    %v4906 = vunpack.c.l.b16 %v4726
    %v4907 = vunpack.c.h.b16 %v4726
    %v4908 = vunpack.c.l.b16 %v4727
    %v4909 = vunpack.c.h.b16 %v4727
    %v4910 = vunpack.c.l.b16 %v4728
    %v4911 = vunpack.c.h.b16 %v4728
    %v4912 = vunpack.c.l.b16 %v4729
    %v4913 = vunpack.c.h.b16 %v4729
    %v4914 = vunpack.c.l.b16 %v4730
    %v4915 = vunpack.c.h.b16 %v4730
    %v4916 = vunpack.c.l.b16 %v4731
    %v4917 = vunpack.c.h.b16 %v4731
    %v4918 = vunpack.c.l.b16 %v4732
    %v4919 = vunpack.c.h.b16 %v4732
    %v4920 = vunpack.c.l.b16 %v4733
    %v4921 = vunpack.c.h.b16 %v4733
    %v4922 = vunpack.c.l.b16 %v4734
    %v4923 = vunpack.c.h.b16 %v4734
    %v4924 = vunpack.c.l.b16 %v4735
    %v4925 = vunpack.c.h.b16 %v4735
    %v4926 = vunpack.c.l.b16 %v4736
    %v4927 = vunpack.c.h.b16 %v4736
    %v4928 = vunpack.c.l.b16 %v4737
    %v4929 = vunpack.c.h.b16 %v4737
    %v4930 = vunpack.c.l.b16 %v4738
    %v4931 = vunpack.c.h.b16 %v4738
    %v4932 = vunpack.c.l.b16 %v4739
    %v4933 = vunpack.c.h.b16 %v4739
    %v4934 = vunpack.c.l.b16 %v4740
    %v4935 = vunpack.c.h.b16 %v4740
    %v4936 = vunpack.c.l.b16 %v4741
    %v4937 = vunpack.c.h.b16 %v4741
    %v4938 = vunpack.c.l.b16 %v4742
    %v4939 = vunpack.c.h.b16 %v4742
    %v4940 = vunpack.c.l.b16 %v4743
    %v4941 = vunpack.c.h.b16 %v4743
    %v4942 = vunpack.c.l.b16 %v4744
    %v4943 = vunpack.c.h.b16 %v4744
    %v4944 = vunpack.c.l.b16 %v4745
    %v4945 = vunpack.c.h.b16 %v4745
    %v4946 = vunpack.c.l.b16 %v4746
    %v4947 = vunpack.c.h.b16 %v4746
    %v4948 = vunpack.c.l.b16 %v4747
    %v4949 = vunpack.c.h.b16 %v4747
    %v4950 = vunpack.c.l.b16 %v4748
    %v4951 = vunpack.c.h.b16 %v4748
    %v4952 = vunpack.c.l.b16 %v4749
    %v4953 = vunpack.c.h.b16 %v4749
    %v4954 = vunpack.c.l.b16 %v4750
    %v4955 = vunpack.c.h.b16 %v4750
    %v4956 = vunpack.c.l.b16 %v4751
    %v4957 = vunpack.c.h.b16 %v4751
    %v4958 = vunpack.c.l.b16 %v4752
    %v4959 = vunpack.c.h.b16 %v4752
    %v4960 = vunpack.c.l.b16 %v4753
    %v4961 = vunpack.c.h.b16 %v4753
    %v4962 = vunpack.c.l.b16 %v4754
    %v4963 = vunpack.c.h.b16 %v4754
    %v4964 = vpack.c.b16 %v4838, %v4836
    %v4965 = vpack.c.b16 %v4839, %v4837
    %v4966 = vpack.c.b16 %v4842, %v4840
    %v4967 = vpack.c.b16 %v4843, %v4841
    %v4968 = vpack.c.b16 %v4846, %v4844
    %v4969 = vpack.c.b16 %v4847, %v4845
    %v4970 = vpack.c.b16 %v4850, %v4848
    %v4971 = vpack.c.b16 %v4851, %v4849
    %v4972 = vpack.c.b16 %v4854, %v4852
    %v4973 = vpack.c.b16 %v4855, %v4853
    %v4974 = vpack.c.b16 %v4858, %v4856
    %v4975 = vpack.c.b16 %v4859, %v4857
    %v4976 = vpack.c.b16 %v4862, %v4860
    %v4977 = vpack.c.b16 %v4863, %v4861
    %v4978 = vpack.c.b16 %v4866, %v4864
    %v4979 = vpack.c.b16 %v4867, %v4865
    %v4980 = vpack.c.b16 %v4870, %v4868
    %v4981 = vpack.c.b16 %v4871, %v4869
    %v4982 = vpack.c.b16 %v4874, %v4872
    %v4983 = vpack.c.b16 %v4875, %v4873
    %v4984 = vpack.c.b16 %v4878, %v4876
    %v4985 = vpack.c.b16 %v4879, %v4877
    %v4986 = vpack.c.b16 %v4882, %v4880
    %v4987 = vpack.c.b16 %v4883, %v4881
    %v4988 = vpack.c.b16 %v4886, %v4884
    %v4989 = vpack.c.b16 %v4887, %v4885
    %v4990 = vpack.c.b16 %v4890, %v4888
    %v4991 = vpack.c.b16 %v4891, %v4889
    %v4992 = vpack.c.b16 %v4894, %v4892
    %v4993 = vpack.c.b16 %v4895, %v4893
    %v4994 = vpack.c.b16 %v4898, %v4896
    %v4995 = vpack.c.b16 %v4899, %v4897
    %v4996 = vpack.c.b16 %v4902, %v4900
    %v4997 = vpack.c.b16 %v4903, %v4901
    %v4998 = vpack.c.b16 %v4906, %v4904
    %v4999 = vpack.c.b16 %v4907, %v4905
    %v5000 = vpack.c.b16 %v4910, %v4908
    %v5001 = vpack.c.b16 %v4911, %v4909
    %v5002 = vpack.c.b16 %v4914, %v4912
    %v5003 = vpack.c.b16 %v4915, %v4913
    %v5004 = vpack.c.b16 %v4918, %v4916
    %v5005 = vpack.c.b16 %v4919, %v4917
    %v5006 = vpack.c.b16 %v4922, %v4920
    %v5007 = vpack.c.b16 %v4923, %v4921
    %v5008 = vpack.c.b16 %v4926, %v4924
    %v5009 = vpack.c.b16 %v4927, %v4925
    %v5010 = vpack.c.b16 %v4930, %v4928
    %v5011 = vpack.c.b16 %v4931, %v4929
    %v5012 = vpack.c.b16 %v4934, %v4932
    %v5013 = vpack.c.b16 %v4935, %v4933
    %v5014 = vpack.c.b16 %v4938, %v4936
    %v5015 = vpack.c.b16 %v4939, %v4937
    %v5016 = vpack.c.b16 %v4942, %v4940
    %v5017 = vpack.c.b16 %v4943, %v4941
    %v5018 = vpack.c.b16 %v4946, %v4944
    %v5019 = vpack.c.b16 %v4947, %v4945
    %v5020 = vpack.c.b16 %v4950, %v4948
    %v5021 = vpack.c.b16 %v4951, %v4949
    %v5022 = vpack.c.b16 %v4954, %v4952
    %v5023 = vpack.c.b16 %v4955, %v4953
    %v5024 = vpack.c.b16 %v4958, %v4956
    %v5025 = vpack.c.b16 %v4959, %v4957
    %v5026 = vpack.c.b16 %v4962, %v4960
    %v5027 = vpack.c.b16 %v4963, %v4961
    %5092 = vmatprep.subr.bf16.mxu0 %v4965
    %5093 = vmatpush1.bf16.msra.mxu0 %v4964
    %5094 = vmatprep.subr.bf16.mxu0 %v4967
    %5095 = vmatpush1.bf16.msra.mxu0 %v4966
    %5096 = vmatprep.subr.bf16.mxu0 %v4969
    %5097 = vmatpush1.bf16.msra.mxu0 %v4968
    %5098 = vmatprep.subr.bf16.mxu0 %v4971
    %5099 = vmatpush1.bf16.msra.mxu0 %v4970
    %5100 = vmatprep.subr.bf16.mxu0 %v4973
    %5101 = vmatpush1.bf16.msra.mxu0 %v4972
    %5102 = vmatprep.subr.bf16.mxu0 %v4975
    %5103 = vmatpush1.bf16.msra.mxu0 %v4974
    %5104 = vmatprep.subr.bf16.mxu0 %v4977
    %5105 = vmatpush1.bf16.msra.mxu0 %v4976
    %5106 = vmatprep.subr.bf16.mxu0 %v4979
    %5107 = vmatpush1.bf16.msra.mxu0 %v4978
    %5108 = vmatprep.subr.bf16.mxu0 %v4981
    %5109 = vmatpush1.bf16.msra.mxu0 %v4980
    %5110 = vmatprep.subr.bf16.mxu0 %v4983
    %5111 = vmatpush1.bf16.msra.mxu0 %v4982
    %5112 = vmatprep.subr.bf16.mxu0 %v4985
    %5113 = vmatpush1.bf16.msra.mxu0 %v4984
    %5114 = vmatprep.subr.bf16.mxu0 %v4987
    %5115 = vmatpush1.bf16.msra.mxu0 %v4986
    %5116 = vmatprep.subr.bf16.mxu0 %v4989
    %5117 = vmatpush1.bf16.msra.mxu0 %v4988
    %5118 = vmatprep.subr.bf16.mxu0 %v4991
    %5119 = vmatpush1.bf16.msra.mxu0 %v4990
    %5120 = vmatprep.subr.bf16.mxu0 %v4993
    %5121 = vmatpush1.bf16.msra.mxu0 %v4992
    %5122 = vmatprep.subr.bf16.mxu0 %v4995
    %5123 = vmatpush1.bf16.msra.mxu0 %v4994
    %5124 = vmatprep.mubr.bf16.mxu0 %v4756
    %5125 = vmatmul.mubr.bf16.gmra.mrb[0].mxu0 %v4755
    %v5126 = vpop.f32.mrb[0].mxu0
    %v5127 = vadd.f32 %v4765, %v5126
    %v5128 = vpop.f32.mrb[0].mxu0
    %v5129 = vadd.f32 %v4769, %v5128
    %v5130 = vpop.f32.mrb[0].mxu0
    %v5131 = vpop.f32.mrb[0].mxu0
    %5132 = vdwg.mxu0
    %5133 = vmatprep.subr.bf16.mxu0 %v4997
    %5134 = vmatpush1.bf16.msra.mxu0 %v4996
    %5135 = vmatprep.subr.bf16.mxu0 %v4999
    %5136 = vmatpush1.bf16.msra.mxu0 %v4998
    %5137 = vmatprep.subr.bf16.mxu0 %v5001
    %5138 = vmatpush1.bf16.msra.mxu0 %v5000
    %5139 = vmatprep.subr.bf16.mxu0 %v5003
    %5140 = vmatpush1.bf16.msra.mxu0 %v5002
    %5141 = vmatprep.subr.bf16.mxu0 %v5005
    %5142 = vmatpush1.bf16.msra.mxu0 %v5004
    %5143 = vmatprep.subr.bf16.mxu0 %v5007
    %5144 = vmatpush1.bf16.msra.mxu0 %v5006
    %5145 = vmatprep.subr.bf16.mxu0 %v5009
    %5146 = vmatpush1.bf16.msra.mxu0 %v5008
    %5147 = vmatprep.subr.bf16.mxu0 %v5011
    %5148 = vmatpush1.bf16.msra.mxu0 %v5010
    %5149 = vmatprep.subr.bf16.mxu0 %v5013
    %5150 = vmatpush1.bf16.msra.mxu0 %v5012
    %5151 = vmatprep.subr.bf16.mxu0 %v5015
    %5152 = vmatpush1.bf16.msra.mxu0 %v5014
    %5153 = vmatprep.subr.bf16.mxu0 %v5017
    %5154 = vmatpush1.bf16.msra.mxu0 %v5016
    %5155 = vmatprep.subr.bf16.mxu0 %v5019
    %5156 = vmatpush1.bf16.msra.mxu0 %v5018
    %5157 = vmatprep.subr.bf16.mxu0 %v5021
    %5158 = vmatpush1.bf16.msra.mxu0 %v5020
    %5159 = vmatprep.subr.bf16.mxu0 %v5023
    %5160 = vmatpush1.bf16.msra.mxu0 %v5022
    %5161 = vmatprep.subr.bf16.mxu0 %v5025
    %5162 = vmatpush1.bf16.msra.mxu0 %v5024
    %5163 = vmatprep.subr.bf16.mxu0 %v5027
    %5164 = vmatpush1.bf16.msra.mxu0 %v5026
    %5165 = vmatprep.mubr.bf16.mxu0 %v4758
    %5166 = vmatmul.mubr.bf16.gmra.mrb[0].mxu0 %v4757
    %v5167 = vpop.f32.mrb[0].mxu0
    %v5168 = vadd.f32 %v5127, %v5167
    %v5169 = vpop.f32.mrb[0].mxu0
    %v5170 = vadd.f32 %v5129, %v5169
    %v5171 = vpop.f32.mrb[0].mxu0
    %v5172 = vpop.f32.mrb[0].mxu0
    %5173 = vdwg.mxu0
    %v5174 = vadd.f32 %v5168, %v5170
    %5175 = vadd.xlane.f32.xlu0 %v5174
    %v5176 = vpop.xlane.xlu0 %5175
    %v5177 = vmul.f32 %v5176, %v2279
    %v5178 = vsub.f32 %v5168, %v5177
    %v5179 = vsub.f32 %v5170, %v5177
    %v5180 = vmul.f32 %v5178, %v5178
    %v5181 = vmul.f32 %v5179, %v5179
    %v5182 = vadd.f32 %v5180, %v5181
    %5183 = vadd.xlane.f32.xlu0 %v5182
    %v5184 = vpop.xlane.xlu0 %5183
    %v5185 = vmul.f32 %v5184, %v2279
    %v5186 = vadd.f32 %v5185, 1e-05
    %v5187 = vrsqrt.pop %v5186
    %v5188 = vmul.f32 %v5178, %v5187
    %v5189 = vmul.f32 %v5179, %v5187
    %s5190 = scalar_lea.vmem [#allocation19], 79
    %v5191 = vld [vmem:[%s5190] ss:$8 sm:$0x3]
    %v5193 = vlaneseq
    %v5194 = vshrl.u32 %v5193, 7
    %v5195 = vsub.s32 0, %v5194
    %v5196 = vrot.slane %v5191, %v5195
    %v5197 = vlaneseq
    %v5198 = vshrl.u32 %v5197, 7
    %v5199 = vsub.s32 1, %v5198
    %v5200 = vrot.slane %v5191, %v5199
    %v5203 = vmul.f32 %v5188, %v5196
    %v5204 = vmul.f32 %v5189, %v5200
    %s5205 = scalar_lea.vmem [#allocation19], 144
    %v5206 = vld [vmem:[%s5205] ss:$8 sm:$0x3]
    %v5208 = vlaneseq
    %v5209 = vshrl.u32 %v5208, 7
    %v5210 = vsub.s32 0, %v5209
    %v5211 = vrot.slane %v5206, %v5210
    %v5212 = vlaneseq
    %v5213 = vshrl.u32 %v5212, 7
    %v5214 = vsub.s32 1, %v5213
    %v5215 = vrot.slane %v5206, %v5214
    %v5218 = vadd.f32 %v5203, %v5211
    %v5219 = vadd.f32 %v5204, %v5215
    %v5220 = vmax.f32 %v5218, 0.0
    %v5221 = vmax.f32 %v5219, 0.0
    %v5222 = vmax.f32 %v3475, 0.0
    %v5223 = vld [vmem:[#allocation16] sm:$0xf]
    %v5224 = vld [vmem:[#allocation16 + $0x4] sm:$0xf]
    %v5225 = vld [vmem:[#allocation16 + $0x8] sm:$0xf]
    %v5226 = vld [vmem:[#allocation16 + $0xc] sm:$0xf]
    %v5227 = vld [vmem:[#allocation16 + $0x10] sm:$0xf]
    %v5228 = vld [vmem:[#allocation16 + $0x14] sm:$0xf]
    %v5229 = vld [vmem:[#allocation16 + $0x18] sm:$0xf]
    %v5230 = vld [vmem:[#allocation16 + $0x1c] sm:$0xf]
    %v5231 = vld [vmem:[#allocation16 + $0x20] sm:$0xf]
    %v5232 = vld [vmem:[#allocation16 + $0x24] sm:$0xf]
    %v5233 = vld [vmem:[#allocation16 + $0x28] sm:$0xf]
    %v5234 = vld [vmem:[#allocation16 + $0x2c] sm:$0xf]
    %v5235 = vld [vmem:[#allocation16 + $0x30] sm:$0xf]
    %v5236 = vld [vmem:[#allocation16 + $0x34] sm:$0xf]
    %v5237 = vld [vmem:[#allocation16 + $0x38] sm:$0xf]
    %v5238 = vld [vmem:[#allocation16 + $0x3c] sm:$0xf]
    %v5239 = vpack.c.bf16 %v5222, %v5222
    %v5240 = vld [vmem:[#allocation19 + $0x91] ss:$0 sm:$0xff]
    %v5257 = vunpack.c.l.b16 %v5223
    %v5258 = vunpack.c.l.b16 %v5224
    %v5259 = vunpack.c.l.b16 %v5225
    %v5260 = vunpack.c.l.b16 %v5226
    %v5261 = vunpack.c.l.b16 %v5227
    %v5262 = vunpack.c.l.b16 %v5228
    %v5263 = vunpack.c.l.b16 %v5229
    %v5264 = vunpack.c.l.b16 %v5230
    %v5265 = vunpack.c.l.b16 %v5231
    %v5266 = vunpack.c.l.b16 %v5232
    %v5267 = vunpack.c.l.b16 %v5233
    %v5268 = vunpack.c.l.b16 %v5234
    %v5269 = vunpack.c.l.b16 %v5235
    %v5270 = vunpack.c.l.b16 %v5236
    %v5271 = vunpack.c.l.b16 %v5237
    %v5272 = vunpack.c.l.b16 %v5238
    %v5273 = vpack.c.b16 %v5258, %v5257
    %v5274 = vpack.c.b16 %v5260, %v5259
    %v5275 = vpack.c.b16 %v5262, %v5261
    %v5276 = vpack.c.b16 %v5264, %v5263
    %v5277 = vpack.c.b16 %v5266, %v5265
    %v5278 = vpack.c.b16 %v5268, %v5267
    %v5279 = vpack.c.b16 %v5270, %v5269
    %v5280 = vpack.c.b16 %v5272, %v5271
    %5289 = vmatprep.subr.bf16.mxu0 0
    %5290 = vmatpush1.bf16.msra.mxu0 %v5273
    %5291 = vmatprep.subr.bf16.mxu0 0
    %5292 = vmatpush1.bf16.msra.mxu0 %v5274
    %5293 = vmatprep.subr.bf16.mxu0 0
    %5294 = vmatpush1.bf16.msra.mxu0 %v5275
    %5295 = vmatprep.subr.bf16.mxu0 0
    %5296 = vmatpush1.bf16.msra.mxu0 %v5276
    %5297 = vmatprep.subr.bf16.mxu0 0
    %5298 = vmatpush1.bf16.msra.mxu0 %v5277
    %5299 = vmatprep.subr.bf16.mxu0 0
    %5300 = vmatpush1.bf16.msra.mxu0 %v5278
    %5301 = vmatprep.subr.bf16.mxu0 0
    %5302 = vmatpush1.bf16.msra.mxu0 %v5279
    %5303 = vmatprep.subr.bf16.mxu0 0
    %5304 = vmatpush1.bf16.msra.mxu0 %v5280
    %5305 = vmatprep.subr.bf16.mxu0 0
    %5306 = vmatpush1.bf16.msra.mxu0 0
    %5307 = vmatprep.subr.bf16.mxu0 0
    %5308 = vmatpush1.bf16.msra.mxu0 0
    %5309 = vmatprep.subr.bf16.mxu0 0
    %5310 = vmatpush1.bf16.msra.mxu0 0
    %5311 = vmatprep.subr.bf16.mxu0 0
    %5312 = vmatpush1.bf16.msra.mxu0 0
    %5313 = vmatprep.subr.bf16.mxu0 0
    %5314 = vmatpush1.bf16.msra.mxu0 0
    %5315 = vmatprep.subr.bf16.mxu0 0
    %5316 = vmatpush1.bf16.msra.mxu0 0
    %5317 = vmatprep.subr.bf16.mxu0 0
    %5318 = vmatpush1.bf16.msra.mxu0 0
    %5319 = vmatprep.subr.bf16.mxu0 0
    %5320 = vmatpush1.bf16.msra.mxu0 0
    %5321 = vmatprep.mubr.bf16.mxu0 0
    %5322 = vmatmul.mubr.bf16.gmra.mrb[0].mxu0 %v5239
    %v5323 = vpop.f32.mrb[0].mxu0
    %v5324 = vadd.f32 %v5240, %v5323
    %v5325 = vpop.f32.mrb[0].mxu0
    %v5326 = vpop.f32.mrb[0].mxu0
    %v5327 = vpop.f32.mrb[0].mxu0
    %5328 = vdwg.mxu0
    %v5329 = vmax.f32 %v5324, 0.0
    %v5330 = vld [vmem:[#allocation17] sm:$0xff]
    %v5331 = vld [vmem:[#allocation17 + $0x8] sm:$0xff]
    %v5332 = vld [vmem:[#allocation17 + $0x10] sm:$0xff]
    %v5333 = vld [vmem:[#allocation17 + $0x18] sm:$0xff]
    %v5334 = vld [vmem:[#allocation17 + $0x20] sm:$0xff]
    %v5335 = vld [vmem:[#allocation17 + $0x28] sm:$0xff]
    %v5336 = vld [vmem:[#allocation17 + $0x30] sm:$0xff]
    %v5337 = vld [vmem:[#allocation17 + $0x38] sm:$0xff]
    %v5338 = vld [vmem:[#allocation17 + $0x40] sm:$0xff]
    %v5339 = vld [vmem:[#allocation17 + $0x48] sm:$0xff]
    %v5340 = vld [vmem:[#allocation17 + $0x50] sm:$0xff]
    %v5341 = vld [vmem:[#allocation17 + $0x58] sm:$0xff]
    %v5342 = vld [vmem:[#allocation17 + $0x60] sm:$0xff]
    %v5343 = vld [vmem:[#allocation17 + $0x68] sm:$0xff]
    %v5344 = vld [vmem:[#allocation17 + $0x70] sm:$0xff]
    %v5345 = vld [vmem:[#allocation17 + $0x78] sm:$0xff]
    %v5346 = vld [vmem:[#allocation17 + $0x80] sm:$0xff]
    %v5347 = vld [vmem:[#allocation17 + $0x88] sm:$0xff]
    %v5348 = vld [vmem:[#allocation17 + $0x90] sm:$0xff]
    %v5349 = vld [vmem:[#allocation17 + $0x98] sm:$0xff]
    %v5350 = vld [vmem:[#allocation17 + $0xa0] sm:$0xff]
    %v5351 = vld [vmem:[#allocation17 + $0xa8] sm:$0xff]
    %v5352 = vld [vmem:[#allocation17 + $0xb0] sm:$0xff]
    %v5353 = vld [vmem:[#allocation17 + $0xb8] sm:$0xff]
    %v5354 = vld [vmem:[#allocation17 + $0xc0] sm:$0xff]
    %v5355 = vld [vmem:[#allocation17 + $0xc8] sm:$0xff]
    %v5356 = vld [vmem:[#allocation17 + $0xd0] sm:$0xff]
    %v5357 = vld [vmem:[#allocation17 + $0xd8] sm:$0xff]
    %v5358 = vld [vmem:[#allocation17 + $0xe0] sm:$0xff]
    %v5359 = vld [vmem:[#allocation17 + $0xe8] sm:$0xff]
    %v5360 = vld [vmem:[#allocation17 + $0xf0] sm:$0xff]
    %v5361 = vld [vmem:[#allocation17 + $0xf8] sm:$0xff]
    %v5362 = vld [vmem:[#allocation17 + $0x100] sm:$0xff]
    %v5363 = vld [vmem:[#allocation17 + $0x108] sm:$0xff]
    %v5364 = vld [vmem:[#allocation17 + $0x110] sm:$0xff]
    %v5365 = vld [vmem:[#allocation17 + $0x118] sm:$0xff]
    %v5366 = vld [vmem:[#allocation17 + $0x120] sm:$0xff]
    %v5367 = vld [vmem:[#allocation17 + $0x128] sm:$0xff]
    %v5368 = vld [vmem:[#allocation17 + $0x130] sm:$0xff]
    %v5369 = vld [vmem:[#allocation17 + $0x138] sm:$0xff]
    %v5370 = vld [vmem:[#allocation17 + $0x140] sm:$0xff]
    %v5371 = vld [vmem:[#allocation17 + $0x148] sm:$0xff]
    %v5372 = vld [vmem:[#allocation17 + $0x150] sm:$0xff]
    %v5373 = vld [vmem:[#allocation17 + $0x158] sm:$0xff]
    %v5374 = vld [vmem:[#allocation17 + $0x160] sm:$0xff]
    %v5375 = vld [vmem:[#allocation17 + $0x168] sm:$0xff]
    %v5376 = vld [vmem:[#allocation17 + $0x170] sm:$0xff]
    %v5377 = vld [vmem:[#allocation17 + $0x178] sm:$0xff]
    %v5378 = vld [vmem:[#allocation17 + $0x180] sm:$0xff]
    %v5379 = vld [vmem:[#allocation17 + $0x188] sm:$0xff]
    %v5380 = vld [vmem:[#allocation17 + $0x190] sm:$0xff]
    %v5381 = vld [vmem:[#allocation17 + $0x198] sm:$0xff]
    %v5382 = vld [vmem:[#allocation17 + $0x1a0] sm:$0xff]
    %v5383 = vld [vmem:[#allocation17 + $0x1a8] sm:$0xff]
    %v5384 = vld [vmem:[#allocation17 + $0x1b0] sm:$0xff]
    %v5385 = vld [vmem:[#allocation17 + $0x1b8] sm:$0xff]
    %v5386 = vld [vmem:[#allocation17 + $0x1c0] sm:$0xff]
    %v5387 = vld [vmem:[#allocation17 + $0x1c8] sm:$0xff]
    %v5388 = vld [vmem:[#allocation17 + $0x1d0] sm:$0xff]
    %v5389 = vld [vmem:[#allocation17 + $0x1d8] sm:$0xff]
    %v5390 = vld [vmem:[#allocation17 + $0x1e0] sm:$0xff]
    %v5391 = vld [vmem:[#allocation17 + $0x1e8] sm:$0xff]
    %v5392 = vld [vmem:[#allocation17 + $0x1f0] sm:$0xff]
    %v5393 = vld [vmem:[#allocation17 + $0x1f8] sm:$0xff]
    %v5394 = vld [vmem:[#allocation17 + $0x200] sm:$0xff]
    %v5395 = vld [vmem:[#allocation17 + $0x208] sm:$0xff]
    %v5396 = vld [vmem:[#allocation17 + $0x210] sm:$0xff]
    %v5397 = vld [vmem:[#allocation17 + $0x218] sm:$0xff]
    %v5398 = vld [vmem:[#allocation17 + $0x220] sm:$0xff]
    %v5399 = vld [vmem:[#allocation17 + $0x228] sm:$0xff]
    %v5400 = vld [vmem:[#allocation17 + $0x230] sm:$0xff]
    %v5401 = vld [vmem:[#allocation17 + $0x238] sm:$0xff]
    %v5402 = vld [vmem:[#allocation17 + $0x240] sm:$0xff]
    %v5403 = vld [vmem:[#allocation17 + $0x248] sm:$0xff]
    %v5404 = vld [vmem:[#allocation17 + $0x250] sm:$0xff]
    %v5405 = vld [vmem:[#allocation17 + $0x258] sm:$0xff]
    %v5406 = vld [vmem:[#allocation17 + $0x260] sm:$0xff]
    %v5407 = vld [vmem:[#allocation17 + $0x268] sm:$0xff]
    %v5408 = vld [vmem:[#allocation17 + $0x270] sm:$0xff]
    %v5409 = vld [vmem:[#allocation17 + $0x278] sm:$0xff]
    %v5410 = vld [vmem:[#allocation17 + $0x280] sm:$0xff]
    %v5411 = vld [vmem:[#allocation17 + $0x288] sm:$0xff]
    %v5412 = vld [vmem:[#allocation17 + $0x290] sm:$0xff]
    %v5413 = vld [vmem:[#allocation17 + $0x298] sm:$0xff]
    %v5414 = vld [vmem:[#allocation17 + $0x2a0] sm:$0xff]
    %v5415 = vld [vmem:[#allocation17 + $0x2a8] sm:$0xff]
    %v5416 = vld [vmem:[#allocation17 + $0x2b0] sm:$0xff]
    %v5417 = vld [vmem:[#allocation17 + $0x2b8] sm:$0xff]
    %v5418 = vld [vmem:[#allocation17 + $0x2c0] sm:$0xff]
    %v5419 = vld [vmem:[#allocation17 + $0x2c8] sm:$0xff]
    %v5420 = vld [vmem:[#allocation17 + $0x2d0] sm:$0xff]
    %v5421 = vld [vmem:[#allocation17 + $0x2d8] sm:$0xff]
    %v5422 = vld [vmem:[#allocation17 + $0x2e0] sm:$0xff]
    %v5423 = vld [vmem:[#allocation17 + $0x2e8] sm:$0xff]
    %v5424 = vld [vmem:[#allocation17 + $0x2f0] sm:$0xff]
    %v5425 = vld [vmem:[#allocation17 + $0x2f8] sm:$0xff]
    %5426 = vmatprep.subr.mxu0 0.0
    %5427 = vmatpush1.msra.mxu0 %v5394
    %5428 = vmatprep.subr.mxu0 0.0
    %5429 = vmatpush1.msra.mxu0 %v5395
    %5430 = vmatprep.subr.mxu0 0.0
    %5431 = vmatpush1.msra.mxu0 %v5396
    %5432 = vmatprep.subr.mxu0 0.0
    %5433 = vmatpush1.msra.mxu0 %v5397
    %5434 = vmatprep.subr.mxu0 0.0
    %5435 = vmatpush1.msra.mxu0 %v5398
    %5436 = vmatprep.subr.mxu0 0.0
    %5437 = vmatpush1.msra.mxu0 %v5399
    %5438 = vmatprep.subr.mxu0 0.0
    %5439 = vmatpush1.msra.mxu0 %v5400
    %5440 = vmatprep.subr.mxu0 0.0
    %5441 = vmatpush1.msra.mxu0 %v5401
    %5442 = vmatprep.subr.mxu0 0.0
    %5443 = vmatpush1.msra.mxu0 %v5402
    %5444 = vmatprep.subr.mxu0 0.0
    %5445 = vmatpush1.msra.mxu0 %v5403
    %5446 = vmatprep.subr.mxu0 0.0
    %5447 = vmatpush1.msra.mxu0 %v5404
    %5448 = vmatprep.subr.mxu0 0.0
    %5449 = vmatpush1.msra.mxu0 %v5405
    %5450 = vmatprep.subr.mxu0 0.0
    %5451 = vmatpush1.msra.mxu0 %v5406
    %5452 = vmatprep.subr.mxu0 0.0
    %5453 = vmatpush1.msra.mxu0 %v5407
    %5454 = vmatprep.subr.mxu0 0.0
    %5455 = vmatpush1.msra.mxu0 %v5408
    %5456 = vmatprep.subr.mxu0 0.0
    %5457 = vmatpush1.msra.mxu0 %v5409
    %5458 = vmatprep.subr.mxu0 0.0
    %5459 = vmatpush1.msra.mxu0 %v5410
    %5460 = vmatprep.subr.mxu0 0.0
    %5461 = vmatpush1.msra.mxu0 %v5411
    %5462 = vmatprep.subr.mxu0 0.0
    %5463 = vmatpush1.msra.mxu0 %v5412
    %5464 = vmatprep.subr.mxu0 0.0
    %5465 = vmatpush1.msra.mxu0 %v5413
    %5466 = vmatprep.subr.mxu0 0.0
    %5467 = vmatpush1.msra.mxu0 %v5414
    %5468 = vmatprep.subr.mxu0 0.0
    %5469 = vmatpush1.msra.mxu0 %v5415
    %5470 = vmatprep.subr.mxu0 0.0
    %5471 = vmatpush1.msra.mxu0 %v5416
    %5472 = vmatprep.subr.mxu0 0.0
    %5473 = vmatpush1.msra.mxu0 %v5417
    %5474 = vmatprep.subr.mxu0 0.0
    %5475 = vmatpush1.msra.mxu0 %v5418
    %5476 = vmatprep.subr.mxu0 0.0
    %5477 = vmatpush1.msra.mxu0 %v5419
    %5478 = vmatprep.subr.mxu0 0.0
    %5479 = vmatpush1.msra.mxu0 %v5420
    %5480 = vmatprep.subr.mxu0 0.0
    %5481 = vmatpush1.msra.mxu0 %v5421
    %5482 = vmatprep.subr.mxu0 0.0
    %5483 = vmatpush1.msra.mxu0 %v5422
    %5484 = vmatprep.subr.mxu0 0.0
    %5485 = vmatpush1.msra.mxu0 %v5423
    %5486 = vmatprep.subr.mxu0 0.0
    %5487 = vmatpush1.msra.mxu0 %v5424
    %5488 = vmatprep.subr.mxu0 0.0
    %5489 = vmatpush1.msra.mxu0 %v5425
    %5490 = vmatprep.mubr.f32.mxu0 %v5221
    %5491 = vmatmul.mubr.f32.gmra.mrb[0].mxu0 %v5220
    %v5492 = vpop.f32.mrb[0].mxu0
    %v5493 = vadd.f32 0.0, %v5492
    %v5494 = vpop.f32.mrb[0].mxu0
    %5495 = vdwg.mxu0
    %5496 = vmatprep.subr.mxu0 0.0
    %5497 = vmatpush1.msra.mxu0 %v5330
    %5498 = vmatprep.subr.mxu0 0.0
    %5499 = vmatpush1.msra.mxu0 %v5331
    %5500 = vmatprep.subr.mxu0 0.0
    %5501 = vmatpush1.msra.mxu0 %v5332
    %5502 = vmatprep.subr.mxu0 0.0
    %5503 = vmatpush1.msra.mxu0 %v5333
    %5504 = vmatprep.subr.mxu0 0.0
    %5505 = vmatpush1.msra.mxu0 %v5334
    %5506 = vmatprep.subr.mxu0 0.0
    %5507 = vmatpush1.msra.mxu0 %v5335
    %5508 = vmatprep.subr.mxu0 0.0
    %5509 = vmatpush1.msra.mxu0 %v5336
    %5510 = vmatprep.subr.mxu0 0.0
    %5511 = vmatpush1.msra.mxu0 %v5337
    %5512 = vmatprep.subr.mxu0 0.0
    %5513 = vmatpush1.msra.mxu0 %v5338
    %5514 = vmatprep.subr.mxu0 0.0
    %5515 = vmatpush1.msra.mxu0 %v5339
    %5516 = vmatprep.subr.mxu0 0.0
    %5517 = vmatpush1.msra.mxu0 %v5340
    %5518 = vmatprep.subr.mxu0 0.0
    %5519 = vmatpush1.msra.mxu0 %v5341
    %5520 = vmatprep.subr.mxu0 0.0
    %5521 = vmatpush1.msra.mxu0 %v5342
    %5522 = vmatprep.subr.mxu0 0.0
    %5523 = vmatpush1.msra.mxu0 %v5343
    %5524 = vmatprep.subr.mxu0 0.0
    %5525 = vmatpush1.msra.mxu0 %v5344
    %5526 = vmatprep.subr.mxu0 0.0
    %5527 = vmatpush1.msra.mxu0 %v5345
    %5528 = vmatprep.subr.mxu0 0.0
    %5529 = vmatpush1.msra.mxu0 %v5346
    %5530 = vmatprep.subr.mxu0 0.0
    %5531 = vmatpush1.msra.mxu0 %v5347
    %5532 = vmatprep.subr.mxu0 0.0
    %5533 = vmatpush1.msra.mxu0 %v5348
    %5534 = vmatprep.subr.mxu0 0.0
    %5535 = vmatpush1.msra.mxu0 %v5349
    %5536 = vmatprep.subr.mxu0 0.0
    %5537 = vmatpush1.msra.mxu0 %v5350
    %5538 = vmatprep.subr.mxu0 0.0
    %5539 = vmatpush1.msra.mxu0 %v5351
    %5540 = vmatprep.subr.mxu0 0.0
    %5541 = vmatpush1.msra.mxu0 %v5352
    %5542 = vmatprep.subr.mxu0 0.0
    %5543 = vmatpush1.msra.mxu0 %v5353
    %5544 = vmatprep.subr.mxu0 0.0
    %5545 = vmatpush1.msra.mxu0 %v5354
    %5546 = vmatprep.subr.mxu0 0.0
    %5547 = vmatpush1.msra.mxu0 %v5355
    %5548 = vmatprep.subr.mxu0 0.0
    %5549 = vmatpush1.msra.mxu0 %v5356
    %5550 = vmatprep.subr.mxu0 0.0
    %5551 = vmatpush1.msra.mxu0 %v5357
    %5552 = vmatprep.subr.mxu0 0.0
    %5553 = vmatpush1.msra.mxu0 %v5358
    %5554 = vmatprep.subr.mxu0 0.0
    %5555 = vmatpush1.msra.mxu0 %v5359
    %5556 = vmatprep.subr.mxu0 0.0
    %5557 = vmatpush1.msra.mxu0 %v5360
    %5558 = vmatprep.subr.mxu0 0.0
    %5559 = vmatpush1.msra.mxu0 %v5361
    %5560 = vmatprep.mubr.f32.mxu0 %v4604
    %5561 = vmatmul.mubr.f32.gmra.mrb[0].mxu0 %v4603
    %v5562 = vpop.f32.mrb[0].mxu0
    %v5563 = vadd.f32 %v5493, %v5562
    %v5564 = vpop.f32.mrb[0].mxu0
    %5565 = vdwg.mxu0
    %5566 = vmatprep.subr.mxu0 0.0
    %5567 = vmatpush1.msra.mxu0 %v5362
    %5568 = vmatprep.subr.mxu0 0.0
    %5569 = vmatpush1.msra.mxu0 %v5363
    %5570 = vmatprep.subr.mxu0 0.0
    %5571 = vmatpush1.msra.mxu0 %v5364
    %5572 = vmatprep.subr.mxu0 0.0
    %5573 = vmatpush1.msra.mxu0 %v5365
    %5574 = vmatprep.subr.mxu0 0.0
    %5575 = vmatpush1.msra.mxu0 %v5366
    %5576 = vmatprep.subr.mxu0 0.0
    %5577 = vmatpush1.msra.mxu0 %v5367
    %5578 = vmatprep.subr.mxu0 0.0
    %5579 = vmatpush1.msra.mxu0 %v5368
    %5580 = vmatprep.subr.mxu0 0.0
    %5581 = vmatpush1.msra.mxu0 %v5369
    %5582 = vmatprep.subr.mxu0 0.0
    %5583 = vmatpush1.msra.mxu0 %v5370
    %5584 = vmatprep.subr.mxu0 0.0
    %5585 = vmatpush1.msra.mxu0 %v5371
    %5586 = vmatprep.subr.mxu0 0.0
    %5587 = vmatpush1.msra.mxu0 %v5372
    %5588 = vmatprep.subr.mxu0 0.0
    %5589 = vmatpush1.msra.mxu0 %v5373
    %5590 = vmatprep.subr.mxu0 0.0
    %5591 = vmatpush1.msra.mxu0 %v5374
    %5592 = vmatprep.subr.mxu0 0.0
    %5593 = vmatpush1.msra.mxu0 %v5375
    %5594 = vmatprep.subr.mxu0 0.0
    %5595 = vmatpush1.msra.mxu0 %v5376
    %5596 = vmatprep.subr.mxu0 0.0
    %5597 = vmatpush1.msra.mxu0 %v5377
    %5598 = vmatprep.subr.mxu0 0.0
    %5599 = vmatpush1.msra.mxu0 %v5378
    %5600 = vmatprep.subr.mxu0 0.0
    %5601 = vmatpush1.msra.mxu0 %v5379
    %5602 = vmatprep.subr.mxu0 0.0
    %5603 = vmatpush1.msra.mxu0 %v5380
    %5604 = vmatprep.subr.mxu0 0.0
    %5605 = vmatpush1.msra.mxu0 %v5381
    %5606 = vmatprep.subr.mxu0 0.0
    %5607 = vmatpush1.msra.mxu0 %v5382
    %5608 = vmatprep.subr.mxu0 0.0
    %5609 = vmatpush1.msra.mxu0 %v5383
    %5610 = vmatprep.subr.mxu0 0.0
    %5611 = vmatpush1.msra.mxu0 %v5384
    %5612 = vmatprep.subr.mxu0 0.0
    %5613 = vmatpush1.msra.mxu0 %v5385
    %5614 = vmatprep.subr.mxu0 0.0
    %5615 = vmatpush1.msra.mxu0 %v5386
    %5616 = vmatprep.subr.mxu0 0.0
    %5617 = vmatpush1.msra.mxu0 %v5387
    %5618 = vmatprep.subr.mxu0 0.0
    %5619 = vmatpush1.msra.mxu0 %v5388
    %5620 = vmatprep.subr.mxu0 0.0
    %5621 = vmatpush1.msra.mxu0 %v5389
    %5622 = vmatprep.subr.mxu0 0.0
    %5623 = vmatpush1.msra.mxu0 %v5390
    %5624 = vmatprep.subr.mxu0 0.0
    %5625 = vmatpush1.msra.mxu0 %v5391
    %5626 = vmatprep.subr.mxu0 0.0
    %5627 = vmatpush1.msra.mxu0 %v5392
    %5628 = vmatprep.subr.mxu0 0.0
    %5629 = vmatpush1.msra.mxu0 %v5393
    %5630 = vmatprep.mubr.f32.mxu0 %v4606
    %5631 = vmatmul.mubr.f32.gmra.mrb[0].mxu0 %v4605
    %v5632 = vpop.f32.mrb[0].mxu0
    %v5633 = vadd.f32 %v5563, %v5632
    %v5634 = vpop.f32.mrb[0].mxu0
    %5635 = vdwg.mxu0
    %v5636 = vld [vmem:[#allocation17 + $0x300] sm:$0xff]
    %v5637 = vld [vmem:[#allocation17 + $0x308] sm:$0xff]
    %v5638 = vld [vmem:[#allocation17 + $0x310] sm:$0xff]
    %v5639 = vld [vmem:[#allocation17 + $0x318] sm:$0xff]
    %v5640 = vld [vmem:[#allocation17 + $0x320] sm:$0xff]
    %v5641 = vld [vmem:[#allocation17 + $0x328] sm:$0xff]
    %v5642 = vld [vmem:[#allocation17 + $0x330] sm:$0xff]
    %v5643 = vld [vmem:[#allocation17 + $0x338] sm:$0xff]
    %v5644 = vld [vmem:[#allocation17 + $0x340] sm:$0xff]
    %v5645 = vld [vmem:[#allocation17 + $0x348] sm:$0xff]
    %v5646 = vld [vmem:[#allocation17 + $0x350] sm:$0xff]
    %v5647 = vld [vmem:[#allocation17 + $0x358] sm:$0xff]
    %v5648 = vld [vmem:[#allocation17 + $0x360] sm:$0xff]
    %v5649 = vld [vmem:[#allocation17 + $0x368] sm:$0xff]
    %v5650 = vld [vmem:[#allocation17 + $0x370] sm:$0xff]
    %v5651 = vld [vmem:[#allocation17 + $0x378] sm:$0xff]
    %5652 = vmatprep.subr.mxu0 0.0
    %5653 = vmatpush1.msra.mxu0 %v5636
    %5654 = vmatprep.subr.mxu0 0.0
    %5655 = vmatpush1.msra.mxu0 %v5637
    %5656 = vmatprep.subr.mxu0 0.0
    %5657 = vmatpush1.msra.mxu0 %v5638
    %5658 = vmatprep.subr.mxu0 0.0
    %5659 = vmatpush1.msra.mxu0 %v5639
    %5660 = vmatprep.subr.mxu0 0.0
    %5661 = vmatpush1.msra.mxu0 %v5640
    %5662 = vmatprep.subr.mxu0 0.0
    %5663 = vmatpush1.msra.mxu0 %v5641
    %5664 = vmatprep.subr.mxu0 0.0
    %5665 = vmatpush1.msra.mxu0 %v5642
    %5666 = vmatprep.subr.mxu0 0.0
    %5667 = vmatpush1.msra.mxu0 %v5643
    %5668 = vmatprep.subr.mxu0 0.0
    %5669 = vmatpush1.msra.mxu0 %v5644
    %5670 = vmatprep.subr.mxu0 0.0
    %5671 = vmatpush1.msra.mxu0 %v5645
    %5672 = vmatprep.subr.mxu0 0.0
    %5673 = vmatpush1.msra.mxu0 %v5646
    %5674 = vmatprep.subr.mxu0 0.0
    %5675 = vmatpush1.msra.mxu0 %v5647
    %5676 = vmatprep.subr.mxu0 0.0
    %5677 = vmatpush1.msra.mxu0 %v5648
    %5678 = vmatprep.subr.mxu0 0.0
    %5679 = vmatpush1.msra.mxu0 %v5649
    %5680 = vmatprep.subr.mxu0 0.0
    %5681 = vmatpush1.msra.mxu0 %v5650
    %5682 = vmatprep.subr.mxu0 0.0
    %5683 = vmatpush1.msra.mxu0 %v5651
    %5684 = vmatprep.subr.mxu0 0.0
    %5685 = vmatpush1.msra.mxu0 0.0
    %5686 = vmatprep.subr.mxu0 0.0
    %5687 = vmatpush1.msra.mxu0 0.0
    %5688 = vmatprep.subr.mxu0 0.0
    %5689 = vmatpush1.msra.mxu0 0.0
    %5690 = vmatprep.subr.mxu0 0.0
    %5691 = vmatpush1.msra.mxu0 0.0
    %5692 = vmatprep.subr.mxu0 0.0
    %5693 = vmatpush1.msra.mxu0 0.0
    %5694 = vmatprep.subr.mxu0 0.0
    %5695 = vmatpush1.msra.mxu0 0.0
    %5696 = vmatprep.subr.mxu0 0.0
    %5697 = vmatpush1.msra.mxu0 0.0
    %5698 = vmatprep.subr.mxu0 0.0
    %5699 = vmatpush1.msra.mxu0 0.0
    %5700 = vmatprep.subr.mxu0 0.0
    %5701 = vmatpush1.msra.mxu0 0.0
    %5702 = vmatprep.subr.mxu0 0.0
    %5703 = vmatpush1.msra.mxu0 0.0
    %5704 = vmatprep.subr.mxu0 0.0
    %5705 = vmatpush1.msra.mxu0 0.0
    %5706 = vmatprep.subr.mxu0 0.0
    %5707 = vmatpush1.msra.mxu0 0.0
    %5708 = vmatprep.subr.mxu0 0.0
    %5709 = vmatpush1.msra.mxu0 0.0
    %5710 = vmatprep.subr.mxu0 0.0
    %5711 = vmatpush1.msra.mxu0 0.0
    %5712 = vmatprep.subr.mxu0 0.0
    %5713 = vmatpush1.msra.mxu0 0.0
    %5714 = vmatprep.subr.mxu0 0.0
    %5715 = vmatpush1.msra.mxu0 0.0
    %5716 = vmatprep.mubr.f32.mxu0 0.0
    %5717 = vmatmul.mubr.f32.gmra.mrb[0].mxu0 %v5329
    %v5718 = vpop.f32.mrb[0].mxu0
    %v5719 = vadd.f32 0.0, %v5718
    %v5720 = vpop.f32.mrb[0].mxu0
    %5721 = vdwg.mxu0
    %v5722 = vadd.f32 %v5633, %v5719
    %v5723 = vld [vmem:[#allocation19 + $0x92] ss:$0 sm:$0xff]
    %v5724 = vadd.f32 %v5722, %v5723
    %5725 = vst [vmem:[#allocation20 + $0x10] sm:$0xff] %v5724
    // Predicated region
    $region94: #{tpu_custom_call.1} parent=1 // pred_check
      _
    $region95: #{tpu_custom_call.1} parent=1 // pred_check_branch
      %5727 = sbr.rel (0) target = $region97
    $region96: #{tpu_custom_call.1} parent=1 // pred_region
      %s5729 = ssub.s32 384, 384
      %5730 = vsyncadd [#allocation4], %s5729
      %s5732 = sshll.u32 [#allocation20], 4
      %s5733 = int_to_ptr.vmem [resolvable:$true] %s5732
      %5735 = dma.vmem_to_hbm [thread:$0]  %s5733, 384, %s12, [#allocation4]
    $region97: #{tpu_custom_call.1} parent=1 // pred_fallthru
      _
    // Predicated region
    $region98: #{tpu_custom_call.1} parent=1 // pred_check
      _
    $region99: #{tpu_custom_call.1} parent=1 // pred_check_branch
      %5737 = sbr.rel (0) target = $region101
    $region100: #{tpu_custom_call.1} parent=1 // pred_region
      %5738 = dma.done [#allocation4], 384
    $region101: #{tpu_custom_call.1} parent=1 // pred_fallthru
      _
    %5739 = vsyncpa [#allocation3], 1
    %5740 = vsyncpa [#allocation6], 1
    %5741 = vsyncpa [#allocation9], 1
    %5742 = vsyncpa [#allocation12], 1
    %5743 = vsyncpa [#allocation15], 1
    %5744 = vsyncpa [#allocation18], 1
    %5745 = vsyncpa [#allocation4], 1

</llo_original>
